<compile_context>
chip_gen: v6e
topology: v6e:2x2x1
jax: 0.10.0
libtpu: 0.0.40
codegen_flags: <defaults>
</compile_context>

<pallas_src>
import math
import functools

import numpy as np
import jax
import jax.numpy as jnp
from jax.experimental import pallas as pl
from jax.experimental.pallas import tpu as pltpu


_BIG_NEG = 3.0e6  # off-(time)-diagonal kill; must dominate the 1e6 key-mask bias


# ----------------------------------------------------------------------------
# in-kernel helpers
# ----------------------------------------------------------------------------
def _erf(x):
    # Numerical-Recipes erfc rational approximation (abs err ~1.2e-7, i.e.
    # float32-accurate vs the exact erf used by PyTorch nn.GELU()).
    a = jnp.abs(x)
    t = 1.0 / (1.0 + 0.5 * a)
    tau = t * jnp.exp(
        -a * a - 1.26551223
        + t * (1.00002368
        + t * (0.37409196
        + t * (0.09678418
        + t * (-0.18628806
        + t * (0.27886807
        + t * (-1.13520398
        + t * (1.48851587
        + t * (-0.82215223
        + t * 0.17087277)))))))))
    erf_abs = 1.0 - tau
    return jnp.where(x >= 0, erf_abs, -erf_abs)


def _gelu_exact(x):
    # PyTorch nn.GELU() default (approximate='none'): x * Phi(x)
    return 0.5 * x * (1.0 + _erf(x * (1.0 / math.sqrt(2.0))))


# ----------------------------------------------------------------------------
# Fused kernel: encoder -> chunk pooling -> MHA -> attention apply -> MLP
# Processes BB batch elements per grid step (rows stacked along sublanes).
# ----------------------------------------------------------------------------
def _fused_kernel(x_ref, m_ref, bpos_ref, bias_ref, w_ref,
                  expq_ref, expk_ref, wqkv_ref,
                  w1_ref, s1_ref, u1_ref, w2_ref, s2_ref, u2_ref,
                  out_ref, *, BB, V, T, D, NH):
    f32 = jnp.float32
    bf16 = jnp.bfloat16
    dk = D // NH
    VT = V * T

    x = x_ref[...]                                     # (BB*V*T, 1)
    m = m_ref[...]                                     # (BB*V*T, 1)

    # --- grouped 1x1 conv encoder + conv-bias + static emb + positional ------
    # One fused VPU op on a lane-dense slab (no per-variable slicing/concat).
    H = x * w_ref[...] + bpos_ref[...]                 # (BB*V*T, D) f32
    H_bf = H.astype(bf16)

    # --- masked per-chunk mean pooling (reference uses count + 1) ------------
    h1_bf = (H * m).astype(bf16)
    expk = expk_ref[...]                               # (BB*V*C, BB*V*T) bf16
    num = jnp.dot(expk, h1_bf, preferred_element_type=f32)        # (BB*V*C, D)
    den = jnp.dot(expk, m.astype(bf16), preferred_element_type=f32) + 1.0
    h4 = num * pl.reciprocal(den, approx=True)                    # (BB*V*C, D)

    # --- fused Q/K/V projection (1/sqrt(dk) folded into Wq) ------------------
    qkv = jnp.dot(h4.astype(bf16), wqkv_ref[...],
                  preferred_element_type=f32)                     # (BB*V*C, 3D)
    # single chunk->time expansion for q, k AND the chunk-value broadcast
    qkv_t = jnp.dot(expq_ref[...], qkv.astype(bf16),
                    preferred_element_type=f32)                   # (BB*V*T, 3D)

    # --- attention (per batch element to keep logits at (V*T, V*T)) ----------
    v5_parts = []
    for b in range(BB):                                # BB <= 2, static
        qkv_b = qkv_t[b * VT:(b + 1) * VT, :]          # (VT, 3D)
        H_b = H_bf[b * VT:(b + 1) * VT, :]             # (VT, D)
        bias_b = bias_ref[b]                           # (VT, VT): key-mask + off-time kill
        head_outs = []
        for h in range(NH):                            # NH = 4, static; per-head
            # temporaries (logits/e) die right after the apply matmul, so the
            # unrolled loop keeps at most one head's (VT,VT) live at a time.
            q_h = qkv_b[:, h * dk:(h + 1) * dk].astype(bf16)          # (VT, dk)
            k_h = qkv_b[:, D + h * dk:D + (h + 1) * dk].astype(bf16)  # (VT, dk)
            sc = jax.lax.dot_general(q_h, k_h, (((1,), (1,)), ((), ())),
                                     preferred_element_type=f32)      # (VT, VT)
            lg = sc + bias_b
            lg = lg - jnp.max(lg, axis=1, keepdims=True)
            e = jnp.exp(lg)
            den_h = jnp.sum(e, axis=1, keepdims=True)                 # (VT, 1)
            # normalise AFTER the value matmul: 8x fewer multiplies than
            # normalising the (VT, VT) weights, and the divide goes to the EUP.
            vh = jnp.dot(e.astype(bf16), H_b[:, h * dk:(h + 1) * dk],
                         preferred_element_type=f32)                  # (VT, dk)
            head_outs.append(vh * pl.reciprocal(den_h, approx=True))
        # concat heads + add chunk-level value projection (already expanded)
        v4_b = jnp.concatenate(head_outs, axis=1) + qkv_b[:, 2 * D:]  # (VT, D)
        # reorganize rows (v*T + t) into lane-dense MLP slab columns (v*D + d)
        v5_parts.append(jnp.concatenate(
            [v4_b[v * T:(v + 1) * T, :] for v in range(V)], axis=1))  # (T, V*D)
    v5 = v5_parts[0] if BB == 1 else jnp.concatenate(v5_parts, axis=0)  # (BB*T, V*D)

    # --- MLP: conv1x1 -> BN -> GELU -> conv1x1 -> BN -> GELU (eval mode) -----
    y1 = jnp.dot(v5.astype(bf16), w1_ref[...],
                 preferred_element_type=f32)                       # (BB*T, 4D)
    y1 = _gelu_exact(y1 * s1_ref[...] + u1_ref[...])
    y2 = jnp.dot(y1.astype(bf16), w2_ref[...],
                 preferred_element_type=f32)                       # (BB*T, D)
    out_ref[...] = _gelu_exact(y2 * s2_ref[...] + u2_ref[...])


# ----------------------------------------------------------------------------
# Static chunk selection / expansion / bias constants
# ----------------------------------------------------------------------------
def _chunk_constants(T, V, C, BB):
    sizes = [T // C] * C
    for i in range(T % C):
        sizes[i] += 1
    chunk_of_t = np.zeros((T,), np.int64)
    s = 0
    for c, sz in enumerate(sizes):
        chunk_of_t[s:s + sz] = c
        s += sz
    # expk[v*C+c, v*T+t] = 1 iff chunk(t) == c  (same variable)
    expk1 = np.zeros((V * C, V * T), np.float32)
    for v in range(V):
        for t in range(T):
            expk1[v * C + int(chunk_of_t[t]), v * T + t] = 1.0
    expq1 = np.ascontiguousarray(expk1.T)
    # block-diagonal over the batch rows folded into one grid step
    eye_bb = np.eye(BB, dtype=np.float32)
    expk_blk = np.kron(eye_bb, expk1)                 # (BB*V*C, BB*V*T)
    expq_blk = np.kron(eye_bb, expq1)                 # (BB*V*T, BB*V*C)
    # off-(time)-diagonal kill, tiled over (V, V) variable blocks (per batch)
    offd = (-_BIG_NEG) * (1.0 - np.tile(np.eye(T, dtype=np.float32), (V, V)))
    return (jnp.asarray(expk_blk, jnp.bfloat16),
            jnp.asarray(expq_blk, jnp.bfloat16),
            jnp.asarray(offd, jnp.float32))


def _default_batch_block(B):
    """Fold the whole batch into one grid step on single-TC chips (v5e/v6e);
    keep grid=(B,) on multi-TC chips (v7x / megacore) so the 'parallel' grid
    axis can shard batches across TensorCores."""
    try:
        kind = jax.devices()[0].device_kind.lower()
    except Exception:
        return B
    multi_tc = any(tag in kind for tag in ("v7", "v4", "v5p"))
    bb = 1 if multi_tc else B
    if B % bb != 0:
        bb = 1
    return bb


# ----------------------------------------------------------------------------
# Parameter init (deterministic, synthetic - matches shapes of __init__)
# ----------------------------------------------------------------------------
def init_params(key, *, temp_dim, static_dim, hidden_dim, num_heads):
    V, D = temp_dim, hidden_dim
    ks = jax.random.split(key, 11)

    def u(k, shape, lim):
        return jax.random.uniform(k, shape, jnp.float32, -lim, lim)

    lim_xavier = math.sqrt(6.0 / (D + D))
    p = {
        # nn.Conv1d(V, V*D, 1, groups=V): weight (V*D,1,1), bias (V*D,)
        "conv_w": u(ks[0], (V * D,), 1.0),
        "conv_b": u(ks[1], (V * D,), 0.1),
        # MHA Wq/Wk/Wv (xavier uniform)
        "Wq": u(ks[2], (D, D), lim_xavier),
        "Wk": u(ks[3], (D, D), lim_xavier),
        "Wv": u(ks[4], (D, D), lim_xavier),
        # mlp Conv1d(V*D, 4D, 1), Conv1d(4D, D, 1)
        "w1": u(ks[5], (4 * D, V * D), 1.0 / math.sqrt(V * D)),
        "b1": u(ks[6], (4 * D,), 1.0 / math.sqrt(V * D)),
        "w2": u(ks[7], (D, 4 * D), 1.0 / math.sqrt(4 * D)),
        "b2": u(ks[8], (D,), 1.0 / math.sqrt(4 * D)),
        # BatchNorm1d (eval mode -> running stats, fresh init)
        "bn1_gamma": jnp.ones((4 * D,), jnp.float32),
        "bn1_beta": jnp.zeros((4 * D,), jnp.float32),
        "bn1_mean": jnp.zeros((4 * D,), jnp.float32),
        "bn1_var": jnp.ones((4 * D,), jnp.float32),
        "bn2_gamma": jnp.ones((D,), jnp.float32),
        "bn2_beta": jnp.zeros((D,), jnp.float32),
        "bn2_mean": jnp.zeros((D,), jnp.float32),
        "bn2_var": jnp.ones((D,), jnp.float32),
    }
    if static_dim > 0:
        p["emb_w"] = u(ks[9], (V * D, static_dim), 1.0 / math.sqrt(static_dim))
        p["emb_b"] = u(ks[10], (V * D,), 1.0 / math.sqrt(static_dim))
    return p


# TODO(synk): PositionalEncoding class is not provided in the reference source;
# assuming the standard continuous sinusoidal encoding of the time values
# (sin/cos of t * 10000^(-2i/D)), producing shape (T, B, D).
def positional_encoding(times, d_model):
    i = jnp.arange(0, d_model, 2, dtype=jnp.float32)
    div = jnp.exp(-(math.log(10000.0) * i / d_model))       # (D/2,)
    ang = times[..., None] * div                             # (T, B, D/2)
    pe = jnp.zeros(times.shape + (d_model,), jnp.float32)
    pe = pe.at[..., 0::2].set(jnp.sin(ang))
    pe = pe.at[..., 1::2].set(jnp.cos(ang))
    return pe


# ----------------------------------------------------------------------------
# Forward pass (layout prep + one fused pallas_call)
# ----------------------------------------------------------------------------
def variable_seg_gt_forward(params, Xtemp, Xtimes, Xstatic, mask, *,
                            temp_dim, static_dim, hidden_dim, num_heads,
                            num_chunks, batch_block=None):
    f32 = jnp.float32
    bf16 = jnp.bfloat16
    T, B, V = Xtemp.shape
    D = hidden_dim
    NH = num_heads
    dk = D // NH
    C = num_chunks

    BB = batch_block if batch_block is not None else _default_batch_block(B)
    if B % BB != 0:
        BB = 1
    VT = V * T

    expk_blk, expq_blk, offd = _chunk_constants(T, V, C, BB)

    # ---- input layout prep (tiny, fused by XLA) ------------------------------
    # rows of the encoder slab: b*V*T + v*T + t
    x_col = jnp.transpose(Xtemp.astype(f32), (1, 2, 0)).reshape(B * VT, 1)
    m_col = jnp.transpose(mask.astype(f32), (1, 2, 0)).reshape(B * VT, 1)

    # combined additive attention bias: key-variable mask + off-time-diagonal
    m_bvt = jnp.transpose(mask.astype(f32), (1, 2, 0)).reshape(B, VT)
    bias = offd[None, :, :] + (-1.0e6) * (1.0 - m_bvt)[:, None, :]   # (B,VT,VT)

    pos = jnp.transpose(positional_encoding(Xtimes.astype(f32), D),
                        (1, 0, 2))                                   # (B, T, D)

    w_vd = params["conv_w"].reshape(V, D)                            # (V, D)
    b_vd = params["conv_b"].reshape(V, D)
    if static_dim > 0 and Xstatic is not None:
        emb = (Xstatic.astype(f32) @ params["emb_w"].T
               + params["emb_b"]).reshape(B, V, D)
        be = b_vd[None, :, :] + emb                                  # (B, V, D)
    else:
        be = jnp.broadcast_to(b_vd[None, :, :], (B, V, D))
    # bpos[b, v*T+t, :] = conv_bias[v] + emb[b,v] + pos[b,t]
    bpos = (be[:, :, None, :] + pos[:, None, :, :]).reshape(B * VT, D)
    # w_rep[b_local*V*T + v*T + t, :] = conv_weight[v]  (constant across grid)
    w_rep = jnp.tile(jnp.repeat(w_vd, T, axis=0), (BB, 1))           # (BB*VT, D)

    # fused QKV weight; 1/sqrt(dk) scaling folded into Wq; bf16 for the MXU
    wqkv = jnp.concatenate([params["Wq"] * (1.0 / math.sqrt(dk)),
                            params["Wk"], params["Wv"]], axis=1).astype(bf16)

    # first MLP conv: permute input channels from (d*V + v) to (v*D + d),
    # then transpose so the kernel does (BB*T, V*D) @ (V*D, 4D)
    w1 = params["w1"]                                                # (4D, D*V)
    w1kT = (w1.reshape(4 * D, D, V).transpose(0, 2, 1)
            .reshape(4 * D, V * D).T).astype(bf16)                   # (V*D, 4D)
    w2T = params["w2"].T.astype(bf16)                                # (4D, D)

    # fold conv biases + BatchNorm (eval) into per-channel scale/shift
    eps = 1e-5
    s1 = params["bn1_gamma"] / jnp.sqrt(params["bn1_var"] + eps)
    u1 = (params["b1"] - params["bn1_mean"]) * s1 + params["bn1_beta"]
    s2 = params["bn2_gamma"] / jnp.sqrt(params["bn2_var"] + eps)
    u2 = (params["b2"] - params["bn2_mean"]) * s2 + params["bn2_beta"]

    kern = functools.partial(_fused_kernel, BB=BB, V=V, T=T, D=D, NH=NH)

    z_flat = pl.pallas_call(
        kern,
        grid=(B // BB,),
        in_specs=[
            pl.BlockSpec((BB * VT, 1), lambda i: (i, 0)),            # x columns
            pl.BlockSpec((BB * VT, 1), lambda i: (i, 0)),            # mask columns
            pl.BlockSpec((BB * VT, D), lambda i: (i, 0)),            # bias+emb+pos
            pl.BlockSpec((BB, VT, VT), lambda i: (i, 0, 0)),         # attn bias
            pl.BlockSpec((BB * VT, D), lambda i: (0, 0)),            # conv w (tiled)
            pl.BlockSpec((BB * VT, BB * V * C), lambda i: (0, 0)),   # expq (bf16)
            pl.BlockSpec((BB * V * C, BB * VT), lambda i: (0, 0)),   # expk (bf16)
            pl.BlockSpec((D, 3 * D), lambda i: (0, 0)),              # wqkv (bf16)
            pl.BlockSpec((V * D, 4 * D), lambda i: (0, 0)),          # w1kT (bf16)
            pl.BlockSpec((1, 4 * D), lambda i: (0, 0)),              # s1
            pl.BlockSpec((1, 4 * D), lambda i: (0, 0)),              # u1
            pl.BlockSpec((4 * D, D), lambda i: (0, 0)),              # w2T (bf16)
            pl.BlockSpec((1, D), lambda i: (0, 0)),                  # s2
            pl.BlockSpec((1, D), lambda i: (0, 0)),                  # u2
        ],
        out_specs=pl.BlockSpec((BB * T, D), lambda i: (i, 0)),
        out_shape=jax.ShapeDtypeStruct((B * T, D), f32),
        compiler_params=pltpu.CompilerParams(
            dimension_semantics=("parallel",)),
    )(x_col, m_col, bpos, bias, w_rep, expq_blk, expk_blk, wqkv,
      w1kT, s1[None, :], u1[None, :], w2T, s2[None, :], u2[None, :])

    # kernel emits (B*T, D); restore the module's (B, hidden, T) layout
    return jnp.transpose(z_flat.reshape(B, T, D), (0, 2, 1))


# ----------------------------------------------------------------------------
# main
# ----------------------------------------------------------------------------
if __name__ == "__main__":
    # module hyperparameters
    temp_dim = 4      # V
    static_dim = 6
    max_len = 64
    hidden_dim = 32   # D
    num_heads = 4
    mha_dropout = 0.1  # dropout -> identity at inference
    num_chunks = 3

    # input sizes
    T, B = 16, 2

    key = jax.random.PRNGKey(0)
    k_x, k_t, k_s, k_m, k_p = jax.random.split(key, 5)

    Xtemp = jax.random.normal(k_x, (T, B, temp_dim), jnp.float32)
    Xtimes = jnp.sort(jax.random.uniform(k_t, (T, B), jnp.float32) * 10.0, axis=0)
    Xstatic = jax.random.normal(k_s, (B, static_dim), jnp.float32)
    mask = (jax.random.uniform(k_m, (T, B, temp_dim)) > 0.3).astype(jnp.float32)

    params = init_params(k_p, temp_dim=temp_dim, static_dim=static_dim,
                         hidden_dim=hidden_dim, num_heads=num_heads)

    fwd = jax.jit(functools.partial(
        variable_seg_gt_forward,
        temp_dim=temp_dim, static_dim=static_dim, hidden_dim=hidden_dim,
        num_heads=num_heads, num_chunks=num_chunks))

    z = jax.block_until_ready(fwd(params, Xtemp, Xtimes, Xstatic, mask))
    assert z.shape == (B, hidden_dim, T)
    assert bool(jnp.all(jnp.isfinite(z)))
    print("KERNEL_OK")
</pallas_src>

<mosaic_0001>
module attributes {stable_mosaic.version = 11 : i64} {
  func.func @_fused_kernel(%arg0: i32, %arg1: memref<128x1xf32, #tpu.memory_space<vmem>>, %arg2: memref<128x1xf32, #tpu.memory_space<vmem>>, %arg3: memref<128x32xf32, #tpu.memory_space<vmem>>, %arg4: memref<2x64x64xf32, #tpu.memory_space<vmem>>, %arg5: memref<128x32xf32, #tpu.memory_space<vmem>>, %arg6: memref<128x24xbf16, #tpu.memory_space<vmem>>, %arg7: memref<24x128xbf16, #tpu.memory_space<vmem>>, %arg8: memref<32x96xbf16, #tpu.memory_space<vmem>>, %arg9: memref<128x128xbf16, #tpu.memory_space<vmem>>, %arg10: memref<1x128xf32, #tpu.memory_space<vmem>>, %arg11: memref<1x128xf32, #tpu.memory_space<vmem>>, %arg12: memref<128x32xbf16, #tpu.memory_space<vmem>>, %arg13: memref<1x32xf32, #tpu.memory_space<vmem>>, %arg14: memref<1x32xf32, #tpu.memory_space<vmem>>, %arg15: memref<32x32xf32, #tpu.memory_space<vmem>>) attributes {dimension_semantics = [#tpu.dimension_semantics<parallel>], iteration_bounds = array<i64: 1>, scalar_prefetch = 0 : i64, scratch_operands = 0 : i64, tpu.core_type = #tpu.core_type<tc>, window_params = [{transform_indices = @transform_0, window_bounds = array<i64: 128, 1>}, {transform_indices = @transform_1, window_bounds = array<i64: 128, 1>}, {transform_indices = @transform_2, window_bounds = array<i64: 128, 32>}, {transform_indices = @transform_3, window_bounds = array<i64: 2, 64, 64>}, {pipeline_mode = #tpu.pipeline_mode<synchronous>, transform_indices = @transform_4, window_bounds = array<i64: 128, 32>}, {pipeline_mode = #tpu.pipeline_mode<synchronous>, transform_indices = @transform_5, window_bounds = array<i64: 128, 24>}, {pipeline_mode = #tpu.pipeline_mode<synchronous>, transform_indices = @transform_6, window_bounds = array<i64: 24, 128>}, {pipeline_mode = #tpu.pipeline_mode<synchronous>, transform_indices = @transform_7, window_bounds = array<i64: 32, 96>}, {pipeline_mode = #tpu.pipeline_mode<synchronous>, transform_indices = @transform_8, window_bounds = array<i64: 128, 128>}, {pipeline_mode = #tpu.pipeline_mode<synchronous>, transform_indices = @transform_9, window_bounds = array<i64: 1, 128>}, {pipeline_mode = #tpu.pipeline_mode<synchronous>, transform_indices = @transform_10, window_bounds = array<i64: 1, 128>}, {pipeline_mode = #tpu.pipeline_mode<synchronous>, transform_indices = @transform_11, window_bounds = array<i64: 128, 32>}, {pipeline_mode = #tpu.pipeline_mode<synchronous>, transform_indices = @transform_12, window_bounds = array<i64: 1, 32>}, {pipeline_mode = #tpu.pipeline_mode<synchronous>, transform_indices = @transform_13, window_bounds = array<i64: 1, 32>}, {transform_indices = @transform_14, window_bounds = array<i64: 32, 32>}]} {
    %c0 = arith.constant 0 : index
    %c0_0 = arith.constant 0 : index
    %0 = vector.load %arg1[%c0, %c0_0] : memref<128x1xf32, #tpu.memory_space<vmem>>, vector<128x1xf32>
    %c0_1 = arith.constant 0 : index
    %c0_2 = arith.constant 0 : index
    %1 = vector.load %arg2[%c0_1, %c0_2] : memref<128x1xf32, #tpu.memory_space<vmem>>, vector<128x1xf32>
    %c0_3 = arith.constant 0 : index
    %c0_4 = arith.constant 0 : index
    %2 = vector.load %arg5[%c0_3, %c0_4] : memref<128x32xf32, #tpu.memory_space<vmem>>, vector<128x32xf32>
    %3 = vector.broadcast %0 : vector<128x1xf32> to vector<128x32xf32>
    %4 = arith.mulf %3, %2 : vector<128x32xf32>
    %c0_5 = arith.constant 0 : index
    %c0_6 = arith.constant 0 : index
    %5 = vector.load %arg3[%c0_5, %c0_6] : memref<128x32xf32, #tpu.memory_space<vmem>>, vector<128x32xf32>
    %6 = arith.addf %4, %5 : vector<128x32xf32>
    %7 = arith.truncf %6 : vector<128x32xf32> to vector<128x32xbf16>
    %8 = vector.broadcast %1 : vector<128x1xf32> to vector<128x32xf32>
    %9 = arith.mulf %6, %8 : vector<128x32xf32>
    %10 = arith.truncf %9 : vector<128x32xf32> to vector<128x32xbf16>
    %c0_7 = arith.constant 0 : index
    %c0_8 = arith.constant 0 : index
    %11 = vector.load %arg7[%c0_7, %c0_8] : memref<24x128xbf16, #tpu.memory_space<vmem>>, vector<24x128xbf16>
    %cst = arith.constant dense<0.000000e+00> : vector<24x32xf32>
    %12 = tpu.matmul %11, %10, %cst {dimension_numbers = #tpu.dot_dimension_numbers<[1], [0], [0], [1], [0, 0, 1, 1], [], []>} : vector<24x128xbf16>, vector<128x32xbf16>, vector<24x32xf32> -> vector<24x32xf32>
    %13 = arith.truncf %1 : vector<128x1xf32> to vector<128x1xbf16>
    %cst_9 = arith.constant dense<0.000000e+00> : vector<24x1xf32>
    %14 = tpu.matmul %11, %13, %cst_9 {dimension_numbers = #tpu.dot_dimension_numbers<[1], [0], [0], [1], [0, 0, 1, 1], [], []>} : vector<24x128xbf16>, vector<128x1xbf16>, vector<24x1xf32> -> vector<24x1xf32>
    %cst_10 = arith.constant 1.000000e+00 : f32
    %15 = vector.broadcast %cst_10 : f32 to vector<24x1xf32>
    %16 = arith.addf %14, %15 : vector<24x1xf32>
    %17 = tpu.reciprocal %16 {approx = true} : vector<24x1xf32> -> vector<24x1xf32>
    %18 = vector.broadcast %17 : vector<24x1xf32> to vector<24x32xf32>
    %19 = arith.mulf %12, %18 : vector<24x32xf32>
    %20 = arith.truncf %19 : vector<24x32xf32> to vector<24x32xbf16>
    %c0_11 = arith.constant 0 : index
    %c0_12 = arith.constant 0 : index
    %21 = vector.load %arg8[%c0_11, %c0_12] : memref<32x96xbf16, #tpu.memory_space<vmem>>, vector<32x96xbf16>
    %cst_13 = arith.constant dense<0.000000e+00> : vector<24x96xf32>
    %22 = tpu.matmul %20, %21, %cst_13 {dimension_numbers = #tpu.dot_dimension_numbers<[1], [0], [0], [1], [0, 0, 1, 1], [], []>} : vector<24x32xbf16>, vector<32x96xbf16>, vector<24x96xf32> -> vector<24x96xf32>
    %c0_14 = arith.constant 0 : index
    %c0_15 = arith.constant 0 : index
    %23 = vector.load %arg6[%c0_14, %c0_15] : memref<128x24xbf16, #tpu.memory_space<vmem>>, vector<128x24xbf16>
    %24 = arith.truncf %22 : vector<24x96xf32> to vector<24x96xbf16>
    %cst_16 = arith.constant dense<0.000000e+00> : vector<128x96xf32>
    %25 = tpu.matmul %23, %24, %cst_16 {dimension_numbers = #tpu.dot_dimension_numbers<[1], [0], [0], [1], [0, 0, 1, 1], [], []>} : vector<128x24xbf16>, vector<24x96xbf16>, vector<128x96xf32> -> vector<128x96xf32>
    %26 = vector.extract_strided_slice %25 {offsets = [0, 0], sizes = [64, 96], strides = [1, 1]} : vector<128x96xf32> to vector<64x96xf32>
    %27 = vector.extract_strided_slice %7 {offsets = [0, 0], sizes = [64, 32], strides = [1, 1]} : vector<128x32xbf16> to vector<64x32xbf16>
    %c0_17 = arith.constant 0 : index
    %c0_18 = arith.constant 0 : index
    %c0_19 = arith.constant 0 : index
    %28 = vector.load %arg4[%c0_17, %c0_18, %c0_19] : memref<2x64x64xf32, #tpu.memory_space<vmem>>, vector<1x64x64xf32>
    %29 = vector.shape_cast %28 : vector<1x64x64xf32> to vector<64x64xf32>
    %30 = vector.extract_strided_slice %26 {offsets = [0, 0], sizes = [64, 8], strides = [1, 1]} : vector<64x96xf32> to vector<64x8xf32>
    %31 = arith.truncf %30 : vector<64x8xf32> to vector<64x8xbf16>
    %32 = vector.extract_strided_slice %26 {offsets = [0, 32], sizes = [64, 8], strides = [1, 1]} : vector<64x96xf32> to vector<64x8xf32>
    %33 = arith.truncf %32 : vector<64x8xf32> to vector<64x8xbf16>
    %cst_20 = arith.constant dense<0.000000e+00> : vector<64x64xf32>
    %34 = tpu.matmul %31, %33, %cst_20 {dimension_numbers = #tpu.dot_dimension_numbers<[1], [1], [0], [0], [0, 0, 1, 0], [], []>} : vector<64x8xbf16>, vector<64x8xbf16>, vector<64x64xf32> -> vector<64x64xf32>
    %35 = arith.addf %34, %29 : vector<64x64xf32>
    %cst_21 = arith.constant dense<0xFF800000> : vector<64xf32>
    %36 = vector.multi_reduction <maximumf>, %35, %cst_21 [1] : vector<64x64xf32> to vector<64xf32>
    %37 = vector.shape_cast %36 : vector<64xf32> to vector<64x1xf32>
    %38 = vector.broadcast %37 : vector<64x1xf32> to vector<64x64xf32>
    %39 = arith.subf %35, %38 : vector<64x64xf32>
    %40 = math.exp %39 : vector<64x64xf32>
    %cst_22 = arith.constant dense<0.000000e+00> : vector<64xf32>
    %41 = vector.multi_reduction <add>, %40, %cst_22 [1] : vector<64x64xf32> to vector<64xf32>
    %42 = vector.shape_cast %41 : vector<64xf32> to vector<64x1xf32>
    %43 = arith.truncf %40 : vector<64x64xf32> to vector<64x64xbf16>
    %44 = vector.extract_strided_slice %27 {offsets = [0, 0], sizes = [64, 8], strides = [1, 1]} : vector<64x32xbf16> to vector<64x8xbf16>
    %cst_23 = arith.constant dense<0.000000e+00> : vector<64x8xf32>
    %45 = tpu.matmul %43, %44, %cst_23 {dimension_numbers = #tpu.dot_dimension_numbers<[1], [0], [0], [1], [0, 0, 1, 1], [], []>} : vector<64x64xbf16>, vector<64x8xbf16>, vector<64x8xf32> -> vector<64x8xf32>
    %46 = tpu.reciprocal %42 {approx = true} : vector<64x1xf32> -> vector<64x1xf32>
    %47 = vector.broadcast %46 : vector<64x1xf32> to vector<64x8xf32>
    %48 = arith.mulf %45, %47 : vector<64x8xf32>
    %49 = vector.extract_strided_slice %26 {offsets = [0, 8], sizes = [64, 8], strides = [1, 1]} : vector<64x96xf32> to vector<64x8xf32>
    %50 = arith.truncf %49 : vector<64x8xf32> to vector<64x8xbf16>
    %51 = vector.extract_strided_slice %26 {offsets = [0, 40], sizes = [64, 8], strides = [1, 1]} : vector<64x96xf32> to vector<64x8xf32>
    %52 = arith.truncf %51 : vector<64x8xf32> to vector<64x8xbf16>
    %cst_24 = arith.constant dense<0.000000e+00> : vector<64x64xf32>
    %53 = tpu.matmul %50, %52, %cst_24 {dimension_numbers = #tpu.dot_dimension_numbers<[1], [1], [0], [0], [0, 0, 1, 0], [], []>} : vector<64x8xbf16>, vector<64x8xbf16>, vector<64x64xf32> -> vector<64x64xf32>
    %54 = arith.addf %53, %29 : vector<64x64xf32>
    %cst_25 = arith.constant dense<0xFF800000> : vector<64xf32>
    %55 = vector.multi_reduction <maximumf>, %54, %cst_25 [1] : vector<64x64xf32> to vector<64xf32>
    %56 = vector.shape_cast %55 : vector<64xf32> to vector<64x1xf32>
    %57 = vector.broadcast %56 : vector<64x1xf32> to vector<64x64xf32>
    %58 = arith.subf %54, %57 : vector<64x64xf32>
    %59 = math.exp %58 : vector<64x64xf32>
    %cst_26 = arith.constant dense<0.000000e+00> : vector<64xf32>
    %60 = vector.multi_reduction <add>, %59, %cst_26 [1] : vector<64x64xf32> to vector<64xf32>
    %61 = vector.shape_cast %60 : vector<64xf32> to vector<64x1xf32>
    %62 = arith.truncf %59 : vector<64x64xf32> to vector<64x64xbf16>
    %63 = vector.extract_strided_slice %27 {offsets = [0, 8], sizes = [64, 8], strides = [1, 1]} : vector<64x32xbf16> to vector<64x8xbf16>
    %cst_27 = arith.constant dense<0.000000e+00> : vector<64x8xf32>
    %64 = tpu.matmul %62, %63, %cst_27 {dimension_numbers = #tpu.dot_dimension_numbers<[1], [0], [0], [1], [0, 0, 1, 1], [], []>} : vector<64x64xbf16>, vector<64x8xbf16>, vector<64x8xf32> -> vector<64x8xf32>
    %65 = tpu.reciprocal %61 {approx = true} : vector<64x1xf32> -> vector<64x1xf32>
    %66 = vector.broadcast %65 : vector<64x1xf32> to vector<64x8xf32>
    %67 = arith.mulf %64, %66 : vector<64x8xf32>
    %68 = vector.extract_strided_slice %26 {offsets = [0, 16], sizes = [64, 8], strides = [1, 1]} : vector<64x96xf32> to vector<64x8xf32>
    %69 = arith.truncf %68 : vector<64x8xf32> to vector<64x8xbf16>
    %70 = vector.extract_strided_slice %26 {offsets = [0, 48], sizes = [64, 8], strides = [1, 1]} : vector<64x96xf32> to vector<64x8xf32>
    %71 = arith.truncf %70 : vector<64x8xf32> to vector<64x8xbf16>
    %cst_28 = arith.constant dense<0.000000e+00> : vector<64x64xf32>
    %72 = tpu.matmul %69, %71, %cst_28 {dimension_numbers = #tpu.dot_dimension_numbers<[1], [1], [0], [0], [0, 0, 1, 0], [], []>} : vector<64x8xbf16>, vector<64x8xbf16>, vector<64x64xf32> -> vector<64x64xf32>
    %73 = arith.addf %72, %29 : vector<64x64xf32>
    %cst_29 = arith.constant dense<0xFF800000> : vector<64xf32>
    %74 = vector.multi_reduction <maximumf>, %73, %cst_29 [1] : vector<64x64xf32> to vector<64xf32>
    %75 = vector.shape_cast %74 : vector<64xf32> to vector<64x1xf32>
    %76 = vector.broadcast %75 : vector<64x1xf32> to vector<64x64xf32>
    %77 = arith.subf %73, %76 : vector<64x64xf32>
    %78 = math.exp %77 : vector<64x64xf32>
    %cst_30 = arith.constant dense<0.000000e+00> : vector<64xf32>
    %79 = vector.multi_reduction <add>, %78, %cst_30 [1] : vector<64x64xf32> to vector<64xf32>
    %80 = vector.shape_cast %79 : vector<64xf32> to vector<64x1xf32>
    %81 = arith.truncf %78 : vector<64x64xf32> to vector<64x64xbf16>
    %82 = vector.extract_strided_slice %27 {offsets = [0, 16], sizes = [64, 8], strides = [1, 1]} : vector<64x32xbf16> to vector<64x8xbf16>
    %cst_31 = arith.constant dense<0.000000e+00> : vector<64x8xf32>
    %83 = tpu.matmul %81, %82, %cst_31 {dimension_numbers = #tpu.dot_dimension_numbers<[1], [0], [0], [1], [0, 0, 1, 1], [], []>} : vector<64x64xbf16>, vector<64x8xbf16>, vector<64x8xf32> -> vector<64x8xf32>
    %84 = tpu.reciprocal %80 {approx = true} : vector<64x1xf32> -> vector<64x1xf32>
    %85 = vector.broadcast %84 : vector<64x1xf32> to vector<64x8xf32>
    %86 = arith.mulf %83, %85 : vector<64x8xf32>
    %87 = vector.extract_strided_slice %26 {offsets = [0, 24], sizes = [64, 8], strides = [1, 1]} : vector<64x96xf32> to vector<64x8xf32>
    %88 = arith.truncf %87 : vector<64x8xf32> to vector<64x8xbf16>
    %89 = vector.extract_strided_slice %26 {offsets = [0, 56], sizes = [64, 8], strides = [1, 1]} : vector<64x96xf32> to vector<64x8xf32>
    %90 = arith.truncf %89 : vector<64x8xf32> to vector<64x8xbf16>
    %cst_32 = arith.constant dense<0.000000e+00> : vector<64x64xf32>
    %91 = tpu.matmul %88, %90, %cst_32 {dimension_numbers = #tpu.dot_dimension_numbers<[1], [1], [0], [0], [0, 0, 1, 0], [], []>} : vector<64x8xbf16>, vector<64x8xbf16>, vector<64x64xf32> -> vector<64x64xf32>
    %92 = arith.addf %91, %29 : vector<64x64xf32>
    %cst_33 = arith.constant dense<0xFF800000> : vector<64xf32>
    %93 = vector.multi_reduction <maximumf>, %92, %cst_33 [1] : vector<64x64xf32> to vector<64xf32>
    %94 = vector.shape_cast %93 : vector<64xf32> to vector<64x1xf32>
    %95 = vector.broadcast %94 : vector<64x1xf32> to vector<64x64xf32>
    %96 = arith.subf %92, %95 : vector<64x64xf32>
    %97 = math.exp %96 : vector<64x64xf32>
    %cst_34 = arith.constant dense<0.000000e+00> : vector<64xf32>
    %98 = vector.multi_reduction <add>, %97, %cst_34 [1] : vector<64x64xf32> to vector<64xf32>
    %99 = vector.shape_cast %98 : vector<64xf32> to vector<64x1xf32>
    %100 = arith.truncf %97 : vector<64x64xf32> to vector<64x64xbf16>
    %101 = vector.extract_strided_slice %27 {offsets = [0, 24], sizes = [64, 8], strides = [1, 1]} : vector<64x32xbf16> to vector<64x8xbf16>
    %cst_35 = arith.constant dense<0.000000e+00> : vector<64x8xf32>
    %102 = tpu.matmul %100, %101, %cst_35 {dimension_numbers = #tpu.dot_dimension_numbers<[1], [0], [0], [1], [0, 0, 1, 1], [], []>} : vector<64x64xbf16>, vector<64x8xbf16>, vector<64x8xf32> -> vector<64x8xf32>
    %103 = tpu.reciprocal %99 {approx = true} : vector<64x1xf32> -> vector<64x1xf32>
    %104 = vector.broadcast %103 : vector<64x1xf32> to vector<64x8xf32>
    %105 = arith.mulf %102, %104 : vector<64x8xf32>
    %106 = tpu.concatenate %48, %67, %86, %105 in 1 : vector<64x8xf32>, vector<64x8xf32>, vector<64x8xf32>, vector<64x8xf32> -> vector<64x32xf32>
    %107 = vector.extract_strided_slice %26 {offsets = [0, 64], sizes = [64, 32], strides = [1, 1]} : vector<64x96xf32> to vector<64x32xf32>
    %108 = arith.addf %106, %107 : vector<64x32xf32>
    %109 = vector.extract_strided_slice %108 {offsets = [0, 0], sizes = [16, 32], strides = [1, 1]} : vector<64x32xf32> to vector<16x32xf32>
    %110 = vector.extract_strided_slice %108 {offsets = [16, 0], sizes = [16, 32], strides = [1, 1]} : vector<64x32xf32> to vector<16x32xf32>
    %111 = vector.extract_strided_slice %108 {offsets = [32, 0], sizes = [16, 32], strides = [1, 1]} : vector<64x32xf32> to vector<16x32xf32>
    %112 = vector.extract_strided_slice %108 {offsets = [48, 0], sizes = [16, 32], strides = [1, 1]} : vector<64x32xf32> to vector<16x32xf32>
    %113 = tpu.concatenate %109, %110, %111, %112 in 1 : vector<16x32xf32>, vector<16x32xf32>, vector<16x32xf32>, vector<16x32xf32> -> vector<16x128xf32>
    %114 = vector.extract_strided_slice %25 {offsets = [64, 0], sizes = [64, 96], strides = [1, 1]} : vector<128x96xf32> to vector<64x96xf32>
    %115 = vector.extract_strided_slice %7 {offsets = [64, 0], sizes = [64, 32], strides = [1, 1]} : vector<128x32xbf16> to vector<64x32xbf16>
    %c1 = arith.constant 1 : index
    %c0_36 = arith.constant 0 : index
    %c0_37 = arith.constant 0 : index
    %116 = vector.load %arg4[%c1, %c0_36, %c0_37] : memref<2x64x64xf32, #tpu.memory_space<vmem>>, vector<1x64x64xf32>
    %117 = vector.shape_cast %116 : vector<1x64x64xf32> to vector<64x64xf32>
    %118 = vector.extract_strided_slice %114 {offsets = [0, 0], sizes = [64, 8], strides = [1, 1]} : vector<64x96xf32> to vector<64x8xf32>
    %119 = arith.truncf %118 : vector<64x8xf32> to vector<64x8xbf16>
    %120 = vector.extract_strided_slice %114 {offsets = [0, 32], sizes = [64, 8], strides = [1, 1]} : vector<64x96xf32> to vector<64x8xf32>
    %121 = arith.truncf %120 : vector<64x8xf32> to vector<64x8xbf16>
    %cst_38 = arith.constant dense<0.000000e+00> : vector<64x64xf32>
    %122 = tpu.matmul %119, %121, %cst_38 {dimension_numbers = #tpu.dot_dimension_numbers<[1], [1], [0], [0], [0, 0, 1, 0], [], []>} : vector<64x8xbf16>, vector<64x8xbf16>, vector<64x64xf32> -> vector<64x64xf32>
    %123 = arith.addf %122, %117 : vector<64x64xf32>
    %cst_39 = arith.constant dense<0xFF800000> : vector<64xf32>
    %124 = vector.multi_reduction <maximumf>, %123, %cst_39 [1] : vector<64x64xf32> to vector<64xf32>
    %125 = vector.shape_cast %124 : vector<64xf32> to vector<64x1xf32>
    %126 = vector.broadcast %125 : vector<64x1xf32> to vector<64x64xf32>
    %127 = arith.subf %123, %126 : vector<64x64xf32>
    %128 = math.exp %127 : vector<64x64xf32>
    %cst_40 = arith.constant dense<0.000000e+00> : vector<64xf32>
    %129 = vector.multi_reduction <add>, %128, %cst_40 [1] : vector<64x64xf32> to vector<64xf32>
    %130 = vector.shape_cast %129 : vector<64xf32> to vector<64x1xf32>
    %131 = arith.truncf %128 : vector<64x64xf32> to vector<64x64xbf16>
    %132 = vector.extract_strided_slice %115 {offsets = [0, 0], sizes = [64, 8], strides = [1, 1]} : vector<64x32xbf16> to vector<64x8xbf16>
    %cst_41 = arith.constant dense<0.000000e+00> : vector<64x8xf32>
    %133 = tpu.matmul %131, %132, %cst_41 {dimension_numbers = #tpu.dot_dimension_numbers<[1], [0], [0], [1], [0, 0, 1, 1], [], []>} : vector<64x64xbf16>, vector<64x8xbf16>, vector<64x8xf32> -> vector<64x8xf32>
    %134 = tpu.reciprocal %130 {approx = true} : vector<64x1xf32> -> vector<64x1xf32>
    %135 = vector.broadcast %134 : vector<64x1xf32> to vector<64x8xf32>
    %136 = arith.mulf %133, %135 : vector<64x8xf32>
    %137 = vector.extract_strided_slice %114 {offsets = [0, 8], sizes = [64, 8], strides = [1, 1]} : vector<64x96xf32> to vector<64x8xf32>
    %138 = arith.truncf %137 : vector<64x8xf32> to vector<64x8xbf16>
    %139 = vector.extract_strided_slice %114 {offsets = [0, 40], sizes = [64, 8], strides = [1, 1]} : vector<64x96xf32> to vector<64x8xf32>
    %140 = arith.truncf %139 : vector<64x8xf32> to vector<64x8xbf16>
    %cst_42 = arith.constant dense<0.000000e+00> : vector<64x64xf32>
    %141 = tpu.matmul %138, %140, %cst_42 {dimension_numbers = #tpu.dot_dimension_numbers<[1], [1], [0], [0], [0, 0, 1, 0], [], []>} : vector<64x8xbf16>, vector<64x8xbf16>, vector<64x64xf32> -> vector<64x64xf32>
    %142 = arith.addf %141, %117 : vector<64x64xf32>
    %cst_43 = arith.constant dense<0xFF800000> : vector<64xf32>
    %143 = vector.multi_reduction <maximumf>, %142, %cst_43 [1] : vector<64x64xf32> to vector<64xf32>
    %144 = vector.shape_cast %143 : vector<64xf32> to vector<64x1xf32>
    %145 = vector.broadcast %144 : vector<64x1xf32> to vector<64x64xf32>
    %146 = arith.subf %142, %145 : vector<64x64xf32>
    %147 = math.exp %146 : vector<64x64xf32>
    %cst_44 = arith.constant dense<0.000000e+00> : vector<64xf32>
    %148 = vector.multi_reduction <add>, %147, %cst_44 [1] : vector<64x64xf32> to vector<64xf32>
    %149 = vector.shape_cast %148 : vector<64xf32> to vector<64x1xf32>
    %150 = arith.truncf %147 : vector<64x64xf32> to vector<64x64xbf16>
    %151 = vector.extract_strided_slice %115 {offsets = [0, 8], sizes = [64, 8], strides = [1, 1]} : vector<64x32xbf16> to vector<64x8xbf16>
    %cst_45 = arith.constant dense<0.000000e+00> : vector<64x8xf32>
    %152 = tpu.matmul %150, %151, %cst_45 {dimension_numbers = #tpu.dot_dimension_numbers<[1], [0], [0], [1], [0, 0, 1, 1], [], []>} : vector<64x64xbf16>, vector<64x8xbf16>, vector<64x8xf32> -> vector<64x8xf32>
    %153 = tpu.reciprocal %149 {approx = true} : vector<64x1xf32> -> vector<64x1xf32>
    %154 = vector.broadcast %153 : vector<64x1xf32> to vector<64x8xf32>
    %155 = arith.mulf %152, %154 : vector<64x8xf32>
    %156 = vector.extract_strided_slice %114 {offsets = [0, 16], sizes = [64, 8], strides = [1, 1]} : vector<64x96xf32> to vector<64x8xf32>
    %157 = arith.truncf %156 : vector<64x8xf32> to vector<64x8xbf16>
    %158 = vector.extract_strided_slice %114 {offsets = [0, 48], sizes = [64, 8], strides = [1, 1]} : vector<64x96xf32> to vector<64x8xf32>
    %159 = arith.truncf %158 : vector<64x8xf32> to vector<64x8xbf16>
    %cst_46 = arith.constant dense<0.000000e+00> : vector<64x64xf32>
    %160 = tpu.matmul %157, %159, %cst_46 {dimension_numbers = #tpu.dot_dimension_numbers<[1], [1], [0], [0], [0, 0, 1, 0], [], []>} : vector<64x8xbf16>, vector<64x8xbf16>, vector<64x64xf32> -> vector<64x64xf32>
    %161 = arith.addf %160, %117 : vector<64x64xf32>
    %cst_47 = arith.constant dense<0xFF800000> : vector<64xf32>
    %162 = vector.multi_reduction <maximumf>, %161, %cst_47 [1] : vector<64x64xf32> to vector<64xf32>
    %163 = vector.shape_cast %162 : vector<64xf32> to vector<64x1xf32>
    %164 = vector.broadcast %163 : vector<64x1xf32> to vector<64x64xf32>
    %165 = arith.subf %161, %164 : vector<64x64xf32>
    %166 = math.exp %165 : vector<64x64xf32>
    %cst_48 = arith.constant dense<0.000000e+00> : vector<64xf32>
    %167 = vector.multi_reduction <add>, %166, %cst_48 [1] : vector<64x64xf32> to vector<64xf32>
    %168 = vector.shape_cast %167 : vector<64xf32> to vector<64x1xf32>
    %169 = arith.truncf %166 : vector<64x64xf32> to vector<64x64xbf16>
    %170 = vector.extract_strided_slice %115 {offsets = [0, 16], sizes = [64, 8], strides = [1, 1]} : vector<64x32xbf16> to vector<64x8xbf16>
    %cst_49 = arith.constant dense<0.000000e+00> : vector<64x8xf32>
    %171 = tpu.matmul %169, %170, %cst_49 {dimension_numbers = #tpu.dot_dimension_numbers<[1], [0], [0], [1], [0, 0, 1, 1], [], []>} : vector<64x64xbf16>, vector<64x8xbf16>, vector<64x8xf32> -> vector<64x8xf32>
    %172 = tpu.reciprocal %168 {approx = true} : vector<64x1xf32> -> vector<64x1xf32>
    %173 = vector.broadcast %172 : vector<64x1xf32> to vector<64x8xf32>
    %174 = arith.mulf %171, %173 : vector<64x8xf32>
    %175 = vector.extract_strided_slice %114 {offsets = [0, 24], sizes = [64, 8], strides = [1, 1]} : vector<64x96xf32> to vector<64x8xf32>
    %176 = arith.truncf %175 : vector<64x8xf32> to vector<64x8xbf16>
    %177 = vector.extract_strided_slice %114 {offsets = [0, 56], sizes = [64, 8], strides = [1, 1]} : vector<64x96xf32> to vector<64x8xf32>
    %178 = arith.truncf %177 : vector<64x8xf32> to vector<64x8xbf16>
    %cst_50 = arith.constant dense<0.000000e+00> : vector<64x64xf32>
    %179 = tpu.matmul %176, %178, %cst_50 {dimension_numbers = #tpu.dot_dimension_numbers<[1], [1], [0], [0], [0, 0, 1, 0], [], []>} : vector<64x8xbf16>, vector<64x8xbf16>, vector<64x64xf32> -> vector<64x64xf32>
    %180 = arith.addf %179, %117 : vector<64x64xf32>
    %cst_51 = arith.constant dense<0xFF800000> : vector<64xf32>
    %181 = vector.multi_reduction <maximumf>, %180, %cst_51 [1] : vector<64x64xf32> to vector<64xf32>
    %182 = vector.shape_cast %181 : vector<64xf32> to vector<64x1xf32>
    %183 = vector.broadcast %182 : vector<64x1xf32> to vector<64x64xf32>
    %184 = arith.subf %180, %183 : vector<64x64xf32>
    %185 = math.exp %184 : vector<64x64xf32>
    %cst_52 = arith.constant dense<0.000000e+00> : vector<64xf32>
    %186 = vector.multi_reduction <add>, %185, %cst_52 [1] : vector<64x64xf32> to vector<64xf32>
    %187 = vector.shape_cast %186 : vector<64xf32> to vector<64x1xf32>
    %188 = arith.truncf %185 : vector<64x64xf32> to vector<64x64xbf16>
    %189 = vector.extract_strided_slice %115 {offsets = [0, 24], sizes = [64, 8], strides = [1, 1]} : vector<64x32xbf16> to vector<64x8xbf16>
    %cst_53 = arith.constant dense<0.000000e+00> : vector<64x8xf32>
    %190 = tpu.matmul %188, %189, %cst_53 {dimension_numbers = #tpu.dot_dimension_numbers<[1], [0], [0], [1], [0, 0, 1, 1], [], []>} : vector<64x64xbf16>, vector<64x8xbf16>, vector<64x8xf32> -> vector<64x8xf32>
    %191 = tpu.reciprocal %187 {approx = true} : vector<64x1xf32> -> vector<64x1xf32>
    %192 = vector.broadcast %191 : vector<64x1xf32> to vector<64x8xf32>
    %193 = arith.mulf %190, %192 : vector<64x8xf32>
    %194 = tpu.concatenate %136, %155, %174, %193 in 1 : vector<64x8xf32>, vector<64x8xf32>, vector<64x8xf32>, vector<64x8xf32> -> vector<64x32xf32>
    %195 = vector.extract_strided_slice %114 {offsets = [0, 64], sizes = [64, 32], strides = [1, 1]} : vector<64x96xf32> to vector<64x32xf32>
    %196 = arith.addf %194, %195 : vector<64x32xf32>
    %197 = vector.extract_strided_slice %196 {offsets = [0, 0], sizes = [16, 32], strides = [1, 1]} : vector<64x32xf32> to vector<16x32xf32>
    %198 = vector.extract_strided_slice %196 {offsets = [16, 0], sizes = [16, 32], strides = [1, 1]} : vector<64x32xf32> to vector<16x32xf32>
    %199 = vector.extract_strided_slice %196 {offsets = [32, 0], sizes = [16, 32], strides = [1, 1]} : vector<64x32xf32> to vector<16x32xf32>
    %200 = vector.extract_strided_slice %196 {offsets = [48, 0], sizes = [16, 32], strides = [1, 1]} : vector<64x32xf32> to vector<16x32xf32>
    %201 = tpu.concatenate %197, %198, %199, %200 in 1 : vector<16x32xf32>, vector<16x32xf32>, vector<16x32xf32>, vector<16x32xf32> -> vector<16x128xf32>
    %202 = tpu.concatenate %113, %201 in 0 : vector<16x128xf32>, vector<16x128xf32> -> vector<32x128xf32>
    %203 = arith.truncf %202 : vector<32x128xf32> to vector<32x128xbf16>
    %c0_54 = arith.constant 0 : index
    %c0_55 = arith.constant 0 : index
    %204 = vector.load %arg9[%c0_54, %c0_55] : memref<128x128xbf16, #tpu.memory_space<vmem>>, vector<128x128xbf16>
    %cst_56 = arith.constant dense<0.000000e+00> : vector<32x128xf32>
    %205 = tpu.matmul %203, %204, %cst_56 {dimension_numbers = #tpu.dot_dimension_numbers<[1], [0], [0], [1], [0, 0, 1, 1], [], []>} : vector<32x128xbf16>, vector<128x128xbf16>, vector<32x128xf32> -> vector<32x128xf32>
    %c0_57 = arith.constant 0 : index
    %c0_58 = arith.constant 0 : index
    %206 = vector.load %arg10[%c0_57, %c0_58] : memref<1x128xf32, #tpu.memory_space<vmem>>, vector<1x128xf32>
    %207 = vector.broadcast %206 : vector<1x128xf32> to vector<32x128xf32>
    %208 = arith.mulf %205, %207 : vector<32x128xf32>
    %c0_59 = arith.constant 0 : index
    %c0_60 = arith.constant 0 : index
    %209 = vector.load %arg11[%c0_59, %c0_60] : memref<1x128xf32, #tpu.memory_space<vmem>>, vector<1x128xf32>
    %210 = vector.broadcast %209 : vector<1x128xf32> to vector<32x128xf32>
    %211 = arith.addf %208, %210 : vector<32x128xf32>
    %cst_61 = arith.constant 5.000000e-01 : f32
    %212 = vector.broadcast %cst_61 : f32 to vector<32x128xf32>
    %213 = arith.mulf %212, %211 : vector<32x128xf32>
    %cst_62 = arith.constant 0.707106769 : f32
    %214 = vector.broadcast %cst_62 : f32 to vector<32x128xf32>
    %215 = arith.mulf %211, %214 : vector<32x128xf32>
    %216 = math.absf %215 : vector<32x128xf32>
    %cst_63 = arith.constant 5.000000e-01 : f32
    %217 = vector.broadcast %cst_63 : f32 to vector<32x128xf32>
    %218 = arith.mulf %217, %216 : vector<32x128xf32>
    %cst_64 = arith.constant 1.000000e+00 : f32
    %219 = vector.broadcast %cst_64 : f32 to vector<32x128xf32>
    %220 = arith.addf %219, %218 : vector<32x128xf32>
    %cst_65 = arith.constant 1.000000e+00 : f32
    %221 = vector.broadcast %cst_65 : f32 to vector<32x128xf32>
    %222 = arith.divf %221, %220 : vector<32x128xf32>
    %cst_66 = arith.constant 0.000000e+00 : f32
    %223 = vector.broadcast %cst_66 : f32 to vector<32x128xf32>
    %224 = arith.subf %223, %216 : vector<32x128xf32>
    %225 = arith.mulf %224, %216 : vector<32x128xf32>
    %cst_67 = arith.constant 1.26551223 : f32
    %226 = vector.broadcast %cst_67 : f32 to vector<32x128xf32>
    %227 = arith.subf %225, %226 : vector<32x128xf32>
    %cst_68 = arith.constant 0.170872763 : f32
    %228 = vector.broadcast %cst_68 : f32 to vector<32x128xf32>
    %229 = arith.mulf %222, %228 : vector<32x128xf32>
    %cst_69 = arith.constant -0.822152256 : f32
    %230 = vector.broadcast %cst_69 : f32 to vector<32x128xf32>
    %231 = arith.addf %230, %229 : vector<32x128xf32>
    %232 = arith.mulf %222, %231 : vector<32x128xf32>
    %cst_70 = arith.constant 1.48851585 : f32
    %233 = vector.broadcast %cst_70 : f32 to vector<32x128xf32>
    %234 = arith.addf %233, %232 : vector<32x128xf32>
    %235 = arith.mulf %222, %234 : vector<32x128xf32>
    %cst_71 = arith.constant -1.13520396 : f32
    %236 = vector.broadcast %cst_71 : f32 to vector<32x128xf32>
    %237 = arith.addf %236, %235 : vector<32x128xf32>
    %238 = arith.mulf %222, %237 : vector<32x128xf32>
    %cst_72 = arith.constant 0.278868079 : f32
    %239 = vector.broadcast %cst_72 : f32 to vector<32x128xf32>
    %240 = arith.addf %239, %238 : vector<32x128xf32>
    %241 = arith.mulf %222, %240 : vector<32x128xf32>
    %cst_73 = arith.constant -0.186288059 : f32
    %242 = vector.broadcast %cst_73 : f32 to vector<32x128xf32>
    %243 = arith.addf %242, %241 : vector<32x128xf32>
    %244 = arith.mulf %222, %243 : vector<32x128xf32>
    %cst_74 = arith.constant 0.0967841818 : f32
    %245 = vector.broadcast %cst_74 : f32 to vector<32x128xf32>
    %246 = arith.addf %245, %244 : vector<32x128xf32>
    %247 = arith.mulf %222, %246 : vector<32x128xf32>
    %cst_75 = arith.constant 0.374091953 : f32
    %248 = vector.broadcast %cst_75 : f32 to vector<32x128xf32>
    %249 = arith.addf %248, %247 : vector<32x128xf32>
    %250 = arith.mulf %222, %249 : vector<32x128xf32>
    %cst_76 = arith.constant 1.00002372 : f32
    %251 = vector.broadcast %cst_76 : f32 to vector<32x128xf32>
    %252 = arith.addf %251, %250 : vector<32x128xf32>
    %253 = arith.mulf %222, %252 : vector<32x128xf32>
    %254 = arith.addf %227, %253 : vector<32x128xf32>
    %255 = math.exp %254 : vector<32x128xf32>
    %256 = arith.mulf %222, %255 : vector<32x128xf32>
    %cst_77 = arith.constant 1.000000e+00 : f32
    %257 = vector.broadcast %cst_77 : f32 to vector<32x128xf32>
    %258 = arith.subf %257, %256 : vector<32x128xf32>
    %cst_78 = arith.constant 0.000000e+00 : f32
    %259 = vector.broadcast %cst_78 : f32 to vector<32x128xf32>
    %260 = arith.cmpf oge, %215, %259 : vector<32x128xf32>
    %cst_79 = arith.constant 0.000000e+00 : f32
    %261 = vector.broadcast %cst_79 : f32 to vector<32x128xf32>
    %262 = arith.subf %261, %258 : vector<32x128xf32>
    %263 = arith.select %260, %258, %262 : vector<32x128xi1>, vector<32x128xf32>
    %cst_80 = arith.constant 1.000000e+00 : f32
    %264 = vector.broadcast %cst_80 : f32 to vector<32x128xf32>
    %265 = arith.addf %264, %263 : vector<32x128xf32>
    %266 = arith.mulf %213, %265 : vector<32x128xf32>
    %267 = arith.truncf %266 : vector<32x128xf32> to vector<32x128xbf16>
    %c0_81 = arith.constant 0 : index
    %c0_82 = arith.constant 0 : index
    %268 = vector.load %arg12[%c0_81, %c0_82] : memref<128x32xbf16, #tpu.memory_space<vmem>>, vector<128x32xbf16>
    %cst_83 = arith.constant dense<0.000000e+00> : vector<32x32xf32>
    %269 = tpu.matmul %267, %268, %cst_83 {dimension_numbers = #tpu.dot_dimension_numbers<[1], [0], [0], [1], [0, 0, 1, 1], [], []>} : vector<32x128xbf16>, vector<128x32xbf16>, vector<32x32xf32> -> vector<32x32xf32>
    %c0_84 = arith.constant 0 : index
    %c0_85 = arith.constant 0 : index
    %270 = vector.load %arg13[%c0_84, %c0_85] : memref<1x32xf32, #tpu.memory_space<vmem>>, vector<1x32xf32>
    %271 = vector.broadcast %270 : vector<1x32xf32> to vector<32x32xf32>
    %272 = arith.mulf %269, %271 : vector<32x32xf32>
    %c0_86 = arith.constant 0 : index
    %c0_87 = arith.constant 0 : index
    %273 = vector.load %arg14[%c0_86, %c0_87] : memref<1x32xf32, #tpu.memory_space<vmem>>, vector<1x32xf32>
    %274 = vector.broadcast %273 : vector<1x32xf32> to vector<32x32xf32>
    %275 = arith.addf %272, %274 : vector<32x32xf32>
    %cst_88 = arith.constant 5.000000e-01 : f32
    %276 = vector.broadcast %cst_88 : f32 to vector<32x32xf32>
    %277 = arith.mulf %276, %275 : vector<32x32xf32>
    %cst_89 = arith.constant 0.707106769 : f32
    %278 = vector.broadcast %cst_89 : f32 to vector<32x32xf32>
    %279 = arith.mulf %275, %278 : vector<32x32xf32>
    %280 = math.absf %279 : vector<32x32xf32>
    %cst_90 = arith.constant 5.000000e-01 : f32
    %281 = vector.broadcast %cst_90 : f32 to vector<32x32xf32>
    %282 = arith.mulf %281, %280 : vector<32x32xf32>
    %cst_91 = arith.constant 1.000000e+00 : f32
    %283 = vector.broadcast %cst_91 : f32 to vector<32x32xf32>
    %284 = arith.addf %283, %282 : vector<32x32xf32>
    %cst_92 = arith.constant 1.000000e+00 : f32
    %285 = vector.broadcast %cst_92 : f32 to vector<32x32xf32>
    %286 = arith.divf %285, %284 : vector<32x32xf32>
    %cst_93 = arith.constant 0.000000e+00 : f32
    %287 = vector.broadcast %cst_93 : f32 to vector<32x32xf32>
    %288 = arith.subf %287, %280 : vector<32x32xf32>
    %289 = arith.mulf %288, %280 : vector<32x32xf32>
    %cst_94 = arith.constant 1.26551223 : f32
    %290 = vector.broadcast %cst_94 : f32 to vector<32x32xf32>
    %291 = arith.subf %289, %290 : vector<32x32xf32>
    %cst_95 = arith.constant 0.170872763 : f32
    %292 = vector.broadcast %cst_95 : f32 to vector<32x32xf32>
    %293 = arith.mulf %286, %292 : vector<32x32xf32>
    %cst_96 = arith.constant -0.822152256 : f32
    %294 = vector.broadcast %cst_96 : f32 to vector<32x32xf32>
    %295 = arith.addf %294, %293 : vector<32x32xf32>
    %296 = arith.mulf %286, %295 : vector<32x32xf32>
    %cst_97 = arith.constant 1.48851585 : f32
    %297 = vector.broadcast %cst_97 : f32 to vector<32x32xf32>
    %298 = arith.addf %297, %296 : vector<32x32xf32>
    %299 = arith.mulf %286, %298 : vector<32x32xf32>
    %cst_98 = arith.constant -1.13520396 : f32
    %300 = vector.broadcast %cst_98 : f32 to vector<32x32xf32>
    %301 = arith.addf %300, %299 : vector<32x32xf32>
    %302 = arith.mulf %286, %301 : vector<32x32xf32>
    %cst_99 = arith.constant 0.278868079 : f32
    %303 = vector.broadcast %cst_99 : f32 to vector<32x32xf32>
    %304 = arith.addf %303, %302 : vector<32x32xf32>
    %305 = arith.mulf %286, %304 : vector<32x32xf32>
    %cst_100 = arith.constant -0.186288059 : f32
    %306 = vector.broadcast %cst_100 : f32 to vector<32x32xf32>
    %307 = arith.addf %306, %305 : vector<32x32xf32>
    %308 = arith.mulf %286, %307 : vector<32x32xf32>
    %cst_101 = arith.constant 0.0967841818 : f32
    %309 = vector.broadcast %cst_101 : f32 to vector<32x32xf32>
    %310 = arith.addf %309, %308 : vector<32x32xf32>
    %311 = arith.mulf %286, %310 : vector<32x32xf32>
    %cst_102 = arith.constant 0.374091953 : f32
    %312 = vector.broadcast %cst_102 : f32 to vector<32x32xf32>
    %313 = arith.addf %312, %311 : vector<32x32xf32>
    %314 = arith.mulf %286, %313 : vector<32x32xf32>
    %cst_103 = arith.constant 1.00002372 : f32
    %315 = vector.broadcast %cst_103 : f32 to vector<32x32xf32>
    %316 = arith.addf %315, %314 : vector<32x32xf32>
    %317 = arith.mulf %286, %316 : vector<32x32xf32>
    %318 = arith.addf %291, %317 : vector<32x32xf32>
    %319 = math.exp %318 : vector<32x32xf32>
    %320 = arith.mulf %286, %319 : vector<32x32xf32>
    %cst_104 = arith.constant 1.000000e+00 : f32
    %321 = vector.broadcast %cst_104 : f32 to vector<32x32xf32>
    %322 = arith.subf %321, %320 : vector<32x32xf32>
    %cst_105 = arith.constant 0.000000e+00 : f32
    %323 = vector.broadcast %cst_105 : f32 to vector<32x32xf32>
    %324 = arith.cmpf oge, %279, %323 : vector<32x32xf32>
    %cst_106 = arith.constant 0.000000e+00 : f32
    %325 = vector.broadcast %cst_106 : f32 to vector<32x32xf32>
    %326 = arith.subf %325, %322 : vector<32x32xf32>
    %327 = arith.select %324, %322, %326 : vector<32x32xi1>, vector<32x32xf32>
    %cst_107 = arith.constant 1.000000e+00 : f32
    %328 = vector.broadcast %cst_107 : f32 to vector<32x32xf32>
    %329 = arith.addf %328, %327 : vector<32x32xf32>
    %330 = arith.mulf %277, %329 : vector<32x32xf32>
    %c0_108 = arith.constant 0 : index
    %c0_109 = arith.constant 0 : index
    %331 = vector.load %arg15[%c0_108, %c0_109] : memref<32x32xf32, #tpu.memory_space<vmem>>, vector<32x32xf32>
    tpu.vector_store %arg15[%c0_108, %c0_109], %330 {strides = array<i32>} : memref<32x32xf32, #tpu.memory_space<vmem>>, vector<32x32xf32>,
    return
  }
  func.func @transform_0(%arg0: i32) -> (i32, i32) {
    %c0_i32 = arith.constant 0 : i32
    %c0_i32_0 = arith.constant 0 : i32
    return %arg0, %c0_i32 : i32, i32
  }
  func.func @transform_1(%arg0: i32) -> (i32, i32) {
    %c0_i32 = arith.constant 0 : i32
    %c0_i32_0 = arith.constant 0 : i32
    return %arg0, %c0_i32 : i32, i32
  }
  func.func @transform_2(%arg0: i32) -> (i32, i32) {
    %c0_i32 = arith.constant 0 : i32
    %c0_i32_0 = arith.constant 0 : i32
    return %arg0, %c0_i32 : i32, i32
  }
  func.func @transform_3(%arg0: i32) -> (i32, i32, i32) {
    %c0_i32 = arith.constant 0 : i32
    %c0_i32_0 = arith.constant 0 : i32
    %c0_i32_1 = arith.constant 0 : i32
    return %arg0, %c0_i32, %c0_i32_0 : i32, i32, i32
  }
  func.func @transform_4(%arg0: i32) -> (i32, i32) {
    %c0_i32 = arith.constant 0 : i32
    %c0_i32_0 = arith.constant 0 : i32
    %c0_i32_1 = arith.constant 0 : i32
    return %c0_i32, %c0_i32_0 : i32, i32
  }
  func.func @transform_5(%arg0: i32) -> (i32, i32) {
    %c0_i32 = arith.constant 0 : i32
    %c0_i32_0 = arith.constant 0 : i32
    %c0_i32_1 = arith.constant 0 : i32
    return %c0_i32, %c0_i32_0 : i32, i32
  }
  func.func @transform_6(%arg0: i32) -> (i32, i32) {
    %c0_i32 = arith.constant 0 : i32
    %c0_i32_0 = arith.constant 0 : i32
    %c0_i32_1 = arith.constant 0 : i32
    return %c0_i32, %c0_i32_0 : i32, i32
  }
  func.func @transform_7(%arg0: i32) -> (i32, i32) {
    %c0_i32 = arith.constant 0 : i32
    %c0_i32_0 = arith.constant 0 : i32
    %c0_i32_1 = arith.constant 0 : i32
    return %c0_i32, %c0_i32_0 : i32, i32
  }
  func.func @transform_8(%arg0: i32) -> (i32, i32) {
    %c0_i32 = arith.constant 0 : i32
    %c0_i32_0 = arith.constant 0 : i32
    %c0_i32_1 = arith.constant 0 : i32
    return %c0_i32, %c0_i32_0 : i32, i32
  }
  func.func @transform_9(%arg0: i32) -> (i32, i32) {
    %c0_i32 = arith.constant 0 : i32
    %c0_i32_0 = arith.constant 0 : i32
    %c0_i32_1 = arith.constant 0 : i32
    return %c0_i32, %c0_i32_0 : i32, i32
  }
  func.func @transform_10(%arg0: i32) -> (i32, i32) {
    %c0_i32 = arith.constant 0 : i32
    %c0_i32_0 = arith.constant 0 : i32
    %c0_i32_1 = arith.constant 0 : i32
    return %c0_i32, %c0_i32_0 : i32, i32
  }
  func.func @transform_11(%arg0: i32) -> (i32, i32) {
    %c0_i32 = arith.constant 0 : i32
    %c0_i32_0 = arith.constant 0 : i32
    %c0_i32_1 = arith.constant 0 : i32
    return %c0_i32, %c0_i32_0 : i32, i32
  }
  func.func @transform_12(%arg0: i32) -> (i32, i32) {
    %c0_i32 = arith.constant 0 : i32
    %c0_i32_0 = arith.constant 0 : i32
    %c0_i32_1 = arith.constant 0 : i32
    return %c0_i32, %c0_i32_0 : i32, i32
  }
  func.func @transform_13(%arg0: i32) -> (i32, i32) {
    %c0_i32 = arith.constant 0 : i32
    %c0_i32_0 = arith.constant 0 : i32
    %c0_i32_1 = arith.constant 0 : i32
    return %c0_i32, %c0_i32_0 : i32, i32
  }
  func.func @transform_14(%arg0: i32) -> (i32, i32) {
    %c0_i32 = arith.constant 0 : i32
    %c0_i32_0 = arith.constant 0 : i32
    return %arg0, %c0_i32 : i32, i32
  }
}

</mosaic_0001>

<llo_original>
// kernel: variable_seg_gt_forward.1
$region0: #{variable_seg_gt_forward.1}
  #allocation0 [shape = 'u32[]', space=smem, size = 0x4, offset = 0x4, fixed_abs, tag = 'smem constant byte address 0x4 - core index']
  #allocation1 [shape = 'u32[144,128]{1,0:T(1,128)}', space=vmem, size = 0x12000, scoped, tag = 'internal scratch']
  %s0 = inlined_call_operand.vmem [shape: f32[128,1], index: 0, kind: input, shape index: {}]
  %s1 = inlined_call_operand.vmem [shape: f32[128,1], index: 1, kind: input, shape index: {}]
  %s2 = inlined_call_operand.vmem [shape: f32[128,32], index: 2, kind: input, shape index: {}]
  %s3 = inlined_call_operand.vmem [shape: f32[2,64,64], index: 3, kind: input, shape index: {}]
  %s4 = inlined_call_operand.vmem [shape: f32[128,32], index: 4, kind: input, shape index: {}]
  %s5 = inlined_call_operand.vmem [shape: bf16[128,24], index: 5, kind: input, shape index: {}]
  %s6 = inlined_call_operand.vmem [shape: bf16[24,128], index: 6, kind: input, shape index: {}]
  %s7 = inlined_call_operand.vmem [shape: bf16[32,96], index: 7, kind: input, shape index: {}]
  %s8 = inlined_call_operand.vmem [shape: bf16[128,128], index: 8, kind: input, shape index: {}]
  %s9 = inlined_call_operand.vmem [shape: f32[1,128], index: 9, kind: input, shape index: {}]
  %s10 = inlined_call_operand.vmem [shape: f32[1,128], index: 10, kind: input, shape index: {}]
  %s11 = inlined_call_operand.vmem [shape: bf16[128,32], index: 11, kind: input, shape index: {}]
  %s12 = inlined_call_operand.vmem [shape: f32[1,32], index: 12, kind: input, shape index: {}]
  %s13 = inlined_call_operand.vmem [shape: f32[1,32], index: 13, kind: input, shape index: {}]
  %s14 = inlined_call_operand.hbm [shape: f32[32,32], index: 14, kind: output, shape index: {}]
  %s15 = sld [smem:[#allocation0]]
  $region66: #{variable_seg_gt_forward.1} parent=0
    _
  %s17 = ssub.s32 1, %s15
  %s18 = scalar_select 0, %s17, %s15
  $region1: #{variable_seg_gt_forward.1} parent=0
    #allocation2 [shape = 'u8[16384]{0}', space=vmem, size = 0x4000, scoped, tag = 'output window, operand 0, single buffered']
    #allocation3 [shape = 's32[1]{0}', space=sflag, size = 0x4, scoped, tag = 'scoped memory for variable_seg_gt_forward.1']
    %19 = vsyncpa [#allocation3], 0
    // Predicated region
    $region2: #{variable_seg_gt_forward.1} parent=1 // pred_check
      _
    $region3: #{variable_seg_gt_forward.1} parent=1 // pred_check_branch
      %21 = sbr.rel (0) target = $region5
    $region4: #{variable_seg_gt_forward.1} parent=1 // pred_region
      _
    $region5: #{variable_seg_gt_forward.1} parent=1 // pred_fallthru
      _
    // Predicated region
    $region6: #{variable_seg_gt_forward.1} parent=1 // pred_check
      _
    $region7: #{variable_seg_gt_forward.1} parent=1 // pred_check_branch
      %23 = sbr.rel (0) target = $region9
    $region8: #{variable_seg_gt_forward.1} parent=1 // pred_region
      _
    $region9: #{variable_seg_gt_forward.1} parent=1 // pred_fallthru
      _
    // Predicated region
    $region10: #{variable_seg_gt_forward.1} parent=1 // pred_check
      _
    $region11: #{variable_seg_gt_forward.1} parent=1 // pred_check_branch
      %25 = sbr.rel (0) target = $region13
    $region12: #{variable_seg_gt_forward.1} parent=1 // pred_region
      _
    $region13: #{variable_seg_gt_forward.1} parent=1 // pred_fallthru
      _
    // Predicated region
    $region14: #{variable_seg_gt_forward.1} parent=1 // pred_check
      _
    $region15: #{variable_seg_gt_forward.1} parent=1 // pred_check_branch
      %27 = sbr.rel (0) target = $region17
    $region16: #{variable_seg_gt_forward.1} parent=1 // pred_region
      _
    $region17: #{variable_seg_gt_forward.1} parent=1 // pred_fallthru
      _
    // Predicated region
    $region18: #{variable_seg_gt_forward.1} parent=1 // pred_check
      _
    $region19: #{variable_seg_gt_forward.1} parent=1 // pred_check_branch
      %29 = sbr.rel (0) target = $region21
    $region20: #{variable_seg_gt_forward.1} parent=1 // pred_region
      _
    $region21: #{variable_seg_gt_forward.1} parent=1 // pred_fallthru
      _
    // Predicated region
    $region22: #{variable_seg_gt_forward.1} parent=1 // pred_check
      _
    $region23: #{variable_seg_gt_forward.1} parent=1 // pred_check_branch
      %31 = sbr.rel (0) target = $region25
    $region24: #{variable_seg_gt_forward.1} parent=1 // pred_region
      _
    $region25: #{variable_seg_gt_forward.1} parent=1 // pred_fallthru
      _
    // Predicated region
    $region26: #{variable_seg_gt_forward.1} parent=1 // pred_check
      _
    $region27: #{variable_seg_gt_forward.1} parent=1 // pred_check_branch
      %33 = sbr.rel (0) target = $region29
    $region28: #{variable_seg_gt_forward.1} parent=1 // pred_region
      _
    $region29: #{variable_seg_gt_forward.1} parent=1 // pred_fallthru
      _
    // Predicated region
    $region30: #{variable_seg_gt_forward.1} parent=1 // pred_check
      _
    $region31: #{variable_seg_gt_forward.1} parent=1 // pred_check_branch
      %35 = sbr.rel (0) target = $region33
    $region32: #{variable_seg_gt_forward.1} parent=1 // pred_region
      _
    $region33: #{variable_seg_gt_forward.1} parent=1 // pred_fallthru
      _
    // Predicated region
    $region34: #{variable_seg_gt_forward.1} parent=1 // pred_check
      _
    $region35: #{variable_seg_gt_forward.1} parent=1 // pred_check_branch
      %37 = sbr.rel (0) target = $region37
    $region36: #{variable_seg_gt_forward.1} parent=1 // pred_region
      _
    $region37: #{variable_seg_gt_forward.1} parent=1 // pred_fallthru
      _
    // Predicated region
    $region38: #{variable_seg_gt_forward.1} parent=1 // pred_check
      _
    $region39: #{variable_seg_gt_forward.1} parent=1 // pred_check_branch
      %39 = sbr.rel (0) target = $region41
    $region40: #{variable_seg_gt_forward.1} parent=1 // pred_region
      _
    $region41: #{variable_seg_gt_forward.1} parent=1 // pred_fallthru
      _
    // Predicated region
    $region42: #{variable_seg_gt_forward.1} parent=1 // pred_check
      _
    $region43: #{variable_seg_gt_forward.1} parent=1 // pred_check_branch
      %41 = sbr.rel (0) target = $region45
    $region44: #{variable_seg_gt_forward.1} parent=1 // pred_region
      _
    $region45: #{variable_seg_gt_forward.1} parent=1 // pred_fallthru
      _
    // Predicated region
    $region46: #{variable_seg_gt_forward.1} parent=1 // pred_check
      _
    $region47: #{variable_seg_gt_forward.1} parent=1 // pred_check_branch
      %43 = sbr.rel (0) target = $region49
    $region48: #{variable_seg_gt_forward.1} parent=1 // pred_region
      _
    $region49: #{variable_seg_gt_forward.1} parent=1 // pred_fallthru
      _
    // Predicated region
    $region50: #{variable_seg_gt_forward.1} parent=1 // pred_check
      _
    $region51: #{variable_seg_gt_forward.1} parent=1 // pred_check_branch
      %45 = sbr.rel (0) target = $region53
    $region52: #{variable_seg_gt_forward.1} parent=1 // pred_region
      _
    $region53: #{variable_seg_gt_forward.1} parent=1 // pred_fallthru
      _
    // Predicated region
    $region54: #{variable_seg_gt_forward.1} parent=1 // pred_check
      _
    $region55: #{variable_seg_gt_forward.1} parent=1 // pred_check_branch
      %47 = sbr.rel (0) target = $region57
    $region56: #{variable_seg_gt_forward.1} parent=1 // pred_region
      _
    $region57: #{variable_seg_gt_forward.1} parent=1 // pred_fallthru
      _
    %v49 = vld [vmem:[%s0] sm:$0xff]
    %v50 = vld [vmem:[%s0 + $0x8] sm:$0xff]
    %v51 = vld [vmem:[%s0 + $0x10] sm:$0xff]
    %v52 = vld [vmem:[%s0 + $0x18] sm:$0xff]
    %v53 = vld [vmem:[%s0 + $0x20] sm:$0xff]
    %v54 = vld [vmem:[%s0 + $0x28] sm:$0xff]
    %v55 = vld [vmem:[%s0 + $0x30] sm:$0xff]
    %v56 = vld [vmem:[%s0 + $0x38] sm:$0xff]
    %v57 = vld [vmem:[%s0 + $0x40] sm:$0xff]
    %v58 = vld [vmem:[%s0 + $0x48] sm:$0xff]
    %v59 = vld [vmem:[%s0 + $0x50] sm:$0xff]
    %v60 = vld [vmem:[%s0 + $0x58] sm:$0xff]
    %v61 = vld [vmem:[%s0 + $0x60] sm:$0xff]
    %v62 = vld [vmem:[%s0 + $0x68] sm:$0xff]
    %v63 = vld [vmem:[%s0 + $0x70] sm:$0xff]
    %v64 = vld [vmem:[%s0 + $0x78] sm:$0xff]
    %v65 = vld [vmem:[%s1] sm:$0xff]
    %v66 = vld [vmem:[%s1 + $0x8] sm:$0xff]
    %v67 = vld [vmem:[%s1 + $0x10] sm:$0xff]
    %v68 = vld [vmem:[%s1 + $0x18] sm:$0xff]
    %v69 = vld [vmem:[%s1 + $0x20] sm:$0xff]
    %v70 = vld [vmem:[%s1 + $0x28] sm:$0xff]
    %v71 = vld [vmem:[%s1 + $0x30] sm:$0xff]
    %v72 = vld [vmem:[%s1 + $0x38] sm:$0xff]
    %v73 = vld [vmem:[%s1 + $0x40] sm:$0xff]
    %v74 = vld [vmem:[%s1 + $0x48] sm:$0xff]
    %v75 = vld [vmem:[%s1 + $0x50] sm:$0xff]
    %v76 = vld [vmem:[%s1 + $0x58] sm:$0xff]
    %v77 = vld [vmem:[%s1 + $0x60] sm:$0xff]
    %v78 = vld [vmem:[%s1 + $0x68] sm:$0xff]
    %v79 = vld [vmem:[%s1 + $0x70] sm:$0xff]
    %v80 = vld [vmem:[%s1 + $0x78] sm:$0xff]
    %v81 = vld [vmem:[%s4] sm:$0xff]
    %v82 = vld [vmem:[%s4 + $0x8] sm:$0xff]
    %v83 = vld [vmem:[%s4 + $0x10] sm:$0xff]
    %v84 = vld [vmem:[%s4 + $0x18] sm:$0xff]
    %v85 = vld [vmem:[%s4 + $0x20] sm:$0xff]
    %v86 = vld [vmem:[%s4 + $0x28] sm:$0xff]
    %v87 = vld [vmem:[%s4 + $0x30] sm:$0xff]
    %v88 = vld [vmem:[%s4 + $0x38] sm:$0xff]
    %v89 = vld [vmem:[%s4 + $0x40] sm:$0xff]
    %v90 = vld [vmem:[%s4 + $0x48] sm:$0xff]
    %v91 = vld [vmem:[%s4 + $0x50] sm:$0xff]
    %v92 = vld [vmem:[%s4 + $0x58] sm:$0xff]
    %v93 = vld [vmem:[%s4 + $0x60] sm:$0xff]
    %v94 = vld [vmem:[%s4 + $0x68] sm:$0xff]
    %v95 = vld [vmem:[%s4 + $0x70] sm:$0xff]
    %v96 = vld [vmem:[%s4 + $0x78] sm:$0xff]
    %98 = vset.pattern.permute.xlu0 0
    %99 = vperm.xlu0 %98, %v49
    %v100 = vpop.permute.xlu0 %99
    %103 = vset.pattern.permute.xlu0 0
    %104 = vperm.xlu0 %103, %v50
    %v105 = vpop.permute.xlu0 %104
    %108 = vset.pattern.permute.xlu0 0
    %109 = vperm.xlu0 %108, %v51
    %v110 = vpop.permute.xlu0 %109
    %113 = vset.pattern.permute.xlu0 0
    %114 = vperm.xlu0 %113, %v52
    %v115 = vpop.permute.xlu0 %114
    %118 = vset.pattern.permute.xlu0 0
    %119 = vperm.xlu0 %118, %v53
    %v120 = vpop.permute.xlu0 %119
    %123 = vset.pattern.permute.xlu0 0
    %124 = vperm.xlu0 %123, %v54
    %v125 = vpop.permute.xlu0 %124
    %128 = vset.pattern.permute.xlu0 0
    %129 = vperm.xlu0 %128, %v55
    %v130 = vpop.permute.xlu0 %129
    %133 = vset.pattern.permute.xlu0 0
    %134 = vperm.xlu0 %133, %v56
    %v135 = vpop.permute.xlu0 %134
    %138 = vset.pattern.permute.xlu0 0
    %139 = vperm.xlu0 %138, %v57
    %v140 = vpop.permute.xlu0 %139
    %143 = vset.pattern.permute.xlu0 0
    %144 = vperm.xlu0 %143, %v58
    %v145 = vpop.permute.xlu0 %144
    %148 = vset.pattern.permute.xlu0 0
    %149 = vperm.xlu0 %148, %v59
    %v150 = vpop.permute.xlu0 %149
    %153 = vset.pattern.permute.xlu0 0
    %154 = vperm.xlu0 %153, %v60
    %v155 = vpop.permute.xlu0 %154
    %158 = vset.pattern.permute.xlu0 0
    %159 = vperm.xlu0 %158, %v61
    %v160 = vpop.permute.xlu0 %159
    %163 = vset.pattern.permute.xlu0 0
    %164 = vperm.xlu0 %163, %v62
    %v165 = vpop.permute.xlu0 %164
    %168 = vset.pattern.permute.xlu0 0
    %169 = vperm.xlu0 %168, %v63
    %v170 = vpop.permute.xlu0 %169
    %173 = vset.pattern.permute.xlu0 0
    %174 = vperm.xlu0 %173, %v64
    %v175 = vpop.permute.xlu0 %174
    %v177 = vmul.f32 %v100, %v81
    %v178 = vmul.f32 %v105, %v82
    %v179 = vmul.f32 %v110, %v83
    %v180 = vmul.f32 %v115, %v84
    %v181 = vmul.f32 %v120, %v85
    %v182 = vmul.f32 %v125, %v86
    %v183 = vmul.f32 %v130, %v87
    %v184 = vmul.f32 %v135, %v88
    %v185 = vmul.f32 %v140, %v89
    %v186 = vmul.f32 %v145, %v90
    %v187 = vmul.f32 %v150, %v91
    %v188 = vmul.f32 %v155, %v92
    %v189 = vmul.f32 %v160, %v93
    %v190 = vmul.f32 %v165, %v94
    %v191 = vmul.f32 %v170, %v95
    %v192 = vmul.f32 %v175, %v96
    %v193 = vld [vmem:[%s2] sm:$0xff]
    %v194 = vld [vmem:[%s2 + $0x8] sm:$0xff]
    %v195 = vld [vmem:[%s2 + $0x10] sm:$0xff]
    %v196 = vld [vmem:[%s2 + $0x18] sm:$0xff]
    %v197 = vld [vmem:[%s2 + $0x20] sm:$0xff]
    %v198 = vld [vmem:[%s2 + $0x28] sm:$0xff]
    %v199 = vld [vmem:[%s2 + $0x30] sm:$0xff]
    %v200 = vld [vmem:[%s2 + $0x38] sm:$0xff]
    %v201 = vld [vmem:[%s2 + $0x40] sm:$0xff]
    %v202 = vld [vmem:[%s2 + $0x48] sm:$0xff]
    %v203 = vld [vmem:[%s2 + $0x50] sm:$0xff]
    %v204 = vld [vmem:[%s2 + $0x58] sm:$0xff]
    %v205 = vld [vmem:[%s2 + $0x60] sm:$0xff]
    %v206 = vld [vmem:[%s2 + $0x68] sm:$0xff]
    %v207 = vld [vmem:[%s2 + $0x70] sm:$0xff]
    %v208 = vld [vmem:[%s2 + $0x78] sm:$0xff]
    %v209 = vadd.f32 %v177, %v193
    %v210 = vadd.f32 %v178, %v194
    %v211 = vadd.f32 %v179, %v195
    %v212 = vadd.f32 %v180, %v196
    %v213 = vadd.f32 %v181, %v197
    %v214 = vadd.f32 %v182, %v198
    %v215 = vadd.f32 %v183, %v199
    %v216 = vadd.f32 %v184, %v200
    %v217 = vadd.f32 %v185, %v201
    %v218 = vadd.f32 %v186, %v202
    %v219 = vadd.f32 %v187, %v203
    %v220 = vadd.f32 %v188, %v204
    %v221 = vadd.f32 %v189, %v205
    %v222 = vadd.f32 %v190, %v206
    %v223 = vadd.f32 %v191, %v207
    %v224 = vadd.f32 %v192, %v208
    %v225 = vpack.c.bf16 %v210, %v209
    %v226 = vpack.c.bf16 %v212, %v211
    %v227 = vpack.c.bf16 %v214, %v213
    %v228 = vpack.c.bf16 %v216, %v215
    %v229 = vpack.c.bf16 %v218, %v217
    %v230 = vpack.c.bf16 %v220, %v219
    %v231 = vpack.c.bf16 %v222, %v221
    %v232 = vpack.c.bf16 %v224, %v223
    %234 = vset.pattern.permute.xlu0 0
    %235 = vperm.xlu0 %234, %v65
    %v236 = vpop.permute.xlu0 %235
    %239 = vset.pattern.permute.xlu0 0
    %240 = vperm.xlu0 %239, %v66
    %v241 = vpop.permute.xlu0 %240
    %244 = vset.pattern.permute.xlu0 0
    %245 = vperm.xlu0 %244, %v67
    %v246 = vpop.permute.xlu0 %245
    %249 = vset.pattern.permute.xlu0 0
    %250 = vperm.xlu0 %249, %v68
    %v251 = vpop.permute.xlu0 %250
    %254 = vset.pattern.permute.xlu0 0
    %255 = vperm.xlu0 %254, %v69
    %v256 = vpop.permute.xlu0 %255
    %259 = vset.pattern.permute.xlu0 0
    %260 = vperm.xlu0 %259, %v70
    %v261 = vpop.permute.xlu0 %260
    %264 = vset.pattern.permute.xlu0 0
    %265 = vperm.xlu0 %264, %v71
    %v266 = vpop.permute.xlu0 %265
    %269 = vset.pattern.permute.xlu0 0
    %270 = vperm.xlu0 %269, %v72
    %v271 = vpop.permute.xlu0 %270
    %274 = vset.pattern.permute.xlu0 0
    %275 = vperm.xlu0 %274, %v73
    %v276 = vpop.permute.xlu0 %275
    %279 = vset.pattern.permute.xlu0 0
    %280 = vperm.xlu0 %279, %v74
    %v281 = vpop.permute.xlu0 %280
    %284 = vset.pattern.permute.xlu0 0
    %285 = vperm.xlu0 %284, %v75
    %v286 = vpop.permute.xlu0 %285
    %289 = vset.pattern.permute.xlu0 0
    %290 = vperm.xlu0 %289, %v76
    %v291 = vpop.permute.xlu0 %290
    %294 = vset.pattern.permute.xlu0 0
    %295 = vperm.xlu0 %294, %v77
    %v296 = vpop.permute.xlu0 %295
    %299 = vset.pattern.permute.xlu0 0
    %300 = vperm.xlu0 %299, %v78
    %v301 = vpop.permute.xlu0 %300
    %304 = vset.pattern.permute.xlu0 0
    %305 = vperm.xlu0 %304, %v79
    %v306 = vpop.permute.xlu0 %305
    %309 = vset.pattern.permute.xlu0 0
    %310 = vperm.xlu0 %309, %v80
    %v311 = vpop.permute.xlu0 %310
    %v313 = vmul.f32 %v209, %v236
    %v314 = vmul.f32 %v210, %v241
    %v315 = vmul.f32 %v211, %v246
    %v316 = vmul.f32 %v212, %v251
    %v317 = vmul.f32 %v213, %v256
    %v318 = vmul.f32 %v214, %v261
    %v319 = vmul.f32 %v215, %v266
    %v320 = vmul.f32 %v216, %v271
    %v321 = vmul.f32 %v217, %v276
    %v322 = vmul.f32 %v218, %v281
    %v323 = vmul.f32 %v219, %v286
    %v324 = vmul.f32 %v220, %v291
    %v325 = vmul.f32 %v221, %v296
    %v326 = vmul.f32 %v222, %v301
    %v327 = vmul.f32 %v223, %v306
    %v328 = vmul.f32 %v224, %v311
    %v329 = vpack.c.bf16 %v314, %v313
    %v330 = vpack.c.bf16 %v316, %v315
    %v331 = vpack.c.bf16 %v318, %v317
    %v332 = vpack.c.bf16 %v320, %v319
    %v333 = vpack.c.bf16 %v322, %v321
    %v334 = vpack.c.bf16 %v324, %v323
    %v335 = vpack.c.bf16 %v326, %v325
    %v336 = vpack.c.bf16 %v328, %v327
    %v337 = vld [vmem:[%s6] sm:$0xf]
    %v338 = vld [vmem:[%s6 + $0x4] sm:$0xf]
    %v339 = vld [vmem:[%s6 + $0x8] sm:$0xf]
    %v343 = vunpack.c.l.b16 %v337
    %v344 = vunpack.c.l.b16 %v338
    %v345 = vunpack.c.l.b16 %v339
    %v346 = vpack.c.b16 %v344, %v343
    %v347 = vpack.c.b16 %v345, %v345
    %350 = vmatprep.subr.bf16.mxu0 0
    %351 = vmatpush1.bf16.msra.mxu0 %v336
    %352 = vmatprep.subr.bf16.mxu0 0
    %353 = vmatpush1.bf16.msra.mxu0 %v335
    %354 = vmatprep.subr.bf16.mxu0 0
    %355 = vmatpush1.bf16.msra.mxu0 %v334
    %356 = vmatprep.subr.bf16.mxu0 0
    %357 = vmatpush1.bf16.msra.mxu0 %v333
    %358 = vmatprep.subr.bf16.mxu0 0
    %359 = vmatpush1.bf16.msra.mxu0 %v332
    %360 = vmatprep.subr.bf16.mxu0 0
    %361 = vmatpush1.bf16.msra.mxu0 %v331
    %362 = vmatprep.subr.bf16.mxu0 0
    %363 = vmatpush1.bf16.msra.mxu0 %v330
    %364 = vmatprep.subr.bf16.mxu0 0
    %365 = vmatpush1.bf16.msra.mxu0 %v329
    %366 = vmatprep.subr.bf16.mxu0 0
    %367 = vmatpush2.bf16.msra.mxu0 0
    %368 = vmatprep.subr.bf16.mxu0 0
    %369 = vmatpush2.bf16.msra.mxu0 0
    %370 = vmatprep.subr.bf16.mxu0 0
    %371 = vmatpush2.bf16.msra.mxu0 0
    %372 = vmatprep.subr.bf16.mxu0 0
    %373 = vmatpush2.bf16.msra.mxu0 0
    %374 = vmatprep.subr.bf16.mxu0 0
    %375 = vmatpush2.bf16.msra.mxu0 0
    %376 = vmatprep.subr.bf16.mxu0 0
    %377 = vmatpush2.bf16.msra.mxu0 0
    %378 = vmatprep.subr.bf16.mxu0 0
    %379 = vmatpush2.bf16.msra.mxu0 0
    %380 = vmatprep.subr.bf16.mxu0 0
    %381 = vmatpush2.bf16.msra.mxu0 0
    %382 = vmatprep.mubr.bf16.mxu0 0
    %383 = vmatmul.mubr.bf16.gmra.mxu0 %v346
    %v384 = vpop.f32.mrf.mxu0
    %v385 = vadd.f32 0.0, %v384
    %v386 = vpop.f32.mrf.mxu0
    %v387 = vpop.f32.mrf.mxu0
    %v388 = vadd.f32 0.0, %v387
    %v389 = vpop.f32.mrf.mxu0
    %390 = vmatprep.mubr.bf16.mxu0 0
    %391 = vmatmul.mubr.bf16.gmra.mxu0 %v347
    %v392 = vpop.f32.mrf.mxu0
    %v393 = vadd.f32 0.0, %v392
    %v394 = vpop.f32.mrf.mxu0
    %v395 = vpop.f32.mrf.mxu0
    %v396 = vpop.f32.mrf.mxu0
    %397 = vdwg.mxu0
    %v398 = vpack.c.bf16 %v66, %v65
    %v399 = vpack.c.bf16 %v68, %v67
    %v400 = vpack.c.bf16 %v70, %v69
    %v401 = vpack.c.bf16 %v72, %v71
    %v402 = vpack.c.bf16 %v74, %v73
    %v403 = vpack.c.bf16 %v76, %v75
    %v404 = vpack.c.bf16 %v78, %v77
    %v405 = vpack.c.bf16 %v80, %v79
    %406 = vmatprep.subr.bf16.mxu0 0
    %407 = vmatpush1.bf16.msra.mxu0 %v405
    %408 = vmatprep.subr.bf16.mxu0 0
    %409 = vmatpush1.bf16.msra.mxu0 %v404
    %410 = vmatprep.subr.bf16.mxu0 0
    %411 = vmatpush1.bf16.msra.mxu0 %v403
    %412 = vmatprep.subr.bf16.mxu0 0
    %413 = vmatpush1.bf16.msra.mxu0 %v402
    %414 = vmatprep.subr.bf16.mxu0 0
    %415 = vmatpush1.bf16.msra.mxu0 %v401
    %416 = vmatprep.subr.bf16.mxu0 0
    %417 = vmatpush1.bf16.msra.mxu0 %v400
    %418 = vmatprep.subr.bf16.mxu0 0
    %419 = vmatpush1.bf16.msra.mxu0 %v399
    %420 = vmatprep.subr.bf16.mxu0 0
    %421 = vmatpush1.bf16.msra.mxu0 %v398
    %422 = vmatprep.subr.bf16.mxu0 0
    %423 = vmatpush2.bf16.msra.mxu0 0
    %424 = vmatprep.subr.bf16.mxu0 0
    %425 = vmatpush2.bf16.msra.mxu0 0
    %426 = vmatprep.subr.bf16.mxu0 0
    %427 = vmatpush2.bf16.msra.mxu0 0
    %428 = vmatprep.subr.bf16.mxu0 0
    %429 = vmatpush2.bf16.msra.mxu0 0
    %430 = vmatprep.subr.bf16.mxu0 0
    %431 = vmatpush2.bf16.msra.mxu0 0
    %432 = vmatprep.subr.bf16.mxu0 0
    %433 = vmatpush2.bf16.msra.mxu0 0
    %434 = vmatprep.subr.bf16.mxu0 0
    %435 = vmatpush2.bf16.msra.mxu0 0
    %436 = vmatprep.subr.bf16.mxu0 0
    %437 = vmatpush2.bf16.msra.mxu0 0
    %438 = vmatprep.mubr.bf16.mxu0 0
    %439 = vmatmul.mubr.bf16.gmra.mxu0 %v346
    %v440 = vpop.f32.mrf.mxu0
    %v441 = vadd.f32 1.0, %v440
    %v442 = vpop.f32.mrf.mxu0
    %v443 = vpop.f32.mrf.mxu0
    %v444 = vadd.f32 1.0, %v443
    %v445 = vpop.f32.mrf.mxu0
    %446 = vmatprep.mubr.bf16.mxu0 0
    %447 = vmatmul.mubr.bf16.gmra.mxu0 %v347
    %v448 = vpop.f32.mrf.mxu0
    %v449 = vadd.f32 1.0, %v448
    %v450 = vpop.f32.mrf.mxu0
    %v451 = vpop.f32.mrf.mxu0
    %v452 = vpop.f32.mrf.mxu0
    %453 = vdwg.mxu0
    %v454 = vrcp.pop %v441
    %v455 = vrcp.pop %v444
    %v456 = vrcp.pop %v449
    %458 = vset.pattern.permute.xlu0 0
    %459 = vperm.xlu0 %458, %v454
    %v460 = vpop.permute.xlu0 %459
    %463 = vset.pattern.permute.xlu0 0
    %464 = vperm.xlu0 %463, %v455
    %v465 = vpop.permute.xlu0 %464
    %468 = vset.pattern.permute.xlu0 0
    %469 = vperm.xlu0 %468, %v456
    %v470 = vpop.permute.xlu0 %469
    %v472 = vmul.f32 %v385, %v460
    %v473 = vmul.f32 %v388, %v465
    %v474 = vmul.f32 %v393, %v470
    %v475 = vpack.c.bf16 %v473, %v472
    %v476 = vpack.c.bf16 %v474, %v474
    %v477 = vld [vmem:[%s7] sm:$0xf]
    %v478 = vld [vmem:[%s7 + $0x4] sm:$0xf]
    %v479 = vld [vmem:[%s7 + $0x8] sm:$0xf]
    %v480 = vld [vmem:[%s7 + $0xc] sm:$0xf]
    %v485 = vunpack.c.l.b16 %v477
    %v486 = vunpack.c.l.b16 %v478
    %v487 = vunpack.c.l.b16 %v479
    %v488 = vunpack.c.l.b16 %v480
    %v489 = vpack.c.b16 %v486, %v485
    %v490 = vpack.c.b16 %v488, %v487
    %vm493 = vcmask 261120
    %v495 = vsel %vm493, %v475, 0
    %v498 = vsel %vm493, %v476, 0
    %500 = vmatprep.subr.bf16.mxu0 0
    %501 = vmatpush1.bf16.msra.mxu0 0
    %502 = vmatprep.subr.bf16.mxu0 0
    %503 = vmatpush1.bf16.msra.mxu0 0
    %504 = vmatprep.subr.bf16.mxu0 0
    %505 = vmatpush1.bf16.msra.mxu0 0
    %506 = vmatprep.subr.bf16.mxu0 0
    %507 = vmatpush1.bf16.msra.mxu0 0
    %508 = vmatprep.subr.bf16.mxu0 0
    %509 = vmatpush1.bf16.msra.mxu0 0
    %510 = vmatprep.subr.bf16.mxu0 0
    %511 = vmatpush1.bf16.msra.mxu0 0
    %512 = vmatprep.subr.bf16.mxu0 0
    %513 = vmatpush1.bf16.msra.mxu0 %v490
    %514 = vmatprep.subr.bf16.mxu0 0
    %515 = vmatpush1.bf16.msra.mxu0 %v489
    %516 = vmatprep.subr.bf16.mxu0 0
    %517 = vmatpush2.bf16.msra.mxu0 0
    %518 = vmatprep.subr.bf16.mxu0 0
    %519 = vmatpush2.bf16.msra.mxu0 0
    %520 = vmatprep.subr.bf16.mxu0 0
    %521 = vmatpush2.bf16.msra.mxu0 0
    %522 = vmatprep.subr.bf16.mxu0 0
    %523 = vmatpush2.bf16.msra.mxu0 0
    %524 = vmatprep.subr.bf16.mxu0 0
    %525 = vmatpush2.bf16.msra.mxu0 0
    %526 = vmatprep.subr.bf16.mxu0 0
    %527 = vmatpush2.bf16.msra.mxu0 0
    %528 = vmatprep.subr.bf16.mxu0 0
    %529 = vmatpush2.bf16.msra.mxu0 0
    %530 = vmatprep.subr.bf16.mxu0 0
    %531 = vmatpush2.bf16.msra.mxu0 0
    %532 = vmatprep.mubr.bf16.mxu0 0
    %533 = vmatmul.mubr.bf16.gmra.mxu0 %v495
    %v534 = vpop.f32.mrf.mxu0
    %v535 = vadd.f32 0.0, %v534
    %v536 = vpop.f32.mrf.mxu0
    %v537 = vpop.f32.mrf.mxu0
    %v538 = vadd.f32 0.0, %v537
    %v539 = vpop.f32.mrf.mxu0
    %540 = vmatprep.mubr.bf16.mxu0 0
    %541 = vmatmul.mubr.bf16.gmra.mxu0 %v498
    %v542 = vpop.f32.mrf.mxu0
    %v543 = vadd.f32 0.0, %v542
    %v544 = vpop.f32.mrf.mxu0
    %v545 = vpop.f32.mrf.mxu0
    %v546 = vpop.f32.mrf.mxu0
    %547 = vdwg.mxu0
    %v548 = vld [vmem:[%s5] sm:$0xf]
    %v549 = vld [vmem:[%s5 + $0x4] sm:$0xf]
    %v550 = vld [vmem:[%s5 + $0x8] sm:$0xf]
    %v551 = vld [vmem:[%s5 + $0xc] sm:$0xf]
    %v552 = vld [vmem:[%s5 + $0x10] sm:$0xf]
    %v553 = vld [vmem:[%s5 + $0x14] sm:$0xf]
    %v554 = vld [vmem:[%s5 + $0x18] sm:$0xf]
    %v555 = vld [vmem:[%s5 + $0x1c] sm:$0xf]
    %v556 = vld [vmem:[%s5 + $0x20] sm:$0xf]
    %v557 = vld [vmem:[%s5 + $0x24] sm:$0xf]
    %v558 = vld [vmem:[%s5 + $0x28] sm:$0xf]
    %v559 = vld [vmem:[%s5 + $0x2c] sm:$0xf]
    %v560 = vld [vmem:[%s5 + $0x30] sm:$0xf]
    %v561 = vld [vmem:[%s5 + $0x34] sm:$0xf]
    %v562 = vld [vmem:[%s5 + $0x38] sm:$0xf]
    %v563 = vld [vmem:[%s5 + $0x3c] sm:$0xf]
    %v564 = vpack.c.bf16 %v538, %v535
    %v565 = vpack.c.bf16 %v543, %v543
    %v582 = vunpack.c.l.b16 %v548
    %v583 = vunpack.c.l.b16 %v549
    %v584 = vunpack.c.l.b16 %v550
    %v585 = vunpack.c.l.b16 %v551
    %v586 = vunpack.c.l.b16 %v552
    %v587 = vunpack.c.l.b16 %v553
    %v588 = vunpack.c.l.b16 %v554
    %v589 = vunpack.c.l.b16 %v555
    %v590 = vunpack.c.l.b16 %v556
    %v591 = vunpack.c.l.b16 %v557
    %v592 = vunpack.c.l.b16 %v558
    %v593 = vunpack.c.l.b16 %v559
    %v594 = vunpack.c.l.b16 %v560
    %v595 = vunpack.c.l.b16 %v561
    %v596 = vunpack.c.l.b16 %v562
    %v597 = vunpack.c.l.b16 %v563
    %v598 = vpack.c.b16 %v583, %v582
    %v599 = vpack.c.b16 %v585, %v584
    %v600 = vpack.c.b16 %v587, %v586
    %v601 = vpack.c.b16 %v589, %v588
    %v602 = vpack.c.b16 %v591, %v590
    %v603 = vpack.c.b16 %v593, %v592
    %v604 = vpack.c.b16 %v595, %v594
    %v605 = vpack.c.b16 %v597, %v596
    %vm606 = vcmask 195584
    %v608 = vsel %vm606, %v598, 0
    %v611 = vsel %vm606, %v599, 0
    %v614 = vsel %vm606, %v600, 0
    %v617 = vsel %vm606, %v601, 0
    %v620 = vsel %vm606, %v602, 0
    %v623 = vsel %vm606, %v603, 0
    %v626 = vsel %vm606, %v604, 0
    %v629 = vsel %vm606, %v605, 0
    %vm631 = vcmask 1043456
    %v633 = vsel %vm631, %v565, 0
    %635 = vmatprep.subr.bf16.mxu0 0
    %636 = vmatpush1.bf16.msra.mxu0 0
    %637 = vmatprep.subr.bf16.mxu0 0
    %638 = vmatpush1.bf16.msra.mxu0 0
    %639 = vmatprep.subr.bf16.mxu0 0
    %640 = vmatpush1.bf16.msra.mxu0 0
    %641 = vmatprep.subr.bf16.mxu0 0
    %642 = vmatpush1.bf16.msra.mxu0 0
    %643 = vmatprep.subr.bf16.mxu0 0
    %644 = vmatpush1.bf16.msra.mxu0 0
    %645 = vmatprep.subr.bf16.mxu0 0
    %646 = vmatpush1.bf16.msra.mxu0 0
    %647 = vmatprep.subr.bf16.mxu0 0
    %648 = vmatpush1.bf16.msra.mxu0 %v633
    %649 = vmatprep.subr.bf16.mxu0 0
    %650 = vmatpush1.bf16.msra.mxu0 %v564
    %651 = vmatprep.subr.bf16.mxu0 0
    %652 = vmatpush2.bf16.msra.mxu0 0
    %653 = vmatprep.subr.bf16.mxu0 0
    %654 = vmatpush2.bf16.msra.mxu0 0
    %655 = vmatprep.subr.bf16.mxu0 0
    %656 = vmatpush2.bf16.msra.mxu0 0
    %657 = vmatprep.subr.bf16.mxu0 0
    %658 = vmatpush2.bf16.msra.mxu0 0
    %659 = vmatprep.subr.bf16.mxu0 0
    %660 = vmatpush2.bf16.msra.mxu0 0
    %661 = vmatprep.subr.bf16.mxu0 0
    %662 = vmatpush2.bf16.msra.mxu0 0
    %663 = vmatprep.subr.bf16.mxu0 0
    %664 = vmatpush2.bf16.msra.mxu0 0
    %665 = vmatprep.subr.bf16.mxu0 0
    %666 = vmatpush2.bf16.msra.mxu0 0
    %667 = vmatprep.mubr.bf16.mxu0 0
    %668 = vmatmul.mubr.bf16.gmra.mxu0 %v608
    %v669 = vpop.f32.mrf.mxu0
    %v670 = vadd.f32 0.0, %v669
    %v671 = vpop.f32.mrf.mxu0
    %v672 = vpop.f32.mrf.mxu0
    %v673 = vadd.f32 0.0, %v672
    %v674 = vpop.f32.mrf.mxu0
    %675 = vmatprep.mubr.bf16.mxu0 0
    %676 = vmatmul.mubr.bf16.gmra.mxu0 %v611
    %v677 = vpop.f32.mrf.mxu0
    %v678 = vadd.f32 0.0, %v677
    %v679 = vpop.f32.mrf.mxu0
    %v680 = vpop.f32.mrf.mxu0
    %v681 = vadd.f32 0.0, %v680
    %v682 = vpop.f32.mrf.mxu0
    %683 = vmatprep.mubr.bf16.mxu0 0
    %684 = vmatmul.mubr.bf16.gmra.mxu0 %v614
    %v685 = vpop.f32.mrf.mxu0
    %v686 = vadd.f32 0.0, %v685
    %v687 = vpop.f32.mrf.mxu0
    %v688 = vpop.f32.mrf.mxu0
    %v689 = vadd.f32 0.0, %v688
    %v690 = vpop.f32.mrf.mxu0
    %691 = vmatprep.mubr.bf16.mxu0 0
    %692 = vmatmul.mubr.bf16.gmra.mxu0 %v617
    %v693 = vpop.f32.mrf.mxu0
    %v694 = vadd.f32 0.0, %v693
    %v695 = vpop.f32.mrf.mxu0
    %v696 = vpop.f32.mrf.mxu0
    %v697 = vadd.f32 0.0, %v696
    %v698 = vpop.f32.mrf.mxu0
    %699 = vmatprep.mubr.bf16.mxu0 0
    %700 = vmatmul.mubr.bf16.gmra.mxu0 %v620
    %v701 = vpop.f32.mrf.mxu0
    %v702 = vadd.f32 0.0, %v701
    %v703 = vpop.f32.mrf.mxu0
    %v704 = vpop.f32.mrf.mxu0
    %v705 = vadd.f32 0.0, %v704
    %v706 = vpop.f32.mrf.mxu0
    %707 = vmatprep.mubr.bf16.mxu0 0
    %708 = vmatmul.mubr.bf16.gmra.mxu0 %v623
    %v709 = vpop.f32.mrf.mxu0
    %v710 = vadd.f32 0.0, %v709
    %v711 = vpop.f32.mrf.mxu0
    %v712 = vpop.f32.mrf.mxu0
    %v713 = vadd.f32 0.0, %v712
    %v714 = vpop.f32.mrf.mxu0
    %715 = vmatprep.mubr.bf16.mxu0 0
    %716 = vmatmul.mubr.bf16.gmra.mxu0 %v626
    %v717 = vpop.f32.mrf.mxu0
    %v718 = vadd.f32 0.0, %v717
    %v719 = vpop.f32.mrf.mxu0
    %v720 = vpop.f32.mrf.mxu0
    %v721 = vadd.f32 0.0, %v720
    %v722 = vpop.f32.mrf.mxu0
    %723 = vmatprep.mubr.bf16.mxu0 0
    %724 = vmatmul.mubr.bf16.gmra.mxu0 %v629
    %v725 = vpop.f32.mrf.mxu0
    %v726 = vadd.f32 0.0, %v725
    %v727 = vpop.f32.mrf.mxu0
    %v728 = vpop.f32.mrf.mxu0
    %v729 = vadd.f32 0.0, %v728
    %v730 = vpop.f32.mrf.mxu0
    %731 = vdwg.mxu0
    %v732 = vld [vmem:[%s3] sm:$0xff]
    %v733 = vld [vmem:[%s3 + $0x8] sm:$0xff]
    %v734 = vld [vmem:[%s3 + $0x10] sm:$0xff]
    %v735 = vld [vmem:[%s3 + $0x18] sm:$0xff]
    %v736 = vld [vmem:[%s3 + $0x20] sm:$0xff]
    %v737 = vld [vmem:[%s3 + $0x28] sm:$0xff]
    %v738 = vld [vmem:[%s3 + $0x30] sm:$0xff]
    %v739 = vld [vmem:[%s3 + $0x38] sm:$0xff]
    %v740 = vpack.c.bf16 %v673, %v670
    %v741 = vpack.c.bf16 %v681, %v678
    %v742 = vpack.c.bf16 %v689, %v686
    %v743 = vpack.c.bf16 %v697, %v694
    %748 = vrot.lane.b32.xlu0 %v740, 96
    %v749 = vpop.permute.xlu0 %748
    %750 = vrot.lane.b32.xlu0 %v741, 96
    %v751 = vpop.permute.xlu0 %750
    %752 = vrot.lane.b32.xlu0 %v742, 96
    %v753 = vpop.permute.xlu0 %752
    %754 = vrot.lane.b32.xlu0 %v743, 96
    %v755 = vpop.permute.xlu0 %754
    %vm756 = vcmask 64512
    %v758 = vsel %vm756, %v740, 0
    %v761 = vsel %vm756, %v741, 0
    %v764 = vsel %vm756, %v742, 0
    %v767 = vsel %vm756, %v743, 0
    %v770 = vsel %vm756, %v749, 0
    %v773 = vsel %vm756, %v751, 0
    %v776 = vsel %vm756, %v753, 0
    %v779 = vsel %vm756, %v755, 0
    %781 = vmatprep.subr.bf16.mxu0 0
    %782 = vmatpush1.bf16.xpose.msra.mxu0 0
    %783 = vmatprep.subr.bf16.mxu0 0
    %784 = vmatpush1.bf16.xpose.msra.mxu0 0
    %785 = vmatprep.subr.bf16.mxu0 0
    %786 = vmatpush1.bf16.xpose.msra.mxu0 0
    %787 = vmatprep.subr.bf16.mxu0 0
    %788 = vmatpush1.bf16.xpose.msra.mxu0 0
    %789 = vmatprep.subr.bf16.mxu0 0
    %790 = vmatpush1.bf16.xpose.msra.mxu0 %v779
    %791 = vmatprep.subr.bf16.mxu0 0
    %792 = vmatpush1.bf16.xpose.msra.mxu0 %v776
    %793 = vmatprep.subr.bf16.mxu0 0
    %794 = vmatpush1.bf16.xpose.msra.mxu0 %v773
    %795 = vmatprep.subr.bf16.mxu0 0
    %796 = vmatpush1.bf16.xpose.msra.mxu0 %v770
    %797 = vmatprep.subr.bf16.mxu0 0
    %798 = vmatpush2.bf16.xpose.msra.mxu0 0
    %799 = vmatprep.subr.bf16.mxu0 0
    %800 = vmatpush2.bf16.xpose.msra.mxu0 0
    %801 = vmatprep.subr.bf16.mxu0 0
    %802 = vmatpush2.bf16.xpose.msra.mxu0 0
    %803 = vmatprep.subr.bf16.mxu0 0
    %804 = vmatpush2.bf16.xpose.msra.mxu0 0
    %805 = vmatprep.subr.bf16.mxu0 0
    %806 = vmatpush2.bf16.xpose.msra.mxu0 0
    %807 = vmatprep.subr.bf16.mxu0 0
    %808 = vmatpush2.bf16.xpose.msra.mxu0 0
    %809 = vmatprep.subr.bf16.mxu0 0
    %810 = vmatpush2.bf16.xpose.msra.mxu0 0
    %811 = vmatprep.subr.bf16.mxu0 0
    %812 = vmatpush2.bf16.xpose.msra.mxu0 0
    %813 = vmatprep.mubr.bf16.mxu0 0
    %814 = vmatmul.mubr.bf16.gmra.mxu0 %v758
    %v815 = vpop.f32.mrf.mxu0
    %v816 = vadd.f32 %v732, %v815
    %v817 = vpop.f32.mrf.mxu0
    %v818 = vpop.f32.mrf.mxu0
    %v819 = vadd.f32 %v733, %v818
    %v820 = vpop.f32.mrf.mxu0
    %821 = vmatprep.mubr.bf16.mxu0 0
    %822 = vmatmul.mubr.bf16.gmra.mxu0 %v761
    %v823 = vpop.f32.mrf.mxu0
    %v824 = vadd.f32 %v734, %v823
    %v825 = vpop.f32.mrf.mxu0
    %v826 = vpop.f32.mrf.mxu0
    %v827 = vadd.f32 %v735, %v826
    %v828 = vpop.f32.mrf.mxu0
    %829 = vmatprep.mubr.bf16.mxu0 0
    %830 = vmatmul.mubr.bf16.gmra.mxu0 %v764
    %v831 = vpop.f32.mrf.mxu0
    %v832 = vadd.f32 %v736, %v831
    %v833 = vpop.f32.mrf.mxu0
    %v834 = vpop.f32.mrf.mxu0
    %v835 = vadd.f32 %v737, %v834
    %v836 = vpop.f32.mrf.mxu0
    %837 = vmatprep.mubr.bf16.mxu0 0
    %838 = vmatmul.mubr.bf16.gmra.mxu0 %v767
    %v839 = vpop.f32.mrf.mxu0
    %v840 = vadd.f32 %v738, %v839
    %v841 = vpop.f32.mrf.mxu0
    %v842 = vpop.f32.mrf.mxu0
    %v843 = vadd.f32 %v739, %v842
    %v844 = vpop.f32.mrf.mxu0
    %845 = vdwg.mxu0
    %vm846 = vcmask 523264
    %v847 = vsel %vm846, %v816, -inf
    %848 = vmax.xlane.f32.xlu0 %v847
    %v849 = vpop.xlane.xlu0 %848
    %v850 = vsel %vm846, %v819, -inf
    %851 = vmax.xlane.f32.xlu0 %v850
    %v852 = vpop.xlane.xlu0 %851
    %v853 = vsel %vm846, %v824, -inf
    %854 = vmax.xlane.f32.xlu0 %v853
    %v855 = vpop.xlane.xlu0 %854
    %v856 = vsel %vm846, %v827, -inf
    %857 = vmax.xlane.f32.xlu0 %v856
    %v858 = vpop.xlane.xlu0 %857
    %v859 = vsel %vm846, %v832, -inf
    %860 = vmax.xlane.f32.xlu0 %v859
    %v861 = vpop.xlane.xlu0 %860
    %v862 = vsel %vm846, %v835, -inf
    %863 = vmax.xlane.f32.xlu0 %v862
    %v864 = vpop.xlane.xlu0 %863
    %v865 = vsel %vm846, %v840, -inf
    %866 = vmax.xlane.f32.xlu0 %v865
    %v867 = vpop.xlane.xlu0 %866
    %v868 = vsel %vm846, %v843, -inf
    %869 = vmax.xlane.f32.xlu0 %v868
    %v870 = vpop.xlane.xlu0 %869
    %v871 = vsub.f32 %v816, %v849
    %v872 = vsub.f32 %v819, %v852
    %v873 = vsub.f32 %v824, %v855
    %v874 = vsub.f32 %v827, %v858
    %v875 = vsub.f32 %v832, %v861
    %v876 = vsub.f32 %v835, %v864
    %v877 = vsub.f32 %v840, %v867
    %v878 = vsub.f32 %v843, %v870
    %v879 = vmul.f32 %v871, 1.442695
    %v880 = vpow.pop %v879
    %v881 = vmul.f32 %v872, 1.442695
    %v882 = vpow.pop %v881
    %v883 = vmul.f32 %v873, 1.442695
    %v884 = vpow.pop %v883
    %v885 = vmul.f32 %v874, 1.442695
    %v886 = vpow.pop %v885
    %v887 = vmul.f32 %v875, 1.442695
    %v888 = vpow.pop %v887
    %v889 = vmul.f32 %v876, 1.442695
    %v890 = vpow.pop %v889
    %v891 = vmul.f32 %v877, 1.442695
    %v892 = vpow.pop %v891
    %v893 = vmul.f32 %v878, 1.442695
    %v894 = vpow.pop %v893
    %v895 = vsel %vm846, %v880, 0.0
    %896 = vadd.xlane.f32.xlu0 %v895
    %v897 = vpop.xlane.xlu0 %896
    %v898 = vsel %vm846, %v882, 0.0
    %899 = vadd.xlane.f32.xlu0 %v898
    %v900 = vpop.xlane.xlu0 %899
    %v901 = vsel %vm846, %v884, 0.0
    %902 = vadd.xlane.f32.xlu0 %v901
    %v903 = vpop.xlane.xlu0 %902
    %v904 = vsel %vm846, %v886, 0.0
    %905 = vadd.xlane.f32.xlu0 %v904
    %v906 = vpop.xlane.xlu0 %905
    %v907 = vsel %vm846, %v888, 0.0
    %908 = vadd.xlane.f32.xlu0 %v907
    %v909 = vpop.xlane.xlu0 %908
    %v910 = vsel %vm846, %v890, 0.0
    %911 = vadd.xlane.f32.xlu0 %v910
    %v912 = vpop.xlane.xlu0 %911
    %v913 = vsel %vm846, %v892, 0.0
    %914 = vadd.xlane.f32.xlu0 %v913
    %v915 = vpop.xlane.xlu0 %914
    %v916 = vsel %vm846, %v894, 0.0
    %917 = vadd.xlane.f32.xlu0 %v916
    %v918 = vpop.xlane.xlu0 %917
    %v919 = vpack.c.bf16 %v882, %v880
    %v920 = vpack.c.bf16 %v886, %v884
    %v921 = vpack.c.bf16 %v890, %v888
    %v922 = vpack.c.bf16 %v894, %v892
    %v924 = vsel %vm846, %v919, 0
    %v927 = vsel %vm846, %v920, 0
    %v930 = vsel %vm846, %v921, 0
    %v933 = vsel %vm846, %v922, 0
    %935 = vmatprep.subr.bf16.mxu0 0
    %936 = vmatpush1.bf16.msra.mxu0 0
    %937 = vmatprep.subr.bf16.mxu0 0
    %938 = vmatpush1.bf16.msra.mxu0 0
    %939 = vmatprep.subr.bf16.mxu0 0
    %940 = vmatpush1.bf16.msra.mxu0 0
    %941 = vmatprep.subr.bf16.mxu0 0
    %942 = vmatpush1.bf16.msra.mxu0 0
    %943 = vmatprep.subr.bf16.mxu0 0
    %944 = vmatpush1.bf16.msra.mxu0 %v228
    %945 = vmatprep.subr.bf16.mxu0 0
    %946 = vmatpush1.bf16.msra.mxu0 %v227
    %947 = vmatprep.subr.bf16.mxu0 0
    %948 = vmatpush1.bf16.msra.mxu0 %v226
    %949 = vmatprep.subr.bf16.mxu0 0
    %950 = vmatpush1.bf16.msra.mxu0 %v225
    %951 = vmatprep.subr.bf16.mxu0 0
    %952 = vmatpush2.bf16.msra.mxu0 0
    %953 = vmatprep.subr.bf16.mxu0 0
    %954 = vmatpush2.bf16.msra.mxu0 0
    %955 = vmatprep.subr.bf16.mxu0 0
    %956 = vmatpush2.bf16.msra.mxu0 0
    %957 = vmatprep.subr.bf16.mxu0 0
    %958 = vmatpush2.bf16.msra.mxu0 0
    %959 = vmatprep.subr.bf16.mxu0 0
    %960 = vmatpush2.bf16.msra.mxu0 0
    %961 = vmatprep.subr.bf16.mxu0 0
    %962 = vmatpush2.bf16.msra.mxu0 0
    %963 = vmatprep.subr.bf16.mxu0 0
    %964 = vmatpush2.bf16.msra.mxu0 0
    %965 = vmatprep.subr.bf16.mxu0 0
    %966 = vmatpush2.bf16.msra.mxu0 0
    %967 = vmatprep.mubr.bf16.mxu0 0
    %968 = vmatmul.mubr.bf16.gmra.mxu0 %v924
    %v969 = vpop.f32.mrf.mxu0
    %v970 = vadd.f32 0.0, %v969
    %v971 = vpop.f32.mrf.mxu0
    %v972 = vpop.f32.mrf.mxu0
    %v973 = vadd.f32 0.0, %v972
    %v974 = vpop.f32.mrf.mxu0
    %975 = vmatprep.mubr.bf16.mxu0 0
    %976 = vmatmul.mubr.bf16.gmra.mxu0 %v927
    %v977 = vpop.f32.mrf.mxu0
    %v978 = vadd.f32 0.0, %v977
    %v979 = vpop.f32.mrf.mxu0
    %v980 = vpop.f32.mrf.mxu0
    %v981 = vadd.f32 0.0, %v980
    %v982 = vpop.f32.mrf.mxu0
    %983 = vmatprep.mubr.bf16.mxu0 0
    %984 = vmatmul.mubr.bf16.gmra.mxu0 %v930
    %v985 = vpop.f32.mrf.mxu0
    %v986 = vadd.f32 0.0, %v985
    %v987 = vpop.f32.mrf.mxu0
    %v988 = vpop.f32.mrf.mxu0
    %v989 = vadd.f32 0.0, %v988
    %v990 = vpop.f32.mrf.mxu0
    %991 = vmatprep.mubr.bf16.mxu0 0
    %992 = vmatmul.mubr.bf16.gmra.mxu0 %v933
    %v993 = vpop.f32.mrf.mxu0
    %v994 = vadd.f32 0.0, %v993
    %v995 = vpop.f32.mrf.mxu0
    %v996 = vpop.f32.mrf.mxu0
    %v997 = vadd.f32 0.0, %v996
    %v998 = vpop.f32.mrf.mxu0
    %999 = vdwg.mxu0
    %v1000 = vrcp.pop %v897
    %v1001 = vrcp.pop %v900
    %v1002 = vrcp.pop %v903
    %v1003 = vrcp.pop %v906
    %v1004 = vrcp.pop %v909
    %v1005 = vrcp.pop %v912
    %v1006 = vrcp.pop %v915
    %v1007 = vrcp.pop %v918
    %v1008 = vmul.f32 %v970, %v1000
    %v1009 = vmul.f32 %v973, %v1001
    %v1010 = vmul.f32 %v978, %v1002
    %v1011 = vmul.f32 %v981, %v1003
    %v1012 = vmul.f32 %v986, %v1004
    %v1013 = vmul.f32 %v989, %v1005
    %v1014 = vmul.f32 %v994, %v1006
    %v1015 = vmul.f32 %v997, %v1007
    %1016 = vrot.lane.b32.xlu0 %v740, 120
    %v1017 = vpop.permute.xlu0 %1016
    %1018 = vrot.lane.b32.xlu0 %v741, 120
    %v1019 = vpop.permute.xlu0 %1018
    %1020 = vrot.lane.b32.xlu0 %v742, 120
    %v1021 = vpop.permute.xlu0 %1020
    %1022 = vrot.lane.b32.xlu0 %v743, 120
    %v1023 = vpop.permute.xlu0 %1022
    %1024 = vrot.lane.b32.xlu0 %v740, 88
    %v1025 = vpop.permute.xlu0 %1024
    %1026 = vrot.lane.b32.xlu0 %v741, 88
    %v1027 = vpop.permute.xlu0 %1026
    %1028 = vrot.lane.b32.xlu0 %v742, 88
    %v1029 = vpop.permute.xlu0 %1028
    %1030 = vrot.lane.b32.xlu0 %v743, 88
    %v1031 = vpop.permute.xlu0 %1030
    %v1033 = vsel %vm756, %v1017, 0
    %v1036 = vsel %vm756, %v1019, 0
    %v1039 = vsel %vm756, %v1021, 0
    %v1042 = vsel %vm756, %v1023, 0
    %v1045 = vsel %vm756, %v1025, 0
    %v1048 = vsel %vm756, %v1027, 0
    %v1051 = vsel %vm756, %v1029, 0
    %v1054 = vsel %vm756, %v1031, 0
    %1056 = vmatprep.subr.bf16.mxu0 0
    %1057 = vmatpush1.bf16.xpose.msra.mxu0 0
    %1058 = vmatprep.subr.bf16.mxu0 0
    %1059 = vmatpush1.bf16.xpose.msra.mxu0 0
    %1060 = vmatprep.subr.bf16.mxu0 0
    %1061 = vmatpush1.bf16.xpose.msra.mxu0 0
    %1062 = vmatprep.subr.bf16.mxu0 0
    %1063 = vmatpush1.bf16.xpose.msra.mxu0 0
    %1064 = vmatprep.subr.bf16.mxu0 0
    %1065 = vmatpush1.bf16.xpose.msra.mxu0 %v1054
    %1066 = vmatprep.subr.bf16.mxu0 0
    %1067 = vmatpush1.bf16.xpose.msra.mxu0 %v1051
    %1068 = vmatprep.subr.bf16.mxu0 0
    %1069 = vmatpush1.bf16.xpose.msra.mxu0 %v1048
    %1070 = vmatprep.subr.bf16.mxu0 0
    %1071 = vmatpush1.bf16.xpose.msra.mxu0 %v1045
    %1072 = vmatprep.subr.bf16.mxu0 0
    %1073 = vmatpush2.bf16.xpose.msra.mxu0 0
    %1074 = vmatprep.subr.bf16.mxu0 0
    %1075 = vmatpush2.bf16.xpose.msra.mxu0 0
    %1076 = vmatprep.subr.bf16.mxu0 0
    %1077 = vmatpush2.bf16.xpose.msra.mxu0 0
    %1078 = vmatprep.subr.bf16.mxu0 0
    %1079 = vmatpush2.bf16.xpose.msra.mxu0 0
    %1080 = vmatprep.subr.bf16.mxu0 0
    %1081 = vmatpush2.bf16.xpose.msra.mxu0 0
    %1082 = vmatprep.subr.bf16.mxu0 0
    %1083 = vmatpush2.bf16.xpose.msra.mxu0 0
    %1084 = vmatprep.subr.bf16.mxu0 0
    %1085 = vmatpush2.bf16.xpose.msra.mxu0 0
    %1086 = vmatprep.subr.bf16.mxu0 0
    %1087 = vmatpush2.bf16.xpose.msra.mxu0 0
    %1088 = vmatprep.mubr.bf16.mxu0 0
    %1089 = vmatmul.mubr.bf16.gmra.mxu0 %v1033
    %v1090 = vpop.f32.mrf.mxu0
    %v1091 = vadd.f32 %v732, %v1090
    %v1092 = vpop.f32.mrf.mxu0
    %v1093 = vpop.f32.mrf.mxu0
    %v1094 = vadd.f32 %v733, %v1093
    %v1095 = vpop.f32.mrf.mxu0
    %1096 = vmatprep.mubr.bf16.mxu0 0
    %1097 = vmatmul.mubr.bf16.gmra.mxu0 %v1036
    %v1098 = vpop.f32.mrf.mxu0
    %v1099 = vadd.f32 %v734, %v1098
    %v1100 = vpop.f32.mrf.mxu0
    %v1101 = vpop.f32.mrf.mxu0
    %v1102 = vadd.f32 %v735, %v1101
    %v1103 = vpop.f32.mrf.mxu0
    %1104 = vmatprep.mubr.bf16.mxu0 0
    %1105 = vmatmul.mubr.bf16.gmra.mxu0 %v1039
    %v1106 = vpop.f32.mrf.mxu0
    %v1107 = vadd.f32 %v736, %v1106
    %v1108 = vpop.f32.mrf.mxu0
    %v1109 = vpop.f32.mrf.mxu0
    %v1110 = vadd.f32 %v737, %v1109
    %v1111 = vpop.f32.mrf.mxu0
    %1112 = vmatprep.mubr.bf16.mxu0 0
    %1113 = vmatmul.mubr.bf16.gmra.mxu0 %v1042
    %v1114 = vpop.f32.mrf.mxu0
    %v1115 = vadd.f32 %v738, %v1114
    %v1116 = vpop.f32.mrf.mxu0
    %v1117 = vpop.f32.mrf.mxu0
    %v1118 = vadd.f32 %v739, %v1117
    %v1119 = vpop.f32.mrf.mxu0
    %1120 = vdwg.mxu0
    %v1121 = vsel %vm846, %v1091, -inf
    %1122 = vmax.xlane.f32.xlu0 %v1121
    %v1123 = vpop.xlane.xlu0 %1122
    %v1124 = vsel %vm846, %v1094, -inf
    %1125 = vmax.xlane.f32.xlu0 %v1124
    %v1126 = vpop.xlane.xlu0 %1125
    %v1127 = vsel %vm846, %v1099, -inf
    %1128 = vmax.xlane.f32.xlu0 %v1127
    %v1129 = vpop.xlane.xlu0 %1128
    %v1130 = vsel %vm846, %v1102, -inf
    %1131 = vmax.xlane.f32.xlu0 %v1130
    %v1132 = vpop.xlane.xlu0 %1131
    %v1133 = vsel %vm846, %v1107, -inf
    %1134 = vmax.xlane.f32.xlu0 %v1133
    %v1135 = vpop.xlane.xlu0 %1134
    %v1136 = vsel %vm846, %v1110, -inf
    %1137 = vmax.xlane.f32.xlu0 %v1136
    %v1138 = vpop.xlane.xlu0 %1137
    %v1139 = vsel %vm846, %v1115, -inf
    %1140 = vmax.xlane.f32.xlu0 %v1139
    %v1141 = vpop.xlane.xlu0 %1140
    %v1142 = vsel %vm846, %v1118, -inf
    %1143 = vmax.xlane.f32.xlu0 %v1142
    %v1144 = vpop.xlane.xlu0 %1143
    %v1145 = vsub.f32 %v1091, %v1123
    %v1146 = vsub.f32 %v1094, %v1126
    %v1147 = vsub.f32 %v1099, %v1129
    %v1148 = vsub.f32 %v1102, %v1132
    %v1149 = vsub.f32 %v1107, %v1135
    %v1150 = vsub.f32 %v1110, %v1138
    %v1151 = vsub.f32 %v1115, %v1141
    %v1152 = vsub.f32 %v1118, %v1144
    %v1153 = vmul.f32 %v1145, 1.442695
    %v1154 = vpow.pop %v1153
    %v1155 = vmul.f32 %v1146, 1.442695
    %v1156 = vpow.pop %v1155
    %v1157 = vmul.f32 %v1147, 1.442695
    %v1158 = vpow.pop %v1157
    %v1159 = vmul.f32 %v1148, 1.442695
    %v1160 = vpow.pop %v1159
    %v1161 = vmul.f32 %v1149, 1.442695
    %v1162 = vpow.pop %v1161
    %v1163 = vmul.f32 %v1150, 1.442695
    %v1164 = vpow.pop %v1163
    %v1165 = vmul.f32 %v1151, 1.442695
    %v1166 = vpow.pop %v1165
    %v1167 = vmul.f32 %v1152, 1.442695
    %v1168 = vpow.pop %v1167
    %v1169 = vsel %vm846, %v1154, 0.0
    %1170 = vadd.xlane.f32.xlu0 %v1169
    %v1171 = vpop.xlane.xlu0 %1170
    %v1172 = vsel %vm846, %v1156, 0.0
    %1173 = vadd.xlane.f32.xlu0 %v1172
    %v1174 = vpop.xlane.xlu0 %1173
    %v1175 = vsel %vm846, %v1158, 0.0
    %1176 = vadd.xlane.f32.xlu0 %v1175
    %v1177 = vpop.xlane.xlu0 %1176
    %v1178 = vsel %vm846, %v1160, 0.0
    %1179 = vadd.xlane.f32.xlu0 %v1178
    %v1180 = vpop.xlane.xlu0 %1179
    %v1181 = vsel %vm846, %v1162, 0.0
    %1182 = vadd.xlane.f32.xlu0 %v1181
    %v1183 = vpop.xlane.xlu0 %1182
    %v1184 = vsel %vm846, %v1164, 0.0
    %1185 = vadd.xlane.f32.xlu0 %v1184
    %v1186 = vpop.xlane.xlu0 %1185
    %v1187 = vsel %vm846, %v1166, 0.0
    %1188 = vadd.xlane.f32.xlu0 %v1187
    %v1189 = vpop.xlane.xlu0 %1188
    %v1190 = vsel %vm846, %v1168, 0.0
    %1191 = vadd.xlane.f32.xlu0 %v1190
    %v1192 = vpop.xlane.xlu0 %1191
    %v1193 = vpack.c.bf16 %v1156, %v1154
    %v1194 = vpack.c.bf16 %v1160, %v1158
    %v1195 = vpack.c.bf16 %v1164, %v1162
    %v1196 = vpack.c.bf16 %v1168, %v1166
    %1201 = vrot.lane.b32.xlu0 %v225, 120
    %v1202 = vpop.permute.xlu0 %1201
    %1203 = vrot.lane.b32.xlu0 %v226, 120
    %v1204 = vpop.permute.xlu0 %1203
    %1205 = vrot.lane.b32.xlu0 %v227, 120
    %v1206 = vpop.permute.xlu0 %1205
    %1207 = vrot.lane.b32.xlu0 %v228, 120
    %v1208 = vpop.permute.xlu0 %1207
    %v1214 = vsel %vm846, %v1193, 0
    %v1217 = vsel %vm846, %v1194, 0
    %v1220 = vsel %vm846, %v1195, 0
    %v1223 = vsel %vm846, %v1196, 0
    %1225 = vmatprep.subr.bf16.mxu0 0
    %1226 = vmatpush1.bf16.msra.mxu0 0
    %1227 = vmatprep.subr.bf16.mxu0 0
    %1228 = vmatpush1.bf16.msra.mxu0 0
    %1229 = vmatprep.subr.bf16.mxu0 0
    %1230 = vmatpush1.bf16.msra.mxu0 0
    %1231 = vmatprep.subr.bf16.mxu0 0
    %1232 = vmatpush1.bf16.msra.mxu0 0
    %1233 = vmatprep.subr.bf16.mxu0 0
    %1234 = vmatpush1.bf16.msra.mxu0 %v1208
    %1235 = vmatprep.subr.bf16.mxu0 0
    %1236 = vmatpush1.bf16.msra.mxu0 %v1206
    %1237 = vmatprep.subr.bf16.mxu0 0
    %1238 = vmatpush1.bf16.msra.mxu0 %v1204
    %1239 = vmatprep.subr.bf16.mxu0 0
    %1240 = vmatpush1.bf16.msra.mxu0 %v1202
    %1241 = vmatprep.subr.bf16.mxu0 0
    %1242 = vmatpush2.bf16.msra.mxu0 0
    %1243 = vmatprep.subr.bf16.mxu0 0
    %1244 = vmatpush2.bf16.msra.mxu0 0
    %1245 = vmatprep.subr.bf16.mxu0 0
    %1246 = vmatpush2.bf16.msra.mxu0 0
    %1247 = vmatprep.subr.bf16.mxu0 0
    %1248 = vmatpush2.bf16.msra.mxu0 0
    %1249 = vmatprep.subr.bf16.mxu0 0
    %1250 = vmatpush2.bf16.msra.mxu0 0
    %1251 = vmatprep.subr.bf16.mxu0 0
    %1252 = vmatpush2.bf16.msra.mxu0 0
    %1253 = vmatprep.subr.bf16.mxu0 0
    %1254 = vmatpush2.bf16.msra.mxu0 0
    %1255 = vmatprep.subr.bf16.mxu0 0
    %1256 = vmatpush2.bf16.msra.mxu0 0
    %1257 = vmatprep.mubr.bf16.mxu0 0
    %1258 = vmatmul.mubr.bf16.gmra.mxu0 %v1214
    %v1259 = vpop.f32.mrf.mxu0
    %v1260 = vadd.f32 0.0, %v1259
    %v1261 = vpop.f32.mrf.mxu0
    %v1262 = vpop.f32.mrf.mxu0
    %v1263 = vadd.f32 0.0, %v1262
    %v1264 = vpop.f32.mrf.mxu0
    %1265 = vmatprep.mubr.bf16.mxu0 0
    %1266 = vmatmul.mubr.bf16.gmra.mxu0 %v1217
    %v1267 = vpop.f32.mrf.mxu0
    %v1268 = vadd.f32 0.0, %v1267
    %v1269 = vpop.f32.mrf.mxu0
    %v1270 = vpop.f32.mrf.mxu0
    %v1271 = vadd.f32 0.0, %v1270
    %v1272 = vpop.f32.mrf.mxu0
    %1273 = vmatprep.mubr.bf16.mxu0 0
    %1274 = vmatmul.mubr.bf16.gmra.mxu0 %v1220
    %v1275 = vpop.f32.mrf.mxu0
    %v1276 = vadd.f32 0.0, %v1275
    %v1277 = vpop.f32.mrf.mxu0
    %v1278 = vpop.f32.mrf.mxu0
    %v1279 = vadd.f32 0.0, %v1278
    %v1280 = vpop.f32.mrf.mxu0
    %1281 = vmatprep.mubr.bf16.mxu0 0
    %1282 = vmatmul.mubr.bf16.gmra.mxu0 %v1223
    %v1283 = vpop.f32.mrf.mxu0
    %v1284 = vadd.f32 0.0, %v1283
    %v1285 = vpop.f32.mrf.mxu0
    %v1286 = vpop.f32.mrf.mxu0
    %v1287 = vadd.f32 0.0, %v1286
    %v1288 = vpop.f32.mrf.mxu0
    %1289 = vdwg.mxu0
    %v1290 = vrcp.pop %v1171
    %v1291 = vrcp.pop %v1174
    %v1292 = vrcp.pop %v1177
    %v1293 = vrcp.pop %v1180
    %v1294 = vrcp.pop %v1183
    %v1295 = vrcp.pop %v1186
    %v1296 = vrcp.pop %v1189
    %v1297 = vrcp.pop %v1192
    %v1298 = vmul.f32 %v1260, %v1290
    %v1299 = vmul.f32 %v1263, %v1291
    %v1300 = vmul.f32 %v1268, %v1292
    %v1301 = vmul.f32 %v1271, %v1293
    %v1302 = vmul.f32 %v1276, %v1294
    %v1303 = vmul.f32 %v1279, %v1295
    %v1304 = vmul.f32 %v1284, %v1296
    %v1305 = vmul.f32 %v1287, %v1297
    %1306 = vrot.lane.b32.xlu0 %v740, 112
    %v1307 = vpop.permute.xlu0 %1306
    %1308 = vrot.lane.b32.xlu0 %v741, 112
    %v1309 = vpop.permute.xlu0 %1308
    %1310 = vrot.lane.b32.xlu0 %v742, 112
    %v1311 = vpop.permute.xlu0 %1310
    %1312 = vrot.lane.b32.xlu0 %v743, 112
    %v1313 = vpop.permute.xlu0 %1312
    %1314 = vrot.lane.b32.xlu0 %v740, 80
    %v1315 = vpop.permute.xlu0 %1314
    %1316 = vrot.lane.b32.xlu0 %v741, 80
    %v1317 = vpop.permute.xlu0 %1316
    %1318 = vrot.lane.b32.xlu0 %v742, 80
    %v1319 = vpop.permute.xlu0 %1318
    %1320 = vrot.lane.b32.xlu0 %v743, 80
    %v1321 = vpop.permute.xlu0 %1320
    %v1323 = vsel %vm756, %v1307, 0
    %v1326 = vsel %vm756, %v1309, 0
    %v1329 = vsel %vm756, %v1311, 0
    %v1332 = vsel %vm756, %v1313, 0
    %v1335 = vsel %vm756, %v1315, 0
    %v1338 = vsel %vm756, %v1317, 0
    %v1341 = vsel %vm756, %v1319, 0
    %v1344 = vsel %vm756, %v1321, 0
    %1346 = vmatprep.subr.bf16.mxu0 0
    %1347 = vmatpush1.bf16.xpose.msra.mxu0 0
    %1348 = vmatprep.subr.bf16.mxu0 0
    %1349 = vmatpush1.bf16.xpose.msra.mxu0 0
    %1350 = vmatprep.subr.bf16.mxu0 0
    %1351 = vmatpush1.bf16.xpose.msra.mxu0 0
    %1352 = vmatprep.subr.bf16.mxu0 0
    %1353 = vmatpush1.bf16.xpose.msra.mxu0 0
    %1354 = vmatprep.subr.bf16.mxu0 0
    %1355 = vmatpush1.bf16.xpose.msra.mxu0 %v1344
    %1356 = vmatprep.subr.bf16.mxu0 0
    %1357 = vmatpush1.bf16.xpose.msra.mxu0 %v1341
    %1358 = vmatprep.subr.bf16.mxu0 0
    %1359 = vmatpush1.bf16.xpose.msra.mxu0 %v1338
    %1360 = vmatprep.subr.bf16.mxu0 0
    %1361 = vmatpush1.bf16.xpose.msra.mxu0 %v1335
    %1362 = vmatprep.subr.bf16.mxu0 0
    %1363 = vmatpush2.bf16.xpose.msra.mxu0 0
    %1364 = vmatprep.subr.bf16.mxu0 0
    %1365 = vmatpush2.bf16.xpose.msra.mxu0 0
    %1366 = vmatprep.subr.bf16.mxu0 0
    %1367 = vmatpush2.bf16.xpose.msra.mxu0 0
    %1368 = vmatprep.subr.bf16.mxu0 0
    %1369 = vmatpush2.bf16.xpose.msra.mxu0 0
    %1370 = vmatprep.subr.bf16.mxu0 0
    %1371 = vmatpush2.bf16.xpose.msra.mxu0 0
    %1372 = vmatprep.subr.bf16.mxu0 0
    %1373 = vmatpush2.bf16.xpose.msra.mxu0 0
    %1374 = vmatprep.subr.bf16.mxu0 0
    %1375 = vmatpush2.bf16.xpose.msra.mxu0 0
    %1376 = vmatprep.subr.bf16.mxu0 0
    %1377 = vmatpush2.bf16.xpose.msra.mxu0 0
    %1378 = vmatprep.mubr.bf16.mxu0 0
    %1379 = vmatmul.mubr.bf16.gmra.mxu0 %v1323
    %v1380 = vpop.f32.mrf.mxu0
    %v1381 = vadd.f32 %v732, %v1380
    %v1382 = vpop.f32.mrf.mxu0
    %v1383 = vpop.f32.mrf.mxu0
    %v1384 = vadd.f32 %v733, %v1383
    %v1385 = vpop.f32.mrf.mxu0
    %1386 = vmatprep.mubr.bf16.mxu0 0
    %1387 = vmatmul.mubr.bf16.gmra.mxu0 %v1326
    %v1388 = vpop.f32.mrf.mxu0
    %v1389 = vadd.f32 %v734, %v1388
    %v1390 = vpop.f32.mrf.mxu0
    %v1391 = vpop.f32.mrf.mxu0
    %v1392 = vadd.f32 %v735, %v1391
    %v1393 = vpop.f32.mrf.mxu0
    %1394 = vmatprep.mubr.bf16.mxu0 0
    %1395 = vmatmul.mubr.bf16.gmra.mxu0 %v1329
    %v1396 = vpop.f32.mrf.mxu0
    %v1397 = vadd.f32 %v736, %v1396
    %v1398 = vpop.f32.mrf.mxu0
    %v1399 = vpop.f32.mrf.mxu0
    %v1400 = vadd.f32 %v737, %v1399
    %v1401 = vpop.f32.mrf.mxu0
    %1402 = vmatprep.mubr.bf16.mxu0 0
    %1403 = vmatmul.mubr.bf16.gmra.mxu0 %v1332
    %v1404 = vpop.f32.mrf.mxu0
    %v1405 = vadd.f32 %v738, %v1404
    %v1406 = vpop.f32.mrf.mxu0
    %v1407 = vpop.f32.mrf.mxu0
    %v1408 = vadd.f32 %v739, %v1407
    %v1409 = vpop.f32.mrf.mxu0
    %1410 = vdwg.mxu0
    %v1411 = vsel %vm846, %v1381, -inf
    %1412 = vmax.xlane.f32.xlu0 %v1411
    %v1413 = vpop.xlane.xlu0 %1412
    %v1414 = vsel %vm846, %v1384, -inf
    %1415 = vmax.xlane.f32.xlu0 %v1414
    %v1416 = vpop.xlane.xlu0 %1415
    %v1417 = vsel %vm846, %v1389, -inf
    %1418 = vmax.xlane.f32.xlu0 %v1417
    %v1419 = vpop.xlane.xlu0 %1418
    %v1420 = vsel %vm846, %v1392, -inf
    %1421 = vmax.xlane.f32.xlu0 %v1420
    %v1422 = vpop.xlane.xlu0 %1421
    %v1423 = vsel %vm846, %v1397, -inf
    %1424 = vmax.xlane.f32.xlu0 %v1423
    %v1425 = vpop.xlane.xlu0 %1424
    %v1426 = vsel %vm846, %v1400, -inf
    %1427 = vmax.xlane.f32.xlu0 %v1426
    %v1428 = vpop.xlane.xlu0 %1427
    %v1429 = vsel %vm846, %v1405, -inf
    %1430 = vmax.xlane.f32.xlu0 %v1429
    %v1431 = vpop.xlane.xlu0 %1430
    %v1432 = vsel %vm846, %v1408, -inf
    %1433 = vmax.xlane.f32.xlu0 %v1432
    %v1434 = vpop.xlane.xlu0 %1433
    %v1435 = vsub.f32 %v1381, %v1413
    %v1436 = vsub.f32 %v1384, %v1416
    %v1437 = vsub.f32 %v1389, %v1419
    %v1438 = vsub.f32 %v1392, %v1422
    %v1439 = vsub.f32 %v1397, %v1425
    %v1440 = vsub.f32 %v1400, %v1428
    %v1441 = vsub.f32 %v1405, %v1431
    %v1442 = vsub.f32 %v1408, %v1434
    %v1443 = vmul.f32 %v1435, 1.442695
    %v1444 = vpow.pop %v1443
    %v1445 = vmul.f32 %v1436, 1.442695
    %v1446 = vpow.pop %v1445
    %v1447 = vmul.f32 %v1437, 1.442695
    %v1448 = vpow.pop %v1447
    %v1449 = vmul.f32 %v1438, 1.442695
    %v1450 = vpow.pop %v1449
    %v1451 = vmul.f32 %v1439, 1.442695
    %v1452 = vpow.pop %v1451
    %v1453 = vmul.f32 %v1440, 1.442695
    %v1454 = vpow.pop %v1453
    %v1455 = vmul.f32 %v1441, 1.442695
    %v1456 = vpow.pop %v1455
    %v1457 = vmul.f32 %v1442, 1.442695
    %v1458 = vpow.pop %v1457
    %v1459 = vsel %vm846, %v1444, 0.0
    %1460 = vadd.xlane.f32.xlu0 %v1459
    %v1461 = vpop.xlane.xlu0 %1460
    %v1462 = vsel %vm846, %v1446, 0.0
    %1463 = vadd.xlane.f32.xlu0 %v1462
    %v1464 = vpop.xlane.xlu0 %1463
    %v1465 = vsel %vm846, %v1448, 0.0
    %1466 = vadd.xlane.f32.xlu0 %v1465
    %v1467 = vpop.xlane.xlu0 %1466
    %v1468 = vsel %vm846, %v1450, 0.0
    %1469 = vadd.xlane.f32.xlu0 %v1468
    %v1470 = vpop.xlane.xlu0 %1469
    %v1471 = vsel %vm846, %v1452, 0.0
    %1472 = vadd.xlane.f32.xlu0 %v1471
    %v1473 = vpop.xlane.xlu0 %1472
    %v1474 = vsel %vm846, %v1454, 0.0
    %1475 = vadd.xlane.f32.xlu0 %v1474
    %v1476 = vpop.xlane.xlu0 %1475
    %v1477 = vsel %vm846, %v1456, 0.0
    %1478 = vadd.xlane.f32.xlu0 %v1477
    %v1479 = vpop.xlane.xlu0 %1478
    %v1480 = vsel %vm846, %v1458, 0.0
    %1481 = vadd.xlane.f32.xlu0 %v1480
    %v1482 = vpop.xlane.xlu0 %1481
    %v1483 = vpack.c.bf16 %v1446, %v1444
    %v1484 = vpack.c.bf16 %v1450, %v1448
    %v1485 = vpack.c.bf16 %v1454, %v1452
    %v1486 = vpack.c.bf16 %v1458, %v1456
    %1487 = vrot.lane.b32.xlu0 %v225, 112
    %v1488 = vpop.permute.xlu0 %1487
    %1489 = vrot.lane.b32.xlu0 %v226, 112
    %v1490 = vpop.permute.xlu0 %1489
    %1491 = vrot.lane.b32.xlu0 %v227, 112
    %v1492 = vpop.permute.xlu0 %1491
    %1493 = vrot.lane.b32.xlu0 %v228, 112
    %v1494 = vpop.permute.xlu0 %1493
    %v1500 = vsel %vm846, %v1483, 0
    %v1503 = vsel %vm846, %v1484, 0
    %v1506 = vsel %vm846, %v1485, 0
    %v1509 = vsel %vm846, %v1486, 0
    %1511 = vmatprep.subr.bf16.mxu0 0
    %1512 = vmatpush1.bf16.msra.mxu0 0
    %1513 = vmatprep.subr.bf16.mxu0 0
    %1514 = vmatpush1.bf16.msra.mxu0 0
    %1515 = vmatprep.subr.bf16.mxu0 0
    %1516 = vmatpush1.bf16.msra.mxu0 0
    %1517 = vmatprep.subr.bf16.mxu0 0
    %1518 = vmatpush1.bf16.msra.mxu0 0
    %1519 = vmatprep.subr.bf16.mxu0 0
    %1520 = vmatpush1.bf16.msra.mxu0 %v1494
    %1521 = vmatprep.subr.bf16.mxu0 0
    %1522 = vmatpush1.bf16.msra.mxu0 %v1492
    %1523 = vmatprep.subr.bf16.mxu0 0
    %1524 = vmatpush1.bf16.msra.mxu0 %v1490
    %1525 = vmatprep.subr.bf16.mxu0 0
    %1526 = vmatpush1.bf16.msra.mxu0 %v1488
    %1527 = vmatprep.subr.bf16.mxu0 0
    %1528 = vmatpush2.bf16.msra.mxu0 0
    %1529 = vmatprep.subr.bf16.mxu0 0
    %1530 = vmatpush2.bf16.msra.mxu0 0
    %1531 = vmatprep.subr.bf16.mxu0 0
    %1532 = vmatpush2.bf16.msra.mxu0 0
    %1533 = vmatprep.subr.bf16.mxu0 0
    %1534 = vmatpush2.bf16.msra.mxu0 0
    %1535 = vmatprep.subr.bf16.mxu0 0
    %1536 = vmatpush2.bf16.msra.mxu0 0
    %1537 = vmatprep.subr.bf16.mxu0 0
    %1538 = vmatpush2.bf16.msra.mxu0 0
    %1539 = vmatprep.subr.bf16.mxu0 0
    %1540 = vmatpush2.bf16.msra.mxu0 0
    %1541 = vmatprep.subr.bf16.mxu0 0
    %1542 = vmatpush2.bf16.msra.mxu0 0
    %1543 = vmatprep.mubr.bf16.mxu0 0
    %1544 = vmatmul.mubr.bf16.gmra.mxu0 %v1500
    %v1545 = vpop.f32.mrf.mxu0
    %v1546 = vadd.f32 0.0, %v1545
    %v1547 = vpop.f32.mrf.mxu0
    %v1548 = vpop.f32.mrf.mxu0
    %v1549 = vadd.f32 0.0, %v1548
    %v1550 = vpop.f32.mrf.mxu0
    %1551 = vmatprep.mubr.bf16.mxu0 0
    %1552 = vmatmul.mubr.bf16.gmra.mxu0 %v1503
    %v1553 = vpop.f32.mrf.mxu0
    %v1554 = vadd.f32 0.0, %v1553
    %v1555 = vpop.f32.mrf.mxu0
    %v1556 = vpop.f32.mrf.mxu0
    %v1557 = vadd.f32 0.0, %v1556
    %v1558 = vpop.f32.mrf.mxu0
    %1559 = vmatprep.mubr.bf16.mxu0 0
    %1560 = vmatmul.mubr.bf16.gmra.mxu0 %v1506
    %v1561 = vpop.f32.mrf.mxu0
    %v1562 = vadd.f32 0.0, %v1561
    %v1563 = vpop.f32.mrf.mxu0
    %v1564 = vpop.f32.mrf.mxu0
    %v1565 = vadd.f32 0.0, %v1564
    %v1566 = vpop.f32.mrf.mxu0
    %1567 = vmatprep.mubr.bf16.mxu0 0
    %1568 = vmatmul.mubr.bf16.gmra.mxu0 %v1509
    %v1569 = vpop.f32.mrf.mxu0
    %v1570 = vadd.f32 0.0, %v1569
    %v1571 = vpop.f32.mrf.mxu0
    %v1572 = vpop.f32.mrf.mxu0
    %v1573 = vadd.f32 0.0, %v1572
    %v1574 = vpop.f32.mrf.mxu0
    %1575 = vdwg.mxu0
    %v1576 = vrcp.pop %v1461
    %v1577 = vrcp.pop %v1464
    %v1578 = vrcp.pop %v1467
    %v1579 = vrcp.pop %v1470
    %v1580 = vrcp.pop %v1473
    %v1581 = vrcp.pop %v1476
    %v1582 = vrcp.pop %v1479
    %v1583 = vrcp.pop %v1482
    %v1584 = vmul.f32 %v1546, %v1576
    %v1585 = vmul.f32 %v1549, %v1577
    %v1586 = vmul.f32 %v1554, %v1578
    %v1587 = vmul.f32 %v1557, %v1579
    %v1588 = vmul.f32 %v1562, %v1580
    %v1589 = vmul.f32 %v1565, %v1581
    %v1590 = vmul.f32 %v1570, %v1582
    %v1591 = vmul.f32 %v1573, %v1583
    %1592 = vrot.lane.b32.xlu0 %v740, 104
    %v1593 = vpop.permute.xlu0 %1592
    %1594 = vrot.lane.b32.xlu0 %v741, 104
    %v1595 = vpop.permute.xlu0 %1594
    %1596 = vrot.lane.b32.xlu0 %v742, 104
    %v1597 = vpop.permute.xlu0 %1596
    %1598 = vrot.lane.b32.xlu0 %v743, 104
    %v1599 = vpop.permute.xlu0 %1598
    %1600 = vrot.lane.b32.xlu0 %v740, 72
    %v1601 = vpop.permute.xlu0 %1600
    %1602 = vrot.lane.b32.xlu0 %v741, 72
    %v1603 = vpop.permute.xlu0 %1602
    %1604 = vrot.lane.b32.xlu0 %v742, 72
    %v1605 = vpop.permute.xlu0 %1604
    %1606 = vrot.lane.b32.xlu0 %v743, 72
    %v1607 = vpop.permute.xlu0 %1606
    %v1609 = vsel %vm756, %v1593, 0
    %v1612 = vsel %vm756, %v1595, 0
    %v1615 = vsel %vm756, %v1597, 0
    %v1618 = vsel %vm756, %v1599, 0
    %v1621 = vsel %vm756, %v1601, 0
    %v1624 = vsel %vm756, %v1603, 0
    %v1627 = vsel %vm756, %v1605, 0
    %v1630 = vsel %vm756, %v1607, 0
    %1632 = vmatprep.subr.bf16.mxu0 0
    %1633 = vmatpush1.bf16.xpose.msra.mxu0 0
    %1634 = vmatprep.subr.bf16.mxu0 0
    %1635 = vmatpush1.bf16.xpose.msra.mxu0 0
    %1636 = vmatprep.subr.bf16.mxu0 0
    %1637 = vmatpush1.bf16.xpose.msra.mxu0 0
    %1638 = vmatprep.subr.bf16.mxu0 0
    %1639 = vmatpush1.bf16.xpose.msra.mxu0 0
    %1640 = vmatprep.subr.bf16.mxu0 0
    %1641 = vmatpush1.bf16.xpose.msra.mxu0 %v1630
    %1642 = vmatprep.subr.bf16.mxu0 0
    %1643 = vmatpush1.bf16.xpose.msra.mxu0 %v1627
    %1644 = vmatprep.subr.bf16.mxu0 0
    %1645 = vmatpush1.bf16.xpose.msra.mxu0 %v1624
    %1646 = vmatprep.subr.bf16.mxu0 0
    %1647 = vmatpush1.bf16.xpose.msra.mxu0 %v1621
    %1648 = vmatprep.subr.bf16.mxu0 0
    %1649 = vmatpush2.bf16.xpose.msra.mxu0 0
    %1650 = vmatprep.subr.bf16.mxu0 0
    %1651 = vmatpush2.bf16.xpose.msra.mxu0 0
    %1652 = vmatprep.subr.bf16.mxu0 0
    %1653 = vmatpush2.bf16.xpose.msra.mxu0 0
    %1654 = vmatprep.subr.bf16.mxu0 0
    %1655 = vmatpush2.bf16.xpose.msra.mxu0 0
    %1656 = vmatprep.subr.bf16.mxu0 0
    %1657 = vmatpush2.bf16.xpose.msra.mxu0 0
    %1658 = vmatprep.subr.bf16.mxu0 0
    %1659 = vmatpush2.bf16.xpose.msra.mxu0 0
    %1660 = vmatprep.subr.bf16.mxu0 0
    %1661 = vmatpush2.bf16.xpose.msra.mxu0 0
    %1662 = vmatprep.subr.bf16.mxu0 0
    %1663 = vmatpush2.bf16.xpose.msra.mxu0 0
    %1664 = vmatprep.mubr.bf16.mxu0 0
    %1665 = vmatmul.mubr.bf16.gmra.mxu0 %v1609
    %v1666 = vpop.f32.mrf.mxu0
    %v1667 = vadd.f32 %v732, %v1666
    %v1668 = vpop.f32.mrf.mxu0
    %v1669 = vpop.f32.mrf.mxu0
    %v1670 = vadd.f32 %v733, %v1669
    %v1671 = vpop.f32.mrf.mxu0
    %1672 = vmatprep.mubr.bf16.mxu0 0
    %1673 = vmatmul.mubr.bf16.gmra.mxu0 %v1612
    %v1674 = vpop.f32.mrf.mxu0
    %v1675 = vadd.f32 %v734, %v1674
    %v1676 = vpop.f32.mrf.mxu0
    %v1677 = vpop.f32.mrf.mxu0
    %v1678 = vadd.f32 %v735, %v1677
    %v1679 = vpop.f32.mrf.mxu0
    %1680 = vmatprep.mubr.bf16.mxu0 0
    %1681 = vmatmul.mubr.bf16.gmra.mxu0 %v1615
    %v1682 = vpop.f32.mrf.mxu0
    %v1683 = vadd.f32 %v736, %v1682
    %v1684 = vpop.f32.mrf.mxu0
    %v1685 = vpop.f32.mrf.mxu0
    %v1686 = vadd.f32 %v737, %v1685
    %v1687 = vpop.f32.mrf.mxu0
    %1688 = vmatprep.mubr.bf16.mxu0 0
    %1689 = vmatmul.mubr.bf16.gmra.mxu0 %v1618
    %v1690 = vpop.f32.mrf.mxu0
    %v1691 = vadd.f32 %v738, %v1690
    %v1692 = vpop.f32.mrf.mxu0
    %v1693 = vpop.f32.mrf.mxu0
    %v1694 = vadd.f32 %v739, %v1693
    %v1695 = vpop.f32.mrf.mxu0
    %1696 = vdwg.mxu0
    %v1697 = vsel %vm846, %v1667, -inf
    %1698 = vmax.xlane.f32.xlu0 %v1697
    %v1699 = vpop.xlane.xlu0 %1698
    %v1700 = vsel %vm846, %v1670, -inf
    %1701 = vmax.xlane.f32.xlu0 %v1700
    %v1702 = vpop.xlane.xlu0 %1701
    %v1703 = vsel %vm846, %v1675, -inf
    %1704 = vmax.xlane.f32.xlu0 %v1703
    %v1705 = vpop.xlane.xlu0 %1704
    %v1706 = vsel %vm846, %v1678, -inf
    %1707 = vmax.xlane.f32.xlu0 %v1706
    %v1708 = vpop.xlane.xlu0 %1707
    %v1709 = vsel %vm846, %v1683, -inf
    %1710 = vmax.xlane.f32.xlu0 %v1709
    %v1711 = vpop.xlane.xlu0 %1710
    %v1712 = vsel %vm846, %v1686, -inf
    %1713 = vmax.xlane.f32.xlu0 %v1712
    %v1714 = vpop.xlane.xlu0 %1713
    %v1715 = vsel %vm846, %v1691, -inf
    %1716 = vmax.xlane.f32.xlu0 %v1715
    %v1717 = vpop.xlane.xlu0 %1716
    %v1718 = vsel %vm846, %v1694, -inf
    %1719 = vmax.xlane.f32.xlu0 %v1718
    %v1720 = vpop.xlane.xlu0 %1719
    %v1721 = vsub.f32 %v1667, %v1699
    %v1722 = vsub.f32 %v1670, %v1702
    %v1723 = vsub.f32 %v1675, %v1705
    %v1724 = vsub.f32 %v1678, %v1708
    %v1725 = vsub.f32 %v1683, %v1711
    %v1726 = vsub.f32 %v1686, %v1714
    %v1727 = vsub.f32 %v1691, %v1717
    %v1728 = vsub.f32 %v1694, %v1720
    %v1729 = vmul.f32 %v1721, 1.442695
    %v1730 = vpow.pop %v1729
    %v1731 = vmul.f32 %v1722, 1.442695
    %v1732 = vpow.pop %v1731
    %v1733 = vmul.f32 %v1723, 1.442695
    %v1734 = vpow.pop %v1733
    %v1735 = vmul.f32 %v1724, 1.442695
    %v1736 = vpow.pop %v1735
    %v1737 = vmul.f32 %v1725, 1.442695
    %v1738 = vpow.pop %v1737
    %v1739 = vmul.f32 %v1726, 1.442695
    %v1740 = vpow.pop %v1739
    %v1741 = vmul.f32 %v1727, 1.442695
    %v1742 = vpow.pop %v1741
    %v1743 = vmul.f32 %v1728, 1.442695
    %v1744 = vpow.pop %v1743
    %v1745 = vsel %vm846, %v1730, 0.0
    %1746 = vadd.xlane.f32.xlu0 %v1745
    %v1747 = vpop.xlane.xlu0 %1746
    %v1748 = vsel %vm846, %v1732, 0.0
    %1749 = vadd.xlane.f32.xlu0 %v1748
    %v1750 = vpop.xlane.xlu0 %1749
    %v1751 = vsel %vm846, %v1734, 0.0
    %1752 = vadd.xlane.f32.xlu0 %v1751
    %v1753 = vpop.xlane.xlu0 %1752
    %v1754 = vsel %vm846, %v1736, 0.0
    %1755 = vadd.xlane.f32.xlu0 %v1754
    %v1756 = vpop.xlane.xlu0 %1755
    %v1757 = vsel %vm846, %v1738, 0.0
    %1758 = vadd.xlane.f32.xlu0 %v1757
    %v1759 = vpop.xlane.xlu0 %1758
    %v1760 = vsel %vm846, %v1740, 0.0
    %1761 = vadd.xlane.f32.xlu0 %v1760
    %v1762 = vpop.xlane.xlu0 %1761
    %v1763 = vsel %vm846, %v1742, 0.0
    %1764 = vadd.xlane.f32.xlu0 %v1763
    %v1765 = vpop.xlane.xlu0 %1764
    %v1766 = vsel %vm846, %v1744, 0.0
    %1767 = vadd.xlane.f32.xlu0 %v1766
    %v1768 = vpop.xlane.xlu0 %1767
    %v1769 = vpack.c.bf16 %v1732, %v1730
    %v1770 = vpack.c.bf16 %v1736, %v1734
    %v1771 = vpack.c.bf16 %v1740, %v1738
    %v1772 = vpack.c.bf16 %v1744, %v1742
    %1773 = vrot.lane.b32.xlu0 %v225, 104
    %v1774 = vpop.permute.xlu0 %1773
    %1775 = vrot.lane.b32.xlu0 %v226, 104
    %v1776 = vpop.permute.xlu0 %1775
    %1777 = vrot.lane.b32.xlu0 %v227, 104
    %v1778 = vpop.permute.xlu0 %1777
    %1779 = vrot.lane.b32.xlu0 %v228, 104
    %v1780 = vpop.permute.xlu0 %1779
    %v1786 = vsel %vm846, %v1769, 0
    %v1789 = vsel %vm846, %v1770, 0
    %v1792 = vsel %vm846, %v1771, 0
    %v1795 = vsel %vm846, %v1772, 0
    %1797 = vmatprep.subr.bf16.mxu0 0
    %1798 = vmatpush1.bf16.msra.mxu0 0
    %1799 = vmatprep.subr.bf16.mxu0 0
    %1800 = vmatpush1.bf16.msra.mxu0 0
    %1801 = vmatprep.subr.bf16.mxu0 0
    %1802 = vmatpush1.bf16.msra.mxu0 0
    %1803 = vmatprep.subr.bf16.mxu0 0
    %1804 = vmatpush1.bf16.msra.mxu0 0
    %1805 = vmatprep.subr.bf16.mxu0 0
    %1806 = vmatpush1.bf16.msra.mxu0 %v1780
    %1807 = vmatprep.subr.bf16.mxu0 0
    %1808 = vmatpush1.bf16.msra.mxu0 %v1778
    %1809 = vmatprep.subr.bf16.mxu0 0
    %1810 = vmatpush1.bf16.msra.mxu0 %v1776
    %1811 = vmatprep.subr.bf16.mxu0 0
    %1812 = vmatpush1.bf16.msra.mxu0 %v1774
    %1813 = vmatprep.subr.bf16.mxu0 0
    %1814 = vmatpush2.bf16.msra.mxu0 0
    %1815 = vmatprep.subr.bf16.mxu0 0
    %1816 = vmatpush2.bf16.msra.mxu0 0
    %1817 = vmatprep.subr.bf16.mxu0 0
    %1818 = vmatpush2.bf16.msra.mxu0 0
    %1819 = vmatprep.subr.bf16.mxu0 0
    %1820 = vmatpush2.bf16.msra.mxu0 0
    %1821 = vmatprep.subr.bf16.mxu0 0
    %1822 = vmatpush2.bf16.msra.mxu0 0
    %1823 = vmatprep.subr.bf16.mxu0 0
    %1824 = vmatpush2.bf16.msra.mxu0 0
    %1825 = vmatprep.subr.bf16.mxu0 0
    %1826 = vmatpush2.bf16.msra.mxu0 0
    %1827 = vmatprep.subr.bf16.mxu0 0
    %1828 = vmatpush2.bf16.msra.mxu0 0
    %1829 = vmatprep.mubr.bf16.mxu0 0
    %1830 = vmatmul.mubr.bf16.gmra.mxu0 %v1786
    %v1831 = vpop.f32.mrf.mxu0
    %v1832 = vadd.f32 0.0, %v1831
    %v1833 = vpop.f32.mrf.mxu0
    %v1834 = vpop.f32.mrf.mxu0
    %v1835 = vadd.f32 0.0, %v1834
    %v1836 = vpop.f32.mrf.mxu0
    %1837 = vmatprep.mubr.bf16.mxu0 0
    %1838 = vmatmul.mubr.bf16.gmra.mxu0 %v1789
    %v1839 = vpop.f32.mrf.mxu0
    %v1840 = vadd.f32 0.0, %v1839
    %v1841 = vpop.f32.mrf.mxu0
    %v1842 = vpop.f32.mrf.mxu0
    %v1843 = vadd.f32 0.0, %v1842
    %v1844 = vpop.f32.mrf.mxu0
    %1845 = vmatprep.mubr.bf16.mxu0 0
    %1846 = vmatmul.mubr.bf16.gmra.mxu0 %v1792
    %v1847 = vpop.f32.mrf.mxu0
    %v1848 = vadd.f32 0.0, %v1847
    %v1849 = vpop.f32.mrf.mxu0
    %v1850 = vpop.f32.mrf.mxu0
    %v1851 = vadd.f32 0.0, %v1850
    %v1852 = vpop.f32.mrf.mxu0
    %1853 = vmatprep.mubr.bf16.mxu0 0
    %1854 = vmatmul.mubr.bf16.gmra.mxu0 %v1795
    %v1855 = vpop.f32.mrf.mxu0
    %v1856 = vadd.f32 0.0, %v1855
    %v1857 = vpop.f32.mrf.mxu0
    %v1858 = vpop.f32.mrf.mxu0
    %v1859 = vadd.f32 0.0, %v1858
    %v1860 = vpop.f32.mrf.mxu0
    %1861 = vdwg.mxu0
    %v1862 = vrcp.pop %v1747
    %v1863 = vrcp.pop %v1750
    %v1864 = vrcp.pop %v1753
    %v1865 = vrcp.pop %v1756
    %v1866 = vrcp.pop %v1759
    %v1867 = vrcp.pop %v1762
    %v1868 = vrcp.pop %v1765
    %v1869 = vrcp.pop %v1768
    %v1870 = vmul.f32 %v1832, %v1862
    %v1871 = vmul.f32 %v1835, %v1863
    %v1872 = vmul.f32 %v1840, %v1864
    %v1873 = vmul.f32 %v1843, %v1865
    %v1874 = vmul.f32 %v1848, %v1866
    %v1875 = vmul.f32 %v1851, %v1867
    %v1876 = vmul.f32 %v1856, %v1868
    %v1877 = vmul.f32 %v1859, %v1869
    %1886 = vrot.lane.b32.xlu0 %v1298, 8
    %v1887 = vpop.permute.xlu0 %1886
    %1888 = vrot.lane.b32.xlu0 %v1299, 8
    %v1889 = vpop.permute.xlu0 %1888
    %1890 = vrot.lane.b32.xlu0 %v1300, 8
    %v1891 = vpop.permute.xlu0 %1890
    %1892 = vrot.lane.b32.xlu0 %v1301, 8
    %v1893 = vpop.permute.xlu0 %1892
    %1894 = vrot.lane.b32.xlu0 %v1302, 8
    %v1895 = vpop.permute.xlu0 %1894
    %1896 = vrot.lane.b32.xlu0 %v1303, 8
    %v1897 = vpop.permute.xlu0 %1896
    %1898 = vrot.lane.b32.xlu0 %v1304, 8
    %v1899 = vpop.permute.xlu0 %1898
    %1900 = vrot.lane.b32.xlu0 %v1305, 8
    %v1901 = vpop.permute.xlu0 %1900
    %1918 = vrot.lane.b32.xlu0 %v1584, 16
    %v1919 = vpop.permute.xlu0 %1918
    %1920 = vrot.lane.b32.xlu0 %v1585, 16
    %v1921 = vpop.permute.xlu0 %1920
    %1922 = vrot.lane.b32.xlu0 %v1586, 16
    %v1923 = vpop.permute.xlu0 %1922
    %1924 = vrot.lane.b32.xlu0 %v1587, 16
    %v1925 = vpop.permute.xlu0 %1924
    %1926 = vrot.lane.b32.xlu0 %v1588, 16
    %v1927 = vpop.permute.xlu0 %1926
    %1928 = vrot.lane.b32.xlu0 %v1589, 16
    %v1929 = vpop.permute.xlu0 %1928
    %1930 = vrot.lane.b32.xlu0 %v1590, 16
    %v1931 = vpop.permute.xlu0 %1930
    %1932 = vrot.lane.b32.xlu0 %v1591, 16
    %v1933 = vpop.permute.xlu0 %1932
    %1950 = vrot.lane.b32.xlu0 %v1870, 24
    %v1951 = vpop.permute.xlu0 %1950
    %1952 = vrot.lane.b32.xlu0 %v1871, 24
    %v1953 = vpop.permute.xlu0 %1952
    %1954 = vrot.lane.b32.xlu0 %v1872, 24
    %v1955 = vpop.permute.xlu0 %1954
    %1956 = vrot.lane.b32.xlu0 %v1873, 24
    %v1957 = vpop.permute.xlu0 %1956
    %1958 = vrot.lane.b32.xlu0 %v1874, 24
    %v1959 = vpop.permute.xlu0 %1958
    %1960 = vrot.lane.b32.xlu0 %v1875, 24
    %v1961 = vpop.permute.xlu0 %1960
    %1962 = vrot.lane.b32.xlu0 %v1876, 24
    %v1963 = vpop.permute.xlu0 %1962
    %1964 = vrot.lane.b32.xlu0 %v1877, 24
    %v1965 = vpop.permute.xlu0 %1964
    %v1974 = vsel %vm756, %v1008, %v1887
    %v1975 = vsel %vm756, %v1009, %v1889
    %v1976 = vsel %vm756, %v1010, %v1891
    %v1977 = vsel %vm756, %v1011, %v1893
    %v1978 = vsel %vm756, %v1012, %v1895
    %v1979 = vsel %vm756, %v1013, %v1897
    %v1980 = vsel %vm756, %v1014, %v1899
    %v1981 = vsel %vm756, %v1015, %v1901
    %vm1982 = vcmask 130048
    %v1983 = vsel %vm1982, %v1974, %v1919
    %v1984 = vsel %vm1982, %v1975, %v1921
    %v1985 = vsel %vm1982, %v1976, %v1923
    %v1986 = vsel %vm1982, %v1977, %v1925
    %v1987 = vsel %vm1982, %v1978, %v1927
    %v1988 = vsel %vm1982, %v1979, %v1929
    %v1989 = vsel %vm1982, %v1980, %v1931
    %v1990 = vsel %vm1982, %v1981, %v1933
    %v1991 = vsel %vm606, %v1983, %v1951
    %v1992 = vsel %vm606, %v1984, %v1953
    %v1993 = vsel %vm606, %v1985, %v1955
    %v1994 = vsel %vm606, %v1986, %v1957
    %v1995 = vsel %vm606, %v1987, %v1959
    %v1996 = vsel %vm606, %v1988, %v1961
    %v1997 = vsel %vm606, %v1989, %v1963
    %v1998 = vsel %vm606, %v1990, %v1965
    %2007 = vrot.lane.b32.xlu0 %v670, 64
    %v2008 = vpop.permute.xlu0 %2007
    %2009 = vrot.lane.b32.xlu0 %v673, 64
    %v2010 = vpop.permute.xlu0 %2009
    %2011 = vrot.lane.b32.xlu0 %v678, 64
    %v2012 = vpop.permute.xlu0 %2011
    %2013 = vrot.lane.b32.xlu0 %v681, 64
    %v2014 = vpop.permute.xlu0 %2013
    %2015 = vrot.lane.b32.xlu0 %v686, 64
    %v2016 = vpop.permute.xlu0 %2015
    %2017 = vrot.lane.b32.xlu0 %v689, 64
    %v2018 = vpop.permute.xlu0 %2017
    %2019 = vrot.lane.b32.xlu0 %v694, 64
    %v2020 = vpop.permute.xlu0 %2019
    %2021 = vrot.lane.b32.xlu0 %v697, 64
    %v2022 = vpop.permute.xlu0 %2021
    %v2031 = vadd.f32 %v1991, %v2008
    %v2032 = vadd.f32 %v1992, %v2010
    %v2033 = vadd.f32 %v1993, %v2012
    %v2034 = vadd.f32 %v1994, %v2014
    %v2035 = vadd.f32 %v1995, %v2016
    %v2036 = vadd.f32 %v1996, %v2018
    %v2037 = vadd.f32 %v1997, %v2020
    %v2038 = vadd.f32 %v1998, %v2022
    %2041 = vrot.lane.b32.xlu0 %v2033, 32
    %v2042 = vpop.permute.xlu0 %2041
    %2043 = vrot.lane.b32.xlu0 %v2034, 32
    %v2044 = vpop.permute.xlu0 %2043
    %2049 = vrot.lane.b32.xlu0 %v2035, 64
    %v2050 = vpop.permute.xlu0 %2049
    %2051 = vrot.lane.b32.xlu0 %v2036, 64
    %v2052 = vpop.permute.xlu0 %2051
    %2057 = vrot.lane.b32.xlu0 %v2037, 96
    %v2058 = vpop.permute.xlu0 %2057
    %2059 = vrot.lane.b32.xlu0 %v2038, 96
    %v2060 = vpop.permute.xlu0 %2059
    %v2063 = vsel %vm493, %v2031, %v2042
    %v2064 = vsel %vm493, %v2032, %v2044
    %v2065 = vsel %vm846, %v2063, %v2050
    %v2066 = vsel %vm846, %v2064, %v2052
    %vm2067 = vcmask 785408
    %v2068 = vsel %vm2067, %v2065, %v2058
    %v2069 = vsel %vm2067, %v2066, %v2060
    %s2070 = scalar_lea.vmem %s3, 64
    %v2071 = vld [vmem:[%s2070] sm:$0xff]
    %v2072 = vld [vmem:[%s2070 + $0x8] sm:$0xff]
    %v2073 = vld [vmem:[%s2070 + $0x10] sm:$0xff]
    %v2074 = vld [vmem:[%s2070 + $0x18] sm:$0xff]
    %v2075 = vld [vmem:[%s2070 + $0x20] sm:$0xff]
    %v2076 = vld [vmem:[%s2070 + $0x28] sm:$0xff]
    %v2077 = vld [vmem:[%s2070 + $0x30] sm:$0xff]
    %v2078 = vld [vmem:[%s2070 + $0x38] sm:$0xff]
    %v2079 = vpack.c.bf16 %v705, %v702
    %v2080 = vpack.c.bf16 %v713, %v710
    %v2081 = vpack.c.bf16 %v721, %v718
    %v2082 = vpack.c.bf16 %v729, %v726
    %2087 = vrot.lane.b32.xlu0 %v2079, 96
    %v2088 = vpop.permute.xlu0 %2087
    %2089 = vrot.lane.b32.xlu0 %v2080, 96
    %v2090 = vpop.permute.xlu0 %2089
    %2091 = vrot.lane.b32.xlu0 %v2081, 96
    %v2092 = vpop.permute.xlu0 %2091
    %2093 = vrot.lane.b32.xlu0 %v2082, 96
    %v2094 = vpop.permute.xlu0 %2093
    %v2096 = vsel %vm756, %v2079, 0
    %v2099 = vsel %vm756, %v2080, 0
    %v2102 = vsel %vm756, %v2081, 0
    %v2105 = vsel %vm756, %v2082, 0
    %v2108 = vsel %vm756, %v2088, 0
    %v2111 = vsel %vm756, %v2090, 0
    %v2114 = vsel %vm756, %v2092, 0
    %v2117 = vsel %vm756, %v2094, 0
    %2119 = vmatprep.subr.bf16.mxu0 0
    %2120 = vmatpush1.bf16.xpose.msra.mxu0 0
    %2121 = vmatprep.subr.bf16.mxu0 0
    %2122 = vmatpush1.bf16.xpose.msra.mxu0 0
    %2123 = vmatprep.subr.bf16.mxu0 0
    %2124 = vmatpush1.bf16.xpose.msra.mxu0 0
    %2125 = vmatprep.subr.bf16.mxu0 0
    %2126 = vmatpush1.bf16.xpose.msra.mxu0 0
    %2127 = vmatprep.subr.bf16.mxu0 0
    %2128 = vmatpush1.bf16.xpose.msra.mxu0 %v2117
    %2129 = vmatprep.subr.bf16.mxu0 0
    %2130 = vmatpush1.bf16.xpose.msra.mxu0 %v2114
    %2131 = vmatprep.subr.bf16.mxu0 0
    %2132 = vmatpush1.bf16.xpose.msra.mxu0 %v2111
    %2133 = vmatprep.subr.bf16.mxu0 0
    %2134 = vmatpush1.bf16.xpose.msra.mxu0 %v2108
    %2135 = vmatprep.subr.bf16.mxu0 0
    %2136 = vmatpush2.bf16.xpose.msra.mxu0 0
    %2137 = vmatprep.subr.bf16.mxu0 0
    %2138 = vmatpush2.bf16.xpose.msra.mxu0 0
    %2139 = vmatprep.subr.bf16.mxu0 0
    %2140 = vmatpush2.bf16.xpose.msra.mxu0 0
    %2141 = vmatprep.subr.bf16.mxu0 0
    %2142 = vmatpush2.bf16.xpose.msra.mxu0 0
    %2143 = vmatprep.subr.bf16.mxu0 0
    %2144 = vmatpush2.bf16.xpose.msra.mxu0 0
    %2145 = vmatprep.subr.bf16.mxu0 0
    %2146 = vmatpush2.bf16.xpose.msra.mxu0 0
    %2147 = vmatprep.subr.bf16.mxu0 0
    %2148 = vmatpush2.bf16.xpose.msra.mxu0 0
    %2149 = vmatprep.subr.bf16.mxu0 0
    %2150 = vmatpush2.bf16.xpose.msra.mxu0 0
    %2151 = vmatprep.mubr.bf16.mxu0 0
    %2152 = vmatmul.mubr.bf16.gmra.mxu0 %v2096
    %v2153 = vpop.f32.mrf.mxu0
    %v2154 = vadd.f32 %v2071, %v2153
    %v2155 = vpop.f32.mrf.mxu0
    %v2156 = vpop.f32.mrf.mxu0
    %v2157 = vadd.f32 %v2072, %v2156
    %v2158 = vpop.f32.mrf.mxu0
    %2159 = vmatprep.mubr.bf16.mxu0 0
    %2160 = vmatmul.mubr.bf16.gmra.mxu0 %v2099
    %v2161 = vpop.f32.mrf.mxu0
    %v2162 = vadd.f32 %v2073, %v2161
    %v2163 = vpop.f32.mrf.mxu0
    %v2164 = vpop.f32.mrf.mxu0
    %v2165 = vadd.f32 %v2074, %v2164
    %v2166 = vpop.f32.mrf.mxu0
    %2167 = vmatprep.mubr.bf16.mxu0 0
    %2168 = vmatmul.mubr.bf16.gmra.mxu0 %v2102
    %v2169 = vpop.f32.mrf.mxu0
    %v2170 = vadd.f32 %v2075, %v2169
    %v2171 = vpop.f32.mrf.mxu0
    %v2172 = vpop.f32.mrf.mxu0
    %v2173 = vadd.f32 %v2076, %v2172
    %v2174 = vpop.f32.mrf.mxu0
    %2175 = vmatprep.mubr.bf16.mxu0 0
    %2176 = vmatmul.mubr.bf16.gmra.mxu0 %v2105
    %v2177 = vpop.f32.mrf.mxu0
    %v2178 = vadd.f32 %v2077, %v2177
    %v2179 = vpop.f32.mrf.mxu0
    %v2180 = vpop.f32.mrf.mxu0
    %v2181 = vadd.f32 %v2078, %v2180
    %v2182 = vpop.f32.mrf.mxu0
    %2183 = vdwg.mxu0
    %v2184 = vsel %vm846, %v2154, -inf
    %2185 = vmax.xlane.f32.xlu0 %v2184
    %v2186 = vpop.xlane.xlu0 %2185
    %v2187 = vsel %vm846, %v2157, -inf
    %2188 = vmax.xlane.f32.xlu0 %v2187
    %v2189 = vpop.xlane.xlu0 %2188
    %v2190 = vsel %vm846, %v2162, -inf
    %2191 = vmax.xlane.f32.xlu0 %v2190
    %v2192 = vpop.xlane.xlu0 %2191
    %v2193 = vsel %vm846, %v2165, -inf
    %2194 = vmax.xlane.f32.xlu0 %v2193
    %v2195 = vpop.xlane.xlu0 %2194
    %v2196 = vsel %vm846, %v2170, -inf
    %2197 = vmax.xlane.f32.xlu0 %v2196
    %v2198 = vpop.xlane.xlu0 %2197
    %v2199 = vsel %vm846, %v2173, -inf
    %2200 = vmax.xlane.f32.xlu0 %v2199
    %v2201 = vpop.xlane.xlu0 %2200
    %v2202 = vsel %vm846, %v2178, -inf
    %2203 = vmax.xlane.f32.xlu0 %v2202
    %v2204 = vpop.xlane.xlu0 %2203
    %v2205 = vsel %vm846, %v2181, -inf
    %2206 = vmax.xlane.f32.xlu0 %v2205
    %v2207 = vpop.xlane.xlu0 %2206
    %v2208 = vsub.f32 %v2154, %v2186
    %v2209 = vsub.f32 %v2157, %v2189
    %v2210 = vsub.f32 %v2162, %v2192
    %v2211 = vsub.f32 %v2165, %v2195
    %v2212 = vsub.f32 %v2170, %v2198
    %v2213 = vsub.f32 %v2173, %v2201
    %v2214 = vsub.f32 %v2178, %v2204
    %v2215 = vsub.f32 %v2181, %v2207
    %v2216 = vmul.f32 %v2208, 1.442695
    %v2217 = vpow.pop %v2216
    %v2218 = vmul.f32 %v2209, 1.442695
    %v2219 = vpow.pop %v2218
    %v2220 = vmul.f32 %v2210, 1.442695
    %v2221 = vpow.pop %v2220
    %v2222 = vmul.f32 %v2211, 1.442695
    %v2223 = vpow.pop %v2222
    %v2224 = vmul.f32 %v2212, 1.442695
    %v2225 = vpow.pop %v2224
    %v2226 = vmul.f32 %v2213, 1.442695
    %v2227 = vpow.pop %v2226
    %v2228 = vmul.f32 %v2214, 1.442695
    %v2229 = vpow.pop %v2228
    %v2230 = vmul.f32 %v2215, 1.442695
    %v2231 = vpow.pop %v2230
    %v2232 = vsel %vm846, %v2217, 0.0
    %2233 = vadd.xlane.f32.xlu0 %v2232
    %v2234 = vpop.xlane.xlu0 %2233
    %v2235 = vsel %vm846, %v2219, 0.0
    %2236 = vadd.xlane.f32.xlu0 %v2235
    %v2237 = vpop.xlane.xlu0 %2236
    %v2238 = vsel %vm846, %v2221, 0.0
    %2239 = vadd.xlane.f32.xlu0 %v2238
    %v2240 = vpop.xlane.xlu0 %2239
    %v2241 = vsel %vm846, %v2223, 0.0
    %2242 = vadd.xlane.f32.xlu0 %v2241
    %v2243 = vpop.xlane.xlu0 %2242
    %v2244 = vsel %vm846, %v2225, 0.0
    %2245 = vadd.xlane.f32.xlu0 %v2244
    %v2246 = vpop.xlane.xlu0 %2245
    %v2247 = vsel %vm846, %v2227, 0.0
    %2248 = vadd.xlane.f32.xlu0 %v2247
    %v2249 = vpop.xlane.xlu0 %2248
    %v2250 = vsel %vm846, %v2229, 0.0
    %2251 = vadd.xlane.f32.xlu0 %v2250
    %v2252 = vpop.xlane.xlu0 %2251
    %v2253 = vsel %vm846, %v2231, 0.0
    %2254 = vadd.xlane.f32.xlu0 %v2253
    %v2255 = vpop.xlane.xlu0 %2254
    %v2256 = vpack.c.bf16 %v2219, %v2217
    %v2257 = vpack.c.bf16 %v2223, %v2221
    %v2258 = vpack.c.bf16 %v2227, %v2225
    %v2259 = vpack.c.bf16 %v2231, %v2229
    %v2261 = vsel %vm846, %v2256, 0
    %v2264 = vsel %vm846, %v2257, 0
    %v2267 = vsel %vm846, %v2258, 0
    %v2270 = vsel %vm846, %v2259, 0
    %2272 = vmatprep.subr.bf16.mxu0 0
    %2273 = vmatpush1.bf16.msra.mxu0 0
    %2274 = vmatprep.subr.bf16.mxu0 0
    %2275 = vmatpush1.bf16.msra.mxu0 0
    %2276 = vmatprep.subr.bf16.mxu0 0
    %2277 = vmatpush1.bf16.msra.mxu0 0
    %2278 = vmatprep.subr.bf16.mxu0 0
    %2279 = vmatpush1.bf16.msra.mxu0 0
    %2280 = vmatprep.subr.bf16.mxu0 0
    %2281 = vmatpush1.bf16.msra.mxu0 %v232
    %2282 = vmatprep.subr.bf16.mxu0 0
    %2283 = vmatpush1.bf16.msra.mxu0 %v231
    %2284 = vmatprep.subr.bf16.mxu0 0
    %2285 = vmatpush1.bf16.msra.mxu0 %v230
    %2286 = vmatprep.subr.bf16.mxu0 0
    %2287 = vmatpush1.bf16.msra.mxu0 %v229
    %2288 = vmatprep.subr.bf16.mxu0 0
    %2289 = vmatpush2.bf16.msra.mxu0 0
    %2290 = vmatprep.subr.bf16.mxu0 0
    %2291 = vmatpush2.bf16.msra.mxu0 0
    %2292 = vmatprep.subr.bf16.mxu0 0
    %2293 = vmatpush2.bf16.msra.mxu0 0
    %2294 = vmatprep.subr.bf16.mxu0 0
    %2295 = vmatpush2.bf16.msra.mxu0 0
    %2296 = vmatprep.subr.bf16.mxu0 0
    %2297 = vmatpush2.bf16.msra.mxu0 0
    %2298 = vmatprep.subr.bf16.mxu0 0
    %2299 = vmatpush2.bf16.msra.mxu0 0
    %2300 = vmatprep.subr.bf16.mxu0 0
    %2301 = vmatpush2.bf16.msra.mxu0 0
    %2302 = vmatprep.subr.bf16.mxu0 0
    %2303 = vmatpush2.bf16.msra.mxu0 0
    %2304 = vmatprep.mubr.bf16.mxu0 0
    %2305 = vmatmul.mubr.bf16.gmra.mxu0 %v2261
    %v2306 = vpop.f32.mrf.mxu0
    %v2307 = vadd.f32 0.0, %v2306
    %v2308 = vpop.f32.mrf.mxu0
    %v2309 = vpop.f32.mrf.mxu0
    %v2310 = vadd.f32 0.0, %v2309
    %v2311 = vpop.f32.mrf.mxu0
    %2312 = vmatprep.mubr.bf16.mxu0 0
    %2313 = vmatmul.mubr.bf16.gmra.mxu0 %v2264
    %v2314 = vpop.f32.mrf.mxu0
    %v2315 = vadd.f32 0.0, %v2314
    %v2316 = vpop.f32.mrf.mxu0
    %v2317 = vpop.f32.mrf.mxu0
    %v2318 = vadd.f32 0.0, %v2317
    %v2319 = vpop.f32.mrf.mxu0
    %2320 = vmatprep.mubr.bf16.mxu0 0
    %2321 = vmatmul.mubr.bf16.gmra.mxu0 %v2267
    %v2322 = vpop.f32.mrf.mxu0
    %v2323 = vadd.f32 0.0, %v2322
    %v2324 = vpop.f32.mrf.mxu0
    %v2325 = vpop.f32.mrf.mxu0
    %v2326 = vadd.f32 0.0, %v2325
    %v2327 = vpop.f32.mrf.mxu0
    %2328 = vmatprep.mubr.bf16.mxu0 0
    %2329 = vmatmul.mubr.bf16.gmra.mxu0 %v2270
    %v2330 = vpop.f32.mrf.mxu0
    %v2331 = vadd.f32 0.0, %v2330
    %v2332 = vpop.f32.mrf.mxu0
    %v2333 = vpop.f32.mrf.mxu0
    %v2334 = vadd.f32 0.0, %v2333
    %v2335 = vpop.f32.mrf.mxu0
    %2336 = vdwg.mxu0
    %v2337 = vrcp.pop %v2234
    %v2338 = vrcp.pop %v2237
    %v2339 = vrcp.pop %v2240
    %v2340 = vrcp.pop %v2243
    %v2341 = vrcp.pop %v2246
    %v2342 = vrcp.pop %v2249
    %v2343 = vrcp.pop %v2252
    %v2344 = vrcp.pop %v2255
    %v2345 = vmul.f32 %v2307, %v2337
    %v2346 = vmul.f32 %v2310, %v2338
    %v2347 = vmul.f32 %v2315, %v2339
    %v2348 = vmul.f32 %v2318, %v2340
    %v2349 = vmul.f32 %v2323, %v2341
    %v2350 = vmul.f32 %v2326, %v2342
    %v2351 = vmul.f32 %v2331, %v2343
    %v2352 = vmul.f32 %v2334, %v2344
    %2353 = vrot.lane.b32.xlu0 %v2079, 120
    %v2354 = vpop.permute.xlu0 %2353
    %2355 = vrot.lane.b32.xlu0 %v2080, 120
    %v2356 = vpop.permute.xlu0 %2355
    %2357 = vrot.lane.b32.xlu0 %v2081, 120
    %v2358 = vpop.permute.xlu0 %2357
    %2359 = vrot.lane.b32.xlu0 %v2082, 120
    %v2360 = vpop.permute.xlu0 %2359
    %2361 = vrot.lane.b32.xlu0 %v2079, 88
    %v2362 = vpop.permute.xlu0 %2361
    %2363 = vrot.lane.b32.xlu0 %v2080, 88
    %v2364 = vpop.permute.xlu0 %2363
    %2365 = vrot.lane.b32.xlu0 %v2081, 88
    %v2366 = vpop.permute.xlu0 %2365
    %2367 = vrot.lane.b32.xlu0 %v2082, 88
    %v2368 = vpop.permute.xlu0 %2367
    %v2370 = vsel %vm756, %v2354, 0
    %v2373 = vsel %vm756, %v2356, 0
    %v2376 = vsel %vm756, %v2358, 0
    %v2379 = vsel %vm756, %v2360, 0
    %v2382 = vsel %vm756, %v2362, 0
    %v2385 = vsel %vm756, %v2364, 0
    %v2388 = vsel %vm756, %v2366, 0
    %v2391 = vsel %vm756, %v2368, 0
    %2393 = vmatprep.subr.bf16.mxu0 0
    %2394 = vmatpush1.bf16.xpose.msra.mxu0 0
    %2395 = vmatprep.subr.bf16.mxu0 0
    %2396 = vmatpush1.bf16.xpose.msra.mxu0 0
    %2397 = vmatprep.subr.bf16.mxu0 0
    %2398 = vmatpush1.bf16.xpose.msra.mxu0 0
    %2399 = vmatprep.subr.bf16.mxu0 0
    %2400 = vmatpush1.bf16.xpose.msra.mxu0 0
    %2401 = vmatprep.subr.bf16.mxu0 0
    %2402 = vmatpush1.bf16.xpose.msra.mxu0 %v2391
    %2403 = vmatprep.subr.bf16.mxu0 0
    %2404 = vmatpush1.bf16.xpose.msra.mxu0 %v2388
    %2405 = vmatprep.subr.bf16.mxu0 0
    %2406 = vmatpush1.bf16.xpose.msra.mxu0 %v2385
    %2407 = vmatprep.subr.bf16.mxu0 0
    %2408 = vmatpush1.bf16.xpose.msra.mxu0 %v2382
    %2409 = vmatprep.subr.bf16.mxu0 0
    %2410 = vmatpush2.bf16.xpose.msra.mxu0 0
    %2411 = vmatprep.subr.bf16.mxu0 0
    %2412 = vmatpush2.bf16.xpose.msra.mxu0 0
    %2413 = vmatprep.subr.bf16.mxu0 0
    %2414 = vmatpush2.bf16.xpose.msra.mxu0 0
    %2415 = vmatprep.subr.bf16.mxu0 0
    %2416 = vmatpush2.bf16.xpose.msra.mxu0 0
    %2417 = vmatprep.subr.bf16.mxu0 0
    %2418 = vmatpush2.bf16.xpose.msra.mxu0 0
    %2419 = vmatprep.subr.bf16.mxu0 0
    %2420 = vmatpush2.bf16.xpose.msra.mxu0 0
    %2421 = vmatprep.subr.bf16.mxu0 0
    %2422 = vmatpush2.bf16.xpose.msra.mxu0 0
    %2423 = vmatprep.subr.bf16.mxu0 0
    %2424 = vmatpush2.bf16.xpose.msra.mxu0 0
    %2425 = vmatprep.mubr.bf16.mxu0 0
    %2426 = vmatmul.mubr.bf16.gmra.mxu0 %v2370
    %v2427 = vpop.f32.mrf.mxu0
    %v2428 = vadd.f32 %v2071, %v2427
    %v2429 = vpop.f32.mrf.mxu0
    %v2430 = vpop.f32.mrf.mxu0
    %v2431 = vadd.f32 %v2072, %v2430
    %v2432 = vpop.f32.mrf.mxu0
    %2433 = vmatprep.mubr.bf16.mxu0 0
    %2434 = vmatmul.mubr.bf16.gmra.mxu0 %v2373
    %v2435 = vpop.f32.mrf.mxu0
    %v2436 = vadd.f32 %v2073, %v2435
    %v2437 = vpop.f32.mrf.mxu0
    %v2438 = vpop.f32.mrf.mxu0
    %v2439 = vadd.f32 %v2074, %v2438
    %v2440 = vpop.f32.mrf.mxu0
    %2441 = vmatprep.mubr.bf16.mxu0 0
    %2442 = vmatmul.mubr.bf16.gmra.mxu0 %v2376
    %v2443 = vpop.f32.mrf.mxu0
    %v2444 = vadd.f32 %v2075, %v2443
    %v2445 = vpop.f32.mrf.mxu0
    %v2446 = vpop.f32.mrf.mxu0
    %v2447 = vadd.f32 %v2076, %v2446
    %v2448 = vpop.f32.mrf.mxu0
    %2449 = vmatprep.mubr.bf16.mxu0 0
    %2450 = vmatmul.mubr.bf16.gmra.mxu0 %v2379
    %v2451 = vpop.f32.mrf.mxu0
    %v2452 = vadd.f32 %v2077, %v2451
    %v2453 = vpop.f32.mrf.mxu0
    %v2454 = vpop.f32.mrf.mxu0
    %v2455 = vadd.f32 %v2078, %v2454
    %v2456 = vpop.f32.mrf.mxu0
    %2457 = vdwg.mxu0
    %v2458 = vsel %vm846, %v2428, -inf
    %2459 = vmax.xlane.f32.xlu0 %v2458
    %v2460 = vpop.xlane.xlu0 %2459
    %v2461 = vsel %vm846, %v2431, -inf
    %2462 = vmax.xlane.f32.xlu0 %v2461
    %v2463 = vpop.xlane.xlu0 %2462
    %v2464 = vsel %vm846, %v2436, -inf
    %2465 = vmax.xlane.f32.xlu0 %v2464
    %v2466 = vpop.xlane.xlu0 %2465
    %v2467 = vsel %vm846, %v2439, -inf
    %2468 = vmax.xlane.f32.xlu0 %v2467
    %v2469 = vpop.xlane.xlu0 %2468
    %v2470 = vsel %vm846, %v2444, -inf
    %2471 = vmax.xlane.f32.xlu0 %v2470
    %v2472 = vpop.xlane.xlu0 %2471
    %v2473 = vsel %vm846, %v2447, -inf
    %2474 = vmax.xlane.f32.xlu0 %v2473
    %v2475 = vpop.xlane.xlu0 %2474
    %v2476 = vsel %vm846, %v2452, -inf
    %2477 = vmax.xlane.f32.xlu0 %v2476
    %v2478 = vpop.xlane.xlu0 %2477
    %v2479 = vsel %vm846, %v2455, -inf
    %2480 = vmax.xlane.f32.xlu0 %v2479
    %v2481 = vpop.xlane.xlu0 %2480
    %v2482 = vsub.f32 %v2428, %v2460
    %v2483 = vsub.f32 %v2431, %v2463
    %v2484 = vsub.f32 %v2436, %v2466
    %v2485 = vsub.f32 %v2439, %v2469
    %v2486 = vsub.f32 %v2444, %v2472
    %v2487 = vsub.f32 %v2447, %v2475
    %v2488 = vsub.f32 %v2452, %v2478
    %v2489 = vsub.f32 %v2455, %v2481
    %v2490 = vmul.f32 %v2482, 1.442695
    %v2491 = vpow.pop %v2490
    %v2492 = vmul.f32 %v2483, 1.442695
    %v2493 = vpow.pop %v2492
    %v2494 = vmul.f32 %v2484, 1.442695
    %v2495 = vpow.pop %v2494
    %v2496 = vmul.f32 %v2485, 1.442695
    %v2497 = vpow.pop %v2496
    %v2498 = vmul.f32 %v2486, 1.442695
    %v2499 = vpow.pop %v2498
    %v2500 = vmul.f32 %v2487, 1.442695
    %v2501 = vpow.pop %v2500
    %v2502 = vmul.f32 %v2488, 1.442695
    %v2503 = vpow.pop %v2502
    %v2504 = vmul.f32 %v2489, 1.442695
    %v2505 = vpow.pop %v2504
    %v2506 = vsel %vm846, %v2491, 0.0
    %2507 = vadd.xlane.f32.xlu0 %v2506
    %v2508 = vpop.xlane.xlu0 %2507
    %v2509 = vsel %vm846, %v2493, 0.0
    %2510 = vadd.xlane.f32.xlu0 %v2509
    %v2511 = vpop.xlane.xlu0 %2510
    %v2512 = vsel %vm846, %v2495, 0.0
    %2513 = vadd.xlane.f32.xlu0 %v2512
    %v2514 = vpop.xlane.xlu0 %2513
    %v2515 = vsel %vm846, %v2497, 0.0
    %2516 = vadd.xlane.f32.xlu0 %v2515
    %v2517 = vpop.xlane.xlu0 %2516
    %v2518 = vsel %vm846, %v2499, 0.0
    %2519 = vadd.xlane.f32.xlu0 %v2518
    %v2520 = vpop.xlane.xlu0 %2519
    %v2521 = vsel %vm846, %v2501, 0.0
    %2522 = vadd.xlane.f32.xlu0 %v2521
    %v2523 = vpop.xlane.xlu0 %2522
    %v2524 = vsel %vm846, %v2503, 0.0
    %2525 = vadd.xlane.f32.xlu0 %v2524
    %v2526 = vpop.xlane.xlu0 %2525
    %v2527 = vsel %vm846, %v2505, 0.0
    %2528 = vadd.xlane.f32.xlu0 %v2527
    %v2529 = vpop.xlane.xlu0 %2528
    %v2530 = vpack.c.bf16 %v2493, %v2491
    %v2531 = vpack.c.bf16 %v2497, %v2495
    %v2532 = vpack.c.bf16 %v2501, %v2499
    %v2533 = vpack.c.bf16 %v2505, %v2503
    %2538 = vrot.lane.b32.xlu0 %v229, 120
    %v2539 = vpop.permute.xlu0 %2538
    %2540 = vrot.lane.b32.xlu0 %v230, 120
    %v2541 = vpop.permute.xlu0 %2540
    %2542 = vrot.lane.b32.xlu0 %v231, 120
    %v2543 = vpop.permute.xlu0 %2542
    %2544 = vrot.lane.b32.xlu0 %v232, 120
    %v2545 = vpop.permute.xlu0 %2544
    %v2551 = vsel %vm846, %v2530, 0
    %v2554 = vsel %vm846, %v2531, 0
    %v2557 = vsel %vm846, %v2532, 0
    %v2560 = vsel %vm846, %v2533, 0
    %2562 = vmatprep.subr.bf16.mxu0 0
    %2563 = vmatpush1.bf16.msra.mxu0 0
    %2564 = vmatprep.subr.bf16.mxu0 0
    %2565 = vmatpush1.bf16.msra.mxu0 0
    %2566 = vmatprep.subr.bf16.mxu0 0
    %2567 = vmatpush1.bf16.msra.mxu0 0
    %2568 = vmatprep.subr.bf16.mxu0 0
    %2569 = vmatpush1.bf16.msra.mxu0 0
    %2570 = vmatprep.subr.bf16.mxu0 0
    %2571 = vmatpush1.bf16.msra.mxu0 %v2545
    %2572 = vmatprep.subr.bf16.mxu0 0
    %2573 = vmatpush1.bf16.msra.mxu0 %v2543
    %2574 = vmatprep.subr.bf16.mxu0 0
    %2575 = vmatpush1.bf16.msra.mxu0 %v2541
    %2576 = vmatprep.subr.bf16.mxu0 0
    %2577 = vmatpush1.bf16.msra.mxu0 %v2539
    %2578 = vmatprep.subr.bf16.mxu0 0
    %2579 = vmatpush2.bf16.msra.mxu0 0
    %2580 = vmatprep.subr.bf16.mxu0 0
    %2581 = vmatpush2.bf16.msra.mxu0 0
    %2582 = vmatprep.subr.bf16.mxu0 0
    %2583 = vmatpush2.bf16.msra.mxu0 0
    %2584 = vmatprep.subr.bf16.mxu0 0
    %2585 = vmatpush2.bf16.msra.mxu0 0
    %2586 = vmatprep.subr.bf16.mxu0 0
    %2587 = vmatpush2.bf16.msra.mxu0 0
    %2588 = vmatprep.subr.bf16.mxu0 0
    %2589 = vmatpush2.bf16.msra.mxu0 0
    %2590 = vmatprep.subr.bf16.mxu0 0
    %2591 = vmatpush2.bf16.msra.mxu0 0
    %2592 = vmatprep.subr.bf16.mxu0 0
    %2593 = vmatpush2.bf16.msra.mxu0 0
    %2594 = vmatprep.mubr.bf16.mxu0 0
    %2595 = vmatmul.mubr.bf16.gmra.mxu0 %v2551
    %v2596 = vpop.f32.mrf.mxu0
    %v2597 = vadd.f32 0.0, %v2596
    %v2598 = vpop.f32.mrf.mxu0
    %v2599 = vpop.f32.mrf.mxu0
    %v2600 = vadd.f32 0.0, %v2599
    %v2601 = vpop.f32.mrf.mxu0
    %2602 = vmatprep.mubr.bf16.mxu0 0
    %2603 = vmatmul.mubr.bf16.gmra.mxu0 %v2554
    %v2604 = vpop.f32.mrf.mxu0
    %v2605 = vadd.f32 0.0, %v2604
    %v2606 = vpop.f32.mrf.mxu0
    %v2607 = vpop.f32.mrf.mxu0
    %v2608 = vadd.f32 0.0, %v2607
    %v2609 = vpop.f32.mrf.mxu0
    %2610 = vmatprep.mubr.bf16.mxu0 0
    %2611 = vmatmul.mubr.bf16.gmra.mxu0 %v2557
    %v2612 = vpop.f32.mrf.mxu0
    %v2613 = vadd.f32 0.0, %v2612
    %v2614 = vpop.f32.mrf.mxu0
    %v2615 = vpop.f32.mrf.mxu0
    %v2616 = vadd.f32 0.0, %v2615
    %v2617 = vpop.f32.mrf.mxu0
    %2618 = vmatprep.mubr.bf16.mxu0 0
    %2619 = vmatmul.mubr.bf16.gmra.mxu0 %v2560
    %v2620 = vpop.f32.mrf.mxu0
    %v2621 = vadd.f32 0.0, %v2620
    %v2622 = vpop.f32.mrf.mxu0
    %v2623 = vpop.f32.mrf.mxu0
    %v2624 = vadd.f32 0.0, %v2623
    %v2625 = vpop.f32.mrf.mxu0
    %2626 = vdwg.mxu0
    %v2627 = vrcp.pop %v2508
    %v2628 = vrcp.pop %v2511
    %v2629 = vrcp.pop %v2514
    %v2630 = vrcp.pop %v2517
    %v2631 = vrcp.pop %v2520
    %v2632 = vrcp.pop %v2523
    %v2633 = vrcp.pop %v2526
    %v2634 = vrcp.pop %v2529
    %v2635 = vmul.f32 %v2597, %v2627
    %v2636 = vmul.f32 %v2600, %v2628
    %v2637 = vmul.f32 %v2605, %v2629
    %v2638 = vmul.f32 %v2608, %v2630
    %v2639 = vmul.f32 %v2613, %v2631
    %v2640 = vmul.f32 %v2616, %v2632
    %v2641 = vmul.f32 %v2621, %v2633
    %v2642 = vmul.f32 %v2624, %v2634
    %2643 = vrot.lane.b32.xlu0 %v2079, 112
    %v2644 = vpop.permute.xlu0 %2643
    %2645 = vrot.lane.b32.xlu0 %v2080, 112
    %v2646 = vpop.permute.xlu0 %2645
    %2647 = vrot.lane.b32.xlu0 %v2081, 112
    %v2648 = vpop.permute.xlu0 %2647
    %2649 = vrot.lane.b32.xlu0 %v2082, 112
    %v2650 = vpop.permute.xlu0 %2649
    %2651 = vrot.lane.b32.xlu0 %v2079, 80
    %v2652 = vpop.permute.xlu0 %2651
    %2653 = vrot.lane.b32.xlu0 %v2080, 80
    %v2654 = vpop.permute.xlu0 %2653
    %2655 = vrot.lane.b32.xlu0 %v2081, 80
    %v2656 = vpop.permute.xlu0 %2655
    %2657 = vrot.lane.b32.xlu0 %v2082, 80
    %v2658 = vpop.permute.xlu0 %2657
    %v2660 = vsel %vm756, %v2644, 0
    %v2663 = vsel %vm756, %v2646, 0
    %v2666 = vsel %vm756, %v2648, 0
    %v2669 = vsel %vm756, %v2650, 0
    %v2672 = vsel %vm756, %v2652, 0
    %v2675 = vsel %vm756, %v2654, 0
    %v2678 = vsel %vm756, %v2656, 0
    %v2681 = vsel %vm756, %v2658, 0
    %2683 = vmatprep.subr.bf16.mxu0 0
    %2684 = vmatpush1.bf16.xpose.msra.mxu0 0
    %2685 = vmatprep.subr.bf16.mxu0 0
    %2686 = vmatpush1.bf16.xpose.msra.mxu0 0
    %2687 = vmatprep.subr.bf16.mxu0 0
    %2688 = vmatpush1.bf16.xpose.msra.mxu0 0
    %2689 = vmatprep.subr.bf16.mxu0 0
    %2690 = vmatpush1.bf16.xpose.msra.mxu0 0
    %2691 = vmatprep.subr.bf16.mxu0 0
    %2692 = vmatpush1.bf16.xpose.msra.mxu0 %v2681
    %2693 = vmatprep.subr.bf16.mxu0 0
    %2694 = vmatpush1.bf16.xpose.msra.mxu0 %v2678
    %2695 = vmatprep.subr.bf16.mxu0 0
    %2696 = vmatpush1.bf16.xpose.msra.mxu0 %v2675
    %2697 = vmatprep.subr.bf16.mxu0 0
    %2698 = vmatpush1.bf16.xpose.msra.mxu0 %v2672
    %2699 = vmatprep.subr.bf16.mxu0 0
    %2700 = vmatpush2.bf16.xpose.msra.mxu0 0
    %2701 = vmatprep.subr.bf16.mxu0 0
    %2702 = vmatpush2.bf16.xpose.msra.mxu0 0
    %2703 = vmatprep.subr.bf16.mxu0 0
    %2704 = vmatpush2.bf16.xpose.msra.mxu0 0
    %2705 = vmatprep.subr.bf16.mxu0 0
    %2706 = vmatpush2.bf16.xpose.msra.mxu0 0
    %2707 = vmatprep.subr.bf16.mxu0 0
    %2708 = vmatpush2.bf16.xpose.msra.mxu0 0
    %2709 = vmatprep.subr.bf16.mxu0 0
    %2710 = vmatpush2.bf16.xpose.msra.mxu0 0
    %2711 = vmatprep.subr.bf16.mxu0 0
    %2712 = vmatpush2.bf16.xpose.msra.mxu0 0
    %2713 = vmatprep.subr.bf16.mxu0 0
    %2714 = vmatpush2.bf16.xpose.msra.mxu0 0
    %2715 = vmatprep.mubr.bf16.mxu0 0
    %2716 = vmatmul.mubr.bf16.gmra.mxu0 %v2660
    %v2717 = vpop.f32.mrf.mxu0
    %v2718 = vadd.f32 %v2071, %v2717
    %v2719 = vpop.f32.mrf.mxu0
    %v2720 = vpop.f32.mrf.mxu0
    %v2721 = vadd.f32 %v2072, %v2720
    %v2722 = vpop.f32.mrf.mxu0
    %2723 = vmatprep.mubr.bf16.mxu0 0
    %2724 = vmatmul.mubr.bf16.gmra.mxu0 %v2663
    %v2725 = vpop.f32.mrf.mxu0
    %v2726 = vadd.f32 %v2073, %v2725
    %v2727 = vpop.f32.mrf.mxu0
    %v2728 = vpop.f32.mrf.mxu0
    %v2729 = vadd.f32 %v2074, %v2728
    %v2730 = vpop.f32.mrf.mxu0
    %2731 = vmatprep.mubr.bf16.mxu0 0
    %2732 = vmatmul.mubr.bf16.gmra.mxu0 %v2666
    %v2733 = vpop.f32.mrf.mxu0
    %v2734 = vadd.f32 %v2075, %v2733
    %v2735 = vpop.f32.mrf.mxu0
    %v2736 = vpop.f32.mrf.mxu0
    %v2737 = vadd.f32 %v2076, %v2736
    %v2738 = vpop.f32.mrf.mxu0
    %2739 = vmatprep.mubr.bf16.mxu0 0
    %2740 = vmatmul.mubr.bf16.gmra.mxu0 %v2669
    %v2741 = vpop.f32.mrf.mxu0
    %v2742 = vadd.f32 %v2077, %v2741
    %v2743 = vpop.f32.mrf.mxu0
    %v2744 = vpop.f32.mrf.mxu0
    %v2745 = vadd.f32 %v2078, %v2744
    %v2746 = vpop.f32.mrf.mxu0
    %2747 = vdwg.mxu0
    %v2748 = vsel %vm846, %v2718, -inf
    %2749 = vmax.xlane.f32.xlu0 %v2748
    %v2750 = vpop.xlane.xlu0 %2749
    %v2751 = vsel %vm846, %v2721, -inf
    %2752 = vmax.xlane.f32.xlu0 %v2751
    %v2753 = vpop.xlane.xlu0 %2752
    %v2754 = vsel %vm846, %v2726, -inf
    %2755 = vmax.xlane.f32.xlu0 %v2754
    %v2756 = vpop.xlane.xlu0 %2755
    %v2757 = vsel %vm846, %v2729, -inf
    %2758 = vmax.xlane.f32.xlu0 %v2757
    %v2759 = vpop.xlane.xlu0 %2758
    %v2760 = vsel %vm846, %v2734, -inf
    %2761 = vmax.xlane.f32.xlu0 %v2760
    %v2762 = vpop.xlane.xlu0 %2761
    %v2763 = vsel %vm846, %v2737, -inf
    %2764 = vmax.xlane.f32.xlu0 %v2763
    %v2765 = vpop.xlane.xlu0 %2764
    %v2766 = vsel %vm846, %v2742, -inf
    %2767 = vmax.xlane.f32.xlu0 %v2766
    %v2768 = vpop.xlane.xlu0 %2767
    %v2769 = vsel %vm846, %v2745, -inf
    %2770 = vmax.xlane.f32.xlu0 %v2769
    %v2771 = vpop.xlane.xlu0 %2770
    %v2772 = vsub.f32 %v2718, %v2750
    %v2773 = vsub.f32 %v2721, %v2753
    %v2774 = vsub.f32 %v2726, %v2756
    %v2775 = vsub.f32 %v2729, %v2759
    %v2776 = vsub.f32 %v2734, %v2762
    %v2777 = vsub.f32 %v2737, %v2765
    %v2778 = vsub.f32 %v2742, %v2768
    %v2779 = vsub.f32 %v2745, %v2771
    %v2780 = vmul.f32 %v2772, 1.442695
    %v2781 = vpow.pop %v2780
    %v2782 = vmul.f32 %v2773, 1.442695
    %v2783 = vpow.pop %v2782
    %v2784 = vmul.f32 %v2774, 1.442695
    %v2785 = vpow.pop %v2784
    %v2786 = vmul.f32 %v2775, 1.442695
    %v2787 = vpow.pop %v2786
    %v2788 = vmul.f32 %v2776, 1.442695
    %v2789 = vpow.pop %v2788
    %v2790 = vmul.f32 %v2777, 1.442695
    %v2791 = vpow.pop %v2790
    %v2792 = vmul.f32 %v2778, 1.442695
    %v2793 = vpow.pop %v2792
    %v2794 = vmul.f32 %v2779, 1.442695
    %v2795 = vpow.pop %v2794
    %v2796 = vsel %vm846, %v2781, 0.0
    %2797 = vadd.xlane.f32.xlu0 %v2796
    %v2798 = vpop.xlane.xlu0 %2797
    %v2799 = vsel %vm846, %v2783, 0.0
    %2800 = vadd.xlane.f32.xlu0 %v2799
    %v2801 = vpop.xlane.xlu0 %2800
    %v2802 = vsel %vm846, %v2785, 0.0
    %2803 = vadd.xlane.f32.xlu0 %v2802
    %v2804 = vpop.xlane.xlu0 %2803
    %v2805 = vsel %vm846, %v2787, 0.0
    %2806 = vadd.xlane.f32.xlu0 %v2805
    %v2807 = vpop.xlane.xlu0 %2806
    %v2808 = vsel %vm846, %v2789, 0.0
    %2809 = vadd.xlane.f32.xlu0 %v2808
    %v2810 = vpop.xlane.xlu0 %2809
    %v2811 = vsel %vm846, %v2791, 0.0
    %2812 = vadd.xlane.f32.xlu0 %v2811
    %v2813 = vpop.xlane.xlu0 %2812
    %v2814 = vsel %vm846, %v2793, 0.0
    %2815 = vadd.xlane.f32.xlu0 %v2814
    %v2816 = vpop.xlane.xlu0 %2815
    %v2817 = vsel %vm846, %v2795, 0.0
    %2818 = vadd.xlane.f32.xlu0 %v2817
    %v2819 = vpop.xlane.xlu0 %2818
    %v2820 = vpack.c.bf16 %v2783, %v2781
    %v2821 = vpack.c.bf16 %v2787, %v2785
    %v2822 = vpack.c.bf16 %v2791, %v2789
    %v2823 = vpack.c.bf16 %v2795, %v2793
    %2824 = vrot.lane.b32.xlu0 %v229, 112
    %v2825 = vpop.permute.xlu0 %2824
    %2826 = vrot.lane.b32.xlu0 %v230, 112
    %v2827 = vpop.permute.xlu0 %2826
    %2828 = vrot.lane.b32.xlu0 %v231, 112
    %v2829 = vpop.permute.xlu0 %2828
    %2830 = vrot.lane.b32.xlu0 %v232, 112
    %v2831 = vpop.permute.xlu0 %2830
    %v2837 = vsel %vm846, %v2820, 0
    %v2840 = vsel %vm846, %v2821, 0
    %v2843 = vsel %vm846, %v2822, 0
    %v2846 = vsel %vm846, %v2823, 0
    %2848 = vmatprep.subr.bf16.mxu0 0
    %2849 = vmatpush1.bf16.msra.mxu0 0
    %2850 = vmatprep.subr.bf16.mxu0 0
    %2851 = vmatpush1.bf16.msra.mxu0 0
    %2852 = vmatprep.subr.bf16.mxu0 0
    %2853 = vmatpush1.bf16.msra.mxu0 0
    %2854 = vmatprep.subr.bf16.mxu0 0
    %2855 = vmatpush1.bf16.msra.mxu0 0
    %2856 = vmatprep.subr.bf16.mxu0 0
    %2857 = vmatpush1.bf16.msra.mxu0 %v2831
    %2858 = vmatprep.subr.bf16.mxu0 0
    %2859 = vmatpush1.bf16.msra.mxu0 %v2829
    %2860 = vmatprep.subr.bf16.mxu0 0
    %2861 = vmatpush1.bf16.msra.mxu0 %v2827
    %2862 = vmatprep.subr.bf16.mxu0 0
    %2863 = vmatpush1.bf16.msra.mxu0 %v2825
    %2864 = vmatprep.subr.bf16.mxu0 0
    %2865 = vmatpush2.bf16.msra.mxu0 0
    %2866 = vmatprep.subr.bf16.mxu0 0
    %2867 = vmatpush2.bf16.msra.mxu0 0
    %2868 = vmatprep.subr.bf16.mxu0 0
    %2869 = vmatpush2.bf16.msra.mxu0 0
    %2870 = vmatprep.subr.bf16.mxu0 0
    %2871 = vmatpush2.bf16.msra.mxu0 0
    %2872 = vmatprep.subr.bf16.mxu0 0
    %2873 = vmatpush2.bf16.msra.mxu0 0
    %2874 = vmatprep.subr.bf16.mxu0 0
    %2875 = vmatpush2.bf16.msra.mxu0 0
    %2876 = vmatprep.subr.bf16.mxu0 0
    %2877 = vmatpush2.bf16.msra.mxu0 0
    %2878 = vmatprep.subr.bf16.mxu0 0
    %2879 = vmatpush2.bf16.msra.mxu0 0
    %2880 = vmatprep.mubr.bf16.mxu0 0
    %2881 = vmatmul.mubr.bf16.gmra.mxu0 %v2837
    %v2882 = vpop.f32.mrf.mxu0
    %v2883 = vadd.f32 0.0, %v2882
    %v2884 = vpop.f32.mrf.mxu0
    %v2885 = vpop.f32.mrf.mxu0
    %v2886 = vadd.f32 0.0, %v2885
    %v2887 = vpop.f32.mrf.mxu0
    %2888 = vmatprep.mubr.bf16.mxu0 0
    %2889 = vmatmul.mubr.bf16.gmra.mxu0 %v2840
    %v2890 = vpop.f32.mrf.mxu0
    %v2891 = vadd.f32 0.0, %v2890
    %v2892 = vpop.f32.mrf.mxu0
    %v2893 = vpop.f32.mrf.mxu0
    %v2894 = vadd.f32 0.0, %v2893
    %v2895 = vpop.f32.mrf.mxu0
    %2896 = vmatprep.mubr.bf16.mxu0 0
    %2897 = vmatmul.mubr.bf16.gmra.mxu0 %v2843
    %v2898 = vpop.f32.mrf.mxu0
    %v2899 = vadd.f32 0.0, %v2898
    %v2900 = vpop.f32.mrf.mxu0
    %v2901 = vpop.f32.mrf.mxu0
    %v2902 = vadd.f32 0.0, %v2901
    %v2903 = vpop.f32.mrf.mxu0
    %2904 = vmatprep.mubr.bf16.mxu0 0
    %2905 = vmatmul.mubr.bf16.gmra.mxu0 %v2846
    %v2906 = vpop.f32.mrf.mxu0
    %v2907 = vadd.f32 0.0, %v2906
    %v2908 = vpop.f32.mrf.mxu0
    %v2909 = vpop.f32.mrf.mxu0
    %v2910 = vadd.f32 0.0, %v2909
    %v2911 = vpop.f32.mrf.mxu0
    %2912 = vdwg.mxu0
    %v2913 = vrcp.pop %v2798
    %v2914 = vrcp.pop %v2801
    %v2915 = vrcp.pop %v2804
    %v2916 = vrcp.pop %v2807
    %v2917 = vrcp.pop %v2810
    %v2918 = vrcp.pop %v2813
    %v2919 = vrcp.pop %v2816
    %v2920 = vrcp.pop %v2819
    %v2921 = vmul.f32 %v2883, %v2913
    %v2922 = vmul.f32 %v2886, %v2914
    %v2923 = vmul.f32 %v2891, %v2915
    %v2924 = vmul.f32 %v2894, %v2916
    %v2925 = vmul.f32 %v2899, %v2917
    %v2926 = vmul.f32 %v2902, %v2918
    %v2927 = vmul.f32 %v2907, %v2919
    %v2928 = vmul.f32 %v2910, %v2920
    %2929 = vrot.lane.b32.xlu0 %v2079, 104
    %v2930 = vpop.permute.xlu0 %2929
    %2931 = vrot.lane.b32.xlu0 %v2080, 104
    %v2932 = vpop.permute.xlu0 %2931
    %2933 = vrot.lane.b32.xlu0 %v2081, 104
    %v2934 = vpop.permute.xlu0 %2933
    %2935 = vrot.lane.b32.xlu0 %v2082, 104
    %v2936 = vpop.permute.xlu0 %2935
    %2937 = vrot.lane.b32.xlu0 %v2079, 72
    %v2938 = vpop.permute.xlu0 %2937
    %2939 = vrot.lane.b32.xlu0 %v2080, 72
    %v2940 = vpop.permute.xlu0 %2939
    %2941 = vrot.lane.b32.xlu0 %v2081, 72
    %v2942 = vpop.permute.xlu0 %2941
    %2943 = vrot.lane.b32.xlu0 %v2082, 72
    %v2944 = vpop.permute.xlu0 %2943
    %v2946 = vsel %vm756, %v2930, 0
    %v2949 = vsel %vm756, %v2932, 0
    %v2952 = vsel %vm756, %v2934, 0
    %v2955 = vsel %vm756, %v2936, 0
    %v2958 = vsel %vm756, %v2938, 0
    %v2961 = vsel %vm756, %v2940, 0
    %v2964 = vsel %vm756, %v2942, 0
    %v2967 = vsel %vm756, %v2944, 0
    %2969 = vmatprep.subr.bf16.mxu0 0
    %2970 = vmatpush1.bf16.xpose.msra.mxu0 0
    %2971 = vmatprep.subr.bf16.mxu0 0
    %2972 = vmatpush1.bf16.xpose.msra.mxu0 0
    %2973 = vmatprep.subr.bf16.mxu0 0
    %2974 = vmatpush1.bf16.xpose.msra.mxu0 0
    %2975 = vmatprep.subr.bf16.mxu0 0
    %2976 = vmatpush1.bf16.xpose.msra.mxu0 0
    %2977 = vmatprep.subr.bf16.mxu0 0
    %2978 = vmatpush1.bf16.xpose.msra.mxu0 %v2967
    %2979 = vmatprep.subr.bf16.mxu0 0
    %2980 = vmatpush1.bf16.xpose.msra.mxu0 %v2964
    %2981 = vmatprep.subr.bf16.mxu0 0
    %2982 = vmatpush1.bf16.xpose.msra.mxu0 %v2961
    %2983 = vmatprep.subr.bf16.mxu0 0
    %2984 = vmatpush1.bf16.xpose.msra.mxu0 %v2958
    %2985 = vmatprep.subr.bf16.mxu0 0
    %2986 = vmatpush2.bf16.xpose.msra.mxu0 0
    %2987 = vmatprep.subr.bf16.mxu0 0
    %2988 = vmatpush2.bf16.xpose.msra.mxu0 0
    %2989 = vmatprep.subr.bf16.mxu0 0
    %2990 = vmatpush2.bf16.xpose.msra.mxu0 0
    %2991 = vmatprep.subr.bf16.mxu0 0
    %2992 = vmatpush2.bf16.xpose.msra.mxu0 0
    %2993 = vmatprep.subr.bf16.mxu0 0
    %2994 = vmatpush2.bf16.xpose.msra.mxu0 0
    %2995 = vmatprep.subr.bf16.mxu0 0
    %2996 = vmatpush2.bf16.xpose.msra.mxu0 0
    %2997 = vmatprep.subr.bf16.mxu0 0
    %2998 = vmatpush2.bf16.xpose.msra.mxu0 0
    %2999 = vmatprep.subr.bf16.mxu0 0
    %3000 = vmatpush2.bf16.xpose.msra.mxu0 0
    %3001 = vmatprep.mubr.bf16.mxu0 0
    %3002 = vmatmul.mubr.bf16.gmra.mxu0 %v2946
    %v3003 = vpop.f32.mrf.mxu0
    %v3004 = vadd.f32 %v2071, %v3003
    %v3005 = vpop.f32.mrf.mxu0
    %v3006 = vpop.f32.mrf.mxu0
    %v3007 = vadd.f32 %v2072, %v3006
    %v3008 = vpop.f32.mrf.mxu0
    %3009 = vmatprep.mubr.bf16.mxu0 0
    %3010 = vmatmul.mubr.bf16.gmra.mxu0 %v2949
    %v3011 = vpop.f32.mrf.mxu0
    %v3012 = vadd.f32 %v2073, %v3011
    %v3013 = vpop.f32.mrf.mxu0
    %v3014 = vpop.f32.mrf.mxu0
    %v3015 = vadd.f32 %v2074, %v3014
    %v3016 = vpop.f32.mrf.mxu0
    %3017 = vmatprep.mubr.bf16.mxu0 0
    %3018 = vmatmul.mubr.bf16.gmra.mxu0 %v2952
    %v3019 = vpop.f32.mrf.mxu0
    %v3020 = vadd.f32 %v2075, %v3019
    %v3021 = vpop.f32.mrf.mxu0
    %v3022 = vpop.f32.mrf.mxu0
    %v3023 = vadd.f32 %v2076, %v3022
    %v3024 = vpop.f32.mrf.mxu0
    %3025 = vmatprep.mubr.bf16.mxu0 0
    %3026 = vmatmul.mubr.bf16.gmra.mxu0 %v2955
    %v3027 = vpop.f32.mrf.mxu0
    %v3028 = vadd.f32 %v2077, %v3027
    %v3029 = vpop.f32.mrf.mxu0
    %v3030 = vpop.f32.mrf.mxu0
    %v3031 = vadd.f32 %v2078, %v3030
    %v3032 = vpop.f32.mrf.mxu0
    %3033 = vdwg.mxu0
    %v3034 = vsel %vm846, %v3004, -inf
    %3035 = vmax.xlane.f32.xlu0 %v3034
    %v3036 = vpop.xlane.xlu0 %3035
    %v3037 = vsel %vm846, %v3007, -inf
    %3038 = vmax.xlane.f32.xlu0 %v3037
    %v3039 = vpop.xlane.xlu0 %3038
    %v3040 = vsel %vm846, %v3012, -inf
    %3041 = vmax.xlane.f32.xlu0 %v3040
    %v3042 = vpop.xlane.xlu0 %3041
    %v3043 = vsel %vm846, %v3015, -inf
    %3044 = vmax.xlane.f32.xlu0 %v3043
    %v3045 = vpop.xlane.xlu0 %3044
    %v3046 = vsel %vm846, %v3020, -inf
    %3047 = vmax.xlane.f32.xlu0 %v3046
    %v3048 = vpop.xlane.xlu0 %3047
    %v3049 = vsel %vm846, %v3023, -inf
    %3050 = vmax.xlane.f32.xlu0 %v3049
    %v3051 = vpop.xlane.xlu0 %3050
    %v3052 = vsel %vm846, %v3028, -inf
    %3053 = vmax.xlane.f32.xlu0 %v3052
    %v3054 = vpop.xlane.xlu0 %3053
    %v3055 = vsel %vm846, %v3031, -inf
    %3056 = vmax.xlane.f32.xlu0 %v3055
    %v3057 = vpop.xlane.xlu0 %3056
    %v3058 = vsub.f32 %v3004, %v3036
    %v3059 = vsub.f32 %v3007, %v3039
    %v3060 = vsub.f32 %v3012, %v3042
    %v3061 = vsub.f32 %v3015, %v3045
    %v3062 = vsub.f32 %v3020, %v3048
    %v3063 = vsub.f32 %v3023, %v3051
    %v3064 = vsub.f32 %v3028, %v3054
    %v3065 = vsub.f32 %v3031, %v3057
    %v3066 = vmul.f32 %v3058, 1.442695
    %v3067 = vpow.pop %v3066
    %v3068 = vmul.f32 %v3059, 1.442695
    %v3069 = vpow.pop %v3068
    %v3070 = vmul.f32 %v3060, 1.442695
    %v3071 = vpow.pop %v3070
    %v3072 = vmul.f32 %v3061, 1.442695
    %v3073 = vpow.pop %v3072
    %v3074 = vmul.f32 %v3062, 1.442695
    %v3075 = vpow.pop %v3074
    %v3076 = vmul.f32 %v3063, 1.442695
    %v3077 = vpow.pop %v3076
    %v3078 = vmul.f32 %v3064, 1.442695
    %v3079 = vpow.pop %v3078
    %v3080 = vmul.f32 %v3065, 1.442695
    %v3081 = vpow.pop %v3080
    %v3082 = vsel %vm846, %v3067, 0.0
    %3083 = vadd.xlane.f32.xlu0 %v3082
    %v3084 = vpop.xlane.xlu0 %3083
    %v3085 = vsel %vm846, %v3069, 0.0
    %3086 = vadd.xlane.f32.xlu0 %v3085
    %v3087 = vpop.xlane.xlu0 %3086
    %v3088 = vsel %vm846, %v3071, 0.0
    %3089 = vadd.xlane.f32.xlu0 %v3088
    %v3090 = vpop.xlane.xlu0 %3089
    %v3091 = vsel %vm846, %v3073, 0.0
    %3092 = vadd.xlane.f32.xlu0 %v3091
    %v3093 = vpop.xlane.xlu0 %3092
    %v3094 = vsel %vm846, %v3075, 0.0
    %3095 = vadd.xlane.f32.xlu0 %v3094
    %v3096 = vpop.xlane.xlu0 %3095
    %v3097 = vsel %vm846, %v3077, 0.0
    %3098 = vadd.xlane.f32.xlu0 %v3097
    %v3099 = vpop.xlane.xlu0 %3098
    %v3100 = vsel %vm846, %v3079, 0.0
    %3101 = vadd.xlane.f32.xlu0 %v3100
    %v3102 = vpop.xlane.xlu0 %3101
    %v3103 = vsel %vm846, %v3081, 0.0
    %3104 = vadd.xlane.f32.xlu0 %v3103
    %v3105 = vpop.xlane.xlu0 %3104
    %v3106 = vpack.c.bf16 %v3069, %v3067
    %v3107 = vpack.c.bf16 %v3073, %v3071
    %v3108 = vpack.c.bf16 %v3077, %v3075
    %v3109 = vpack.c.bf16 %v3081, %v3079
    %3110 = vrot.lane.b32.xlu0 %v229, 104
    %v3111 = vpop.permute.xlu0 %3110
    %3112 = vrot.lane.b32.xlu0 %v230, 104
    %v3113 = vpop.permute.xlu0 %3112
    %3114 = vrot.lane.b32.xlu0 %v231, 104
    %v3115 = vpop.permute.xlu0 %3114
    %3116 = vrot.lane.b32.xlu0 %v232, 104
    %v3117 = vpop.permute.xlu0 %3116
    %v3123 = vsel %vm846, %v3106, 0
    %v3126 = vsel %vm846, %v3107, 0
    %v3129 = vsel %vm846, %v3108, 0
    %v3132 = vsel %vm846, %v3109, 0
    %3134 = vmatprep.subr.bf16.mxu0 0
    %3135 = vmatpush1.bf16.msra.mxu0 0
    %3136 = vmatprep.subr.bf16.mxu0 0
    %3137 = vmatpush1.bf16.msra.mxu0 0
    %3138 = vmatprep.subr.bf16.mxu0 0
    %3139 = vmatpush1.bf16.msra.mxu0 0
    %3140 = vmatprep.subr.bf16.mxu0 0
    %3141 = vmatpush1.bf16.msra.mxu0 0
    %3142 = vmatprep.subr.bf16.mxu0 0
    %3143 = vmatpush1.bf16.msra.mxu0 %v3117
    %3144 = vmatprep.subr.bf16.mxu0 0
    %3145 = vmatpush1.bf16.msra.mxu0 %v3115
    %3146 = vmatprep.subr.bf16.mxu0 0
    %3147 = vmatpush1.bf16.msra.mxu0 %v3113
    %3148 = vmatprep.subr.bf16.mxu0 0
    %3149 = vmatpush1.bf16.msra.mxu0 %v3111
    %3150 = vmatprep.subr.bf16.mxu0 0
    %3151 = vmatpush2.bf16.msra.mxu0 0
    %3152 = vmatprep.subr.bf16.mxu0 0
    %3153 = vmatpush2.bf16.msra.mxu0 0
    %3154 = vmatprep.subr.bf16.mxu0 0
    %3155 = vmatpush2.bf16.msra.mxu0 0
    %3156 = vmatprep.subr.bf16.mxu0 0
    %3157 = vmatpush2.bf16.msra.mxu0 0
    %3158 = vmatprep.subr.bf16.mxu0 0
    %3159 = vmatpush2.bf16.msra.mxu0 0
    %3160 = vmatprep.subr.bf16.mxu0 0
    %3161 = vmatpush2.bf16.msra.mxu0 0
    %3162 = vmatprep.subr.bf16.mxu0 0
    %3163 = vmatpush2.bf16.msra.mxu0 0
    %3164 = vmatprep.subr.bf16.mxu0 0
    %3165 = vmatpush2.bf16.msra.mxu0 0
    %3166 = vmatprep.mubr.bf16.mxu0 0
    %3167 = vmatmul.mubr.bf16.gmra.mxu0 %v3123
    %v3168 = vpop.f32.mrf.mxu0
    %v3169 = vadd.f32 0.0, %v3168
    %v3170 = vpop.f32.mrf.mxu0
    %v3171 = vpop.f32.mrf.mxu0
    %v3172 = vadd.f32 0.0, %v3171
    %v3173 = vpop.f32.mrf.mxu0
    %3174 = vmatprep.mubr.bf16.mxu0 0
    %3175 = vmatmul.mubr.bf16.gmra.mxu0 %v3126
    %v3176 = vpop.f32.mrf.mxu0
    %v3177 = vadd.f32 0.0, %v3176
    %v3178 = vpop.f32.mrf.mxu0
    %v3179 = vpop.f32.mrf.mxu0
    %v3180 = vadd.f32 0.0, %v3179
    %v3181 = vpop.f32.mrf.mxu0
    %3182 = vmatprep.mubr.bf16.mxu0 0
    %3183 = vmatmul.mubr.bf16.gmra.mxu0 %v3129
    %v3184 = vpop.f32.mrf.mxu0
    %v3185 = vadd.f32 0.0, %v3184
    %v3186 = vpop.f32.mrf.mxu0
    %v3187 = vpop.f32.mrf.mxu0
    %v3188 = vadd.f32 0.0, %v3187
    %v3189 = vpop.f32.mrf.mxu0
    %3190 = vmatprep.mubr.bf16.mxu0 0
    %3191 = vmatmul.mubr.bf16.gmra.mxu0 %v3132
    %v3192 = vpop.f32.mrf.mxu0
    %v3193 = vadd.f32 0.0, %v3192
    %v3194 = vpop.f32.mrf.mxu0
    %v3195 = vpop.f32.mrf.mxu0
    %v3196 = vadd.f32 0.0, %v3195
    %v3197 = vpop.f32.mrf.mxu0
    %3198 = vdwg.mxu0
    %v3199 = vrcp.pop %v3084
    %v3200 = vrcp.pop %v3087
    %v3201 = vrcp.pop %v3090
    %v3202 = vrcp.pop %v3093
    %v3203 = vrcp.pop %v3096
    %v3204 = vrcp.pop %v3099
    %v3205 = vrcp.pop %v3102
    %v3206 = vrcp.pop %v3105
    %v3207 = vmul.f32 %v3169, %v3199
    %v3208 = vmul.f32 %v3172, %v3200
    %v3209 = vmul.f32 %v3177, %v3201
    %v3210 = vmul.f32 %v3180, %v3202
    %v3211 = vmul.f32 %v3185, %v3203
    %v3212 = vmul.f32 %v3188, %v3204
    %v3213 = vmul.f32 %v3193, %v3205
    %v3214 = vmul.f32 %v3196, %v3206
    %3223 = vrot.lane.b32.xlu0 %v2635, 8
    %v3224 = vpop.permute.xlu0 %3223
    %3225 = vrot.lane.b32.xlu0 %v2636, 8
    %v3226 = vpop.permute.xlu0 %3225
    %3227 = vrot.lane.b32.xlu0 %v2637, 8
    %v3228 = vpop.permute.xlu0 %3227
    %3229 = vrot.lane.b32.xlu0 %v2638, 8
    %v3230 = vpop.permute.xlu0 %3229
    %3231 = vrot.lane.b32.xlu0 %v2639, 8
    %v3232 = vpop.permute.xlu0 %3231
    %3233 = vrot.lane.b32.xlu0 %v2640, 8
    %v3234 = vpop.permute.xlu0 %3233
    %3235 = vrot.lane.b32.xlu0 %v2641, 8
    %v3236 = vpop.permute.xlu0 %3235
    %3237 = vrot.lane.b32.xlu0 %v2642, 8
    %v3238 = vpop.permute.xlu0 %3237
    %3255 = vrot.lane.b32.xlu0 %v2921, 16
    %v3256 = vpop.permute.xlu0 %3255
    %3257 = vrot.lane.b32.xlu0 %v2922, 16
    %v3258 = vpop.permute.xlu0 %3257
    %3259 = vrot.lane.b32.xlu0 %v2923, 16
    %v3260 = vpop.permute.xlu0 %3259
    %3261 = vrot.lane.b32.xlu0 %v2924, 16
    %v3262 = vpop.permute.xlu0 %3261
    %3263 = vrot.lane.b32.xlu0 %v2925, 16
    %v3264 = vpop.permute.xlu0 %3263
    %3265 = vrot.lane.b32.xlu0 %v2926, 16
    %v3266 = vpop.permute.xlu0 %3265
    %3267 = vrot.lane.b32.xlu0 %v2927, 16
    %v3268 = vpop.permute.xlu0 %3267
    %3269 = vrot.lane.b32.xlu0 %v2928, 16
    %v3270 = vpop.permute.xlu0 %3269
    %3287 = vrot.lane.b32.xlu0 %v3207, 24
    %v3288 = vpop.permute.xlu0 %3287
    %3289 = vrot.lane.b32.xlu0 %v3208, 24
    %v3290 = vpop.permute.xlu0 %3289
    %3291 = vrot.lane.b32.xlu0 %v3209, 24
    %v3292 = vpop.permute.xlu0 %3291
    %3293 = vrot.lane.b32.xlu0 %v3210, 24
    %v3294 = vpop.permute.xlu0 %3293
    %3295 = vrot.lane.b32.xlu0 %v3211, 24
    %v3296 = vpop.permute.xlu0 %3295
    %3297 = vrot.lane.b32.xlu0 %v3212, 24
    %v3298 = vpop.permute.xlu0 %3297
    %3299 = vrot.lane.b32.xlu0 %v3213, 24
    %v3300 = vpop.permute.xlu0 %3299
    %3301 = vrot.lane.b32.xlu0 %v3214, 24
    %v3302 = vpop.permute.xlu0 %3301
    %v3311 = vsel %vm756, %v2345, %v3224
    %v3312 = vsel %vm756, %v2346, %v3226
    %v3313 = vsel %vm756, %v2347, %v3228
    %v3314 = vsel %vm756, %v2348, %v3230
    %v3315 = vsel %vm756, %v2349, %v3232
    %v3316 = vsel %vm756, %v2350, %v3234
    %v3317 = vsel %vm756, %v2351, %v3236
    %v3318 = vsel %vm756, %v2352, %v3238
    %v3319 = vsel %vm1982, %v3311, %v3256
    %v3320 = vsel %vm1982, %v3312, %v3258
    %v3321 = vsel %vm1982, %v3313, %v3260
    %v3322 = vsel %vm1982, %v3314, %v3262
    %v3323 = vsel %vm1982, %v3315, %v3264
    %v3324 = vsel %vm1982, %v3316, %v3266
    %v3325 = vsel %vm1982, %v3317, %v3268
    %v3326 = vsel %vm1982, %v3318, %v3270
    %v3327 = vsel %vm606, %v3319, %v3288
    %v3328 = vsel %vm606, %v3320, %v3290
    %v3329 = vsel %vm606, %v3321, %v3292
    %v3330 = vsel %vm606, %v3322, %v3294
    %v3331 = vsel %vm606, %v3323, %v3296
    %v3332 = vsel %vm606, %v3324, %v3298
    %v3333 = vsel %vm606, %v3325, %v3300
    %v3334 = vsel %vm606, %v3326, %v3302
    %3343 = vrot.lane.b32.xlu0 %v702, 64
    %v3344 = vpop.permute.xlu0 %3343
    %3345 = vrot.lane.b32.xlu0 %v705, 64
    %v3346 = vpop.permute.xlu0 %3345
    %3347 = vrot.lane.b32.xlu0 %v710, 64
    %v3348 = vpop.permute.xlu0 %3347
    %3349 = vrot.lane.b32.xlu0 %v713, 64
    %v3350 = vpop.permute.xlu0 %3349
    %3351 = vrot.lane.b32.xlu0 %v718, 64
    %v3352 = vpop.permute.xlu0 %3351
    %3353 = vrot.lane.b32.xlu0 %v721, 64
    %v3354 = vpop.permute.xlu0 %3353
    %3355 = vrot.lane.b32.xlu0 %v726, 64
    %v3356 = vpop.permute.xlu0 %3355
    %3357 = vrot.lane.b32.xlu0 %v729, 64
    %v3358 = vpop.permute.xlu0 %3357
    %v3367 = vadd.f32 %v3327, %v3344
    %v3368 = vadd.f32 %v3328, %v3346
    %v3369 = vadd.f32 %v3329, %v3348
    %v3370 = vadd.f32 %v3330, %v3350
    %v3371 = vadd.f32 %v3331, %v3352
    %v3372 = vadd.f32 %v3332, %v3354
    %v3373 = vadd.f32 %v3333, %v3356
    %v3374 = vadd.f32 %v3334, %v3358
    %3377 = vrot.lane.b32.xlu0 %v3369, 32
    %v3378 = vpop.permute.xlu0 %3377
    %3379 = vrot.lane.b32.xlu0 %v3370, 32
    %v3380 = vpop.permute.xlu0 %3379
    %3385 = vrot.lane.b32.xlu0 %v3371, 64
    %v3386 = vpop.permute.xlu0 %3385
    %3387 = vrot.lane.b32.xlu0 %v3372, 64
    %v3388 = vpop.permute.xlu0 %3387
    %3393 = vrot.lane.b32.xlu0 %v3373, 96
    %v3394 = vpop.permute.xlu0 %3393
    %3395 = vrot.lane.b32.xlu0 %v3374, 96
    %v3396 = vpop.permute.xlu0 %3395
    %v3399 = vsel %vm493, %v3367, %v3378
    %v3400 = vsel %vm493, %v3368, %v3380
    %v3401 = vsel %vm846, %v3399, %v3386
    %v3402 = vsel %vm846, %v3400, %v3388
    %v3403 = vsel %vm2067, %v3401, %v3394
    %v3404 = vsel %vm2067, %v3402, %v3396
    %v3405 = vpack.c.bf16 %v2069, %v2068
    %v3406 = vpack.c.bf16 %v3404, %v3403
    %v3407 = vld [vmem:[%s8] sm:$0xf]
    %v3408 = vld [vmem:[%s8 + $0x4] sm:$0xf]
    %v3409 = vld [vmem:[%s8 + $0x8] sm:$0xf]
    %v3410 = vld [vmem:[%s8 + $0xc] sm:$0xf]
    %v3411 = vld [vmem:[%s8 + $0x10] sm:$0xf]
    %v3412 = vld [vmem:[%s8 + $0x14] sm:$0xf]
    %v3413 = vld [vmem:[%s8 + $0x18] sm:$0xf]
    %v3414 = vld [vmem:[%s8 + $0x1c] sm:$0xf]
    %v3415 = vld [vmem:[%s8 + $0x20] sm:$0xf]
    %v3416 = vld [vmem:[%s8 + $0x24] sm:$0xf]
    %v3417 = vld [vmem:[%s8 + $0x28] sm:$0xf]
    %v3418 = vld [vmem:[%s8 + $0x2c] sm:$0xf]
    %v3419 = vld [vmem:[%s8 + $0x30] sm:$0xf]
    %v3420 = vld [vmem:[%s8 + $0x34] sm:$0xf]
    %v3421 = vld [vmem:[%s8 + $0x38] sm:$0xf]
    %v3422 = vld [vmem:[%s8 + $0x3c] sm:$0xf]
    %v3439 = vunpack.c.l.b16 %v3407
    %v3440 = vunpack.c.l.b16 %v3408
    %v3441 = vunpack.c.l.b16 %v3409
    %v3442 = vunpack.c.l.b16 %v3410
    %v3443 = vunpack.c.l.b16 %v3411
    %v3444 = vunpack.c.l.b16 %v3412
    %v3445 = vunpack.c.l.b16 %v3413
    %v3446 = vunpack.c.l.b16 %v3414
    %v3447 = vunpack.c.l.b16 %v3415
    %v3448 = vunpack.c.l.b16 %v3416
    %v3449 = vunpack.c.l.b16 %v3417
    %v3450 = vunpack.c.l.b16 %v3418
    %v3451 = vunpack.c.l.b16 %v3419
    %v3452 = vunpack.c.l.b16 %v3420
    %v3453 = vunpack.c.l.b16 %v3421
    %v3454 = vunpack.c.l.b16 %v3422
    %v3455 = vpack.c.b16 %v3440, %v3439
    %v3456 = vpack.c.b16 %v3442, %v3441
    %v3457 = vpack.c.b16 %v3444, %v3443
    %v3458 = vpack.c.b16 %v3446, %v3445
    %v3459 = vpack.c.b16 %v3448, %v3447
    %v3460 = vpack.c.b16 %v3450, %v3449
    %v3461 = vpack.c.b16 %v3452, %v3451
    %v3462 = vpack.c.b16 %v3454, %v3453
    %3471 = vmatprep.subr.bf16.mxu0 0
    %3472 = vmatpush1.bf16.msra.mxu0 %v3462
    %3473 = vmatprep.subr.bf16.mxu0 0
    %3474 = vmatpush1.bf16.msra.mxu0 %v3461
    %3475 = vmatprep.subr.bf16.mxu0 0
    %3476 = vmatpush1.bf16.msra.mxu0 %v3460
    %3477 = vmatprep.subr.bf16.mxu0 0
    %3478 = vmatpush1.bf16.msra.mxu0 %v3459
    %3479 = vmatprep.subr.bf16.mxu0 0
    %3480 = vmatpush1.bf16.msra.mxu0 %v3458
    %3481 = vmatprep.subr.bf16.mxu0 0
    %3482 = vmatpush1.bf16.msra.mxu0 %v3457
    %3483 = vmatprep.subr.bf16.mxu0 0
    %3484 = vmatpush1.bf16.msra.mxu0 %v3456
    %3485 = vmatprep.subr.bf16.mxu0 0
    %3486 = vmatpush1.bf16.msra.mxu0 %v3455
    %3487 = vmatprep.subr.bf16.mxu0 0
    %3488 = vmatpush2.bf16.msra.mxu0 0
    %3489 = vmatprep.subr.bf16.mxu0 0
    %3490 = vmatpush2.bf16.msra.mxu0 0
    %3491 = vmatprep.subr.bf16.mxu0 0
    %3492 = vmatpush2.bf16.msra.mxu0 0
    %3493 = vmatprep.subr.bf16.mxu0 0
    %3494 = vmatpush2.bf16.msra.mxu0 0
    %3495 = vmatprep.subr.bf16.mxu0 0
    %3496 = vmatpush2.bf16.msra.mxu0 0
    %3497 = vmatprep.subr.bf16.mxu0 0
    %3498 = vmatpush2.bf16.msra.mxu0 0
    %3499 = vmatprep.subr.bf16.mxu0 0
    %3500 = vmatpush2.bf16.msra.mxu0 0
    %3501 = vmatprep.subr.bf16.mxu0 0
    %3502 = vmatpush2.bf16.msra.mxu0 0
    %3503 = vmatprep.mubr.bf16.mxu0 0
    %3504 = vmatmul.mubr.bf16.gmra.mxu0 %v3405
    %v3505 = vpop.f32.mrf.mxu0
    %v3506 = vadd.f32 0.0, %v3505
    %v3507 = vpop.f32.mrf.mxu0
    %v3508 = vpop.f32.mrf.mxu0
    %v3509 = vadd.f32 0.0, %v3508
    %v3510 = vpop.f32.mrf.mxu0
    %3511 = vmatprep.mubr.bf16.mxu0 0
    %3512 = vmatmul.mubr.bf16.gmra.mxu0 %v3406
    %v3513 = vpop.f32.mrf.mxu0
    %v3514 = vadd.f32 0.0, %v3513
    %v3515 = vpop.f32.mrf.mxu0
    %v3516 = vpop.f32.mrf.mxu0
    %v3517 = vadd.f32 0.0, %v3516
    %v3518 = vpop.f32.mrf.mxu0
    %3519 = vdwg.mxu0
    %v3520 = vld [vmem:[%s9] sm:$0x1]
    %v3522 = vlaneseq
    %v3523 = vshrl.u32 %v3522, 7
    %v3524 = vsub.s32 0, %v3523
    %v3525 = vrot.slane %v3520, %v3524
    %v3527 = vmul.f32 %v3506, %v3525
    %v3528 = vmul.f32 %v3509, %v3525
    %v3529 = vmul.f32 %v3514, %v3525
    %v3530 = vmul.f32 %v3517, %v3525
    %v3531 = vld [vmem:[%s10] sm:$0x1]
    %v3533 = vlaneseq
    %v3534 = vshrl.u32 %v3533, 7
    %v3535 = vsub.s32 0, %v3534
    %v3536 = vrot.slane %v3531, %v3535
    %v3538 = vadd.f32 %v3527, %v3536
    %v3539 = vadd.f32 %v3528, %v3536
    %v3540 = vadd.f32 %v3529, %v3536
    %v3541 = vadd.f32 %v3530, %v3536
    %v3542 = vmul.f32 %v3538, 0.5
    %v3543 = vmul.f32 %v3539, 0.5
    %v3544 = vmul.f32 %v3540, 0.5
    %v3545 = vmul.f32 %v3541, 0.5
    %v3546 = vmul.f32 %v3538, 0.70710677
    %v3547 = vmul.f32 %v3539, 0.70710677
    %v3548 = vmul.f32 %v3540, 0.70710677
    %v3549 = vmul.f32 %v3541, 0.70710677
    %v3550 = vand.u32 2147483647, %v3546
    %v3551 = vand.u32 2147483647, %v3547
    %v3552 = vand.u32 2147483647, %v3548
    %v3553 = vand.u32 2147483647, %v3549
    %v3554 = vmul.f32 %v3550, 0.5
    %v3555 = vmul.f32 %v3551, 0.5
    %v3556 = vmul.f32 %v3552, 0.5
    %v3557 = vmul.f32 %v3553, 0.5
    %v3558 = vadd.f32 %v3554, 1.0
    %v3559 = vadd.f32 %v3555, 1.0
    %v3560 = vadd.f32 %v3556, 1.0
    %v3561 = vadd.f32 %v3557, 1.0
    %v3562 = vrcp.pop %v3558
    %v3563 = vmul.f32 1.0, %v3562
    %v3564 = vrcp.pop %v3559
    %v3565 = vmul.f32 1.0, %v3564
    %v3566 = vrcp.pop %v3560
    %v3567 = vmul.f32 1.0, %v3566
    %v3568 = vrcp.pop %v3561
    %v3569 = vmul.f32 1.0, %v3568
    %v3570 = vsub.f32 0.0, %v3550
    %v3571 = vsub.f32 0.0, %v3551
    %v3572 = vsub.f32 0.0, %v3552
    %v3573 = vsub.f32 0.0, %v3553
    %v3574 = vmul.f32 %v3570, %v3550
    %v3575 = vmul.f32 %v3571, %v3551
    %v3576 = vmul.f32 %v3572, %v3552
    %v3577 = vmul.f32 %v3573, %v3553
    %v3578 = vsub.f32 %v3574, 1.2655122
    %v3579 = vsub.f32 %v3575, 1.2655122
    %v3580 = vsub.f32 %v3576, 1.2655122
    %v3581 = vsub.f32 %v3577, 1.2655122
    %v3582 = vmul.f32 %v3563, 0.17087276
    %v3583 = vmul.f32 %v3565, 0.17087276
    %v3584 = vmul.f32 %v3567, 0.17087276
    %v3585 = vmul.f32 %v3569, 0.17087276
    %v3586 = vadd.f32 %v3582, -0.82215226
    %v3587 = vadd.f32 %v3583, -0.82215226
    %v3588 = vadd.f32 %v3584, -0.82215226
    %v3589 = vadd.f32 %v3585, -0.82215226
    %v3590 = vmul.f32 %v3563, %v3586
    %v3591 = vmul.f32 %v3565, %v3587
    %v3592 = vmul.f32 %v3567, %v3588
    %v3593 = vmul.f32 %v3569, %v3589
    %v3594 = vadd.f32 %v3590, 1.4885159
    %v3595 = vadd.f32 %v3591, 1.4885159
    %v3596 = vadd.f32 %v3592, 1.4885159
    %v3597 = vadd.f32 %v3593, 1.4885159
    %v3598 = vmul.f32 %v3563, %v3594
    %v3599 = vmul.f32 %v3565, %v3595
    %v3600 = vmul.f32 %v3567, %v3596
    %v3601 = vmul.f32 %v3569, %v3597
    %v3602 = vadd.f32 %v3598, -1.135204
    %v3603 = vadd.f32 %v3599, -1.135204
    %v3604 = vadd.f32 %v3600, -1.135204
    %v3605 = vadd.f32 %v3601, -1.135204
    %v3606 = vmul.f32 %v3563, %v3602
    %v3607 = vmul.f32 %v3565, %v3603
    %v3608 = vmul.f32 %v3567, %v3604
    %v3609 = vmul.f32 %v3569, %v3605
    %v3610 = vadd.f32 %v3606, 0.27886808
    %v3611 = vadd.f32 %v3607, 0.27886808
    %v3612 = vadd.f32 %v3608, 0.27886808
    %v3613 = vadd.f32 %v3609, 0.27886808
    %v3614 = vmul.f32 %v3563, %v3610
    %v3615 = vmul.f32 %v3565, %v3611
    %v3616 = vmul.f32 %v3567, %v3612
    %v3617 = vmul.f32 %v3569, %v3613
    %v3618 = vadd.f32 %v3614, -0.18628806
    %v3619 = vadd.f32 %v3615, -0.18628806
    %v3620 = vadd.f32 %v3616, -0.18628806
    %v3621 = vadd.f32 %v3617, -0.18628806
    %v3622 = vmul.f32 %v3563, %v3618
    %v3623 = vmul.f32 %v3565, %v3619
    %v3624 = vmul.f32 %v3567, %v3620
    %v3625 = vmul.f32 %v3569, %v3621
    %v3626 = vadd.f32 %v3622, 0.09678418
    %v3627 = vadd.f32 %v3623, 0.09678418
    %v3628 = vadd.f32 %v3624, 0.09678418
    %v3629 = vadd.f32 %v3625, 0.09678418
    %v3630 = vmul.f32 %v3563, %v3626
    %v3631 = vmul.f32 %v3565, %v3627
    %v3632 = vmul.f32 %v3567, %v3628
    %v3633 = vmul.f32 %v3569, %v3629
    %v3634 = vadd.f32 %v3630, 0.37409195
    %v3635 = vadd.f32 %v3631, 0.37409195
    %v3636 = vadd.f32 %v3632, 0.37409195
    %v3637 = vadd.f32 %v3633, 0.37409195
    %v3638 = vmul.f32 %v3563, %v3634
    %v3639 = vmul.f32 %v3565, %v3635
    %v3640 = vmul.f32 %v3567, %v3636
    %v3641 = vmul.f32 %v3569, %v3637
    %v3642 = vadd.f32 %v3638, 1.0000237
    %v3643 = vadd.f32 %v3639, 1.0000237
    %v3644 = vadd.f32 %v3640, 1.0000237
    %v3645 = vadd.f32 %v3641, 1.0000237
    %v3646 = vmul.f32 %v3563, %v3642
    %v3647 = vmul.f32 %v3565, %v3643
    %v3648 = vmul.f32 %v3567, %v3644
    %v3649 = vmul.f32 %v3569, %v3645
    %v3650 = vadd.f32 %v3578, %v3646
    %v3651 = vadd.f32 %v3579, %v3647
    %v3652 = vadd.f32 %v3580, %v3648
    %v3653 = vadd.f32 %v3581, %v3649
    %v3654 = vmul.f32 %v3650, 1.442695
    %v3655 = vpow.pop %v3654
    %v3656 = vmul.f32 %v3651, 1.442695
    %v3657 = vpow.pop %v3656
    %v3658 = vmul.f32 %v3652, 1.442695
    %v3659 = vpow.pop %v3658
    %v3660 = vmul.f32 %v3653, 1.442695
    %v3661 = vpow.pop %v3660
    %v3662 = vmul.f32 %v3563, %v3655
    %v3663 = vmul.f32 %v3565, %v3657
    %v3664 = vmul.f32 %v3567, %v3659
    %v3665 = vmul.f32 %v3569, %v3661
    %v3666 = vsub.f32 1.0, %v3662
    %v3667 = vsub.f32 1.0, %v3663
    %v3668 = vsub.f32 1.0, %v3664
    %v3669 = vsub.f32 1.0, %v3665
    %vm3670 = vcmp.ge.f32.partialorder %v3546, 0.0
    %vm3671 = vcmp.ge.f32.partialorder %v3547, 0.0
    %vm3672 = vcmp.ge.f32.partialorder %v3548, 0.0
    %vm3673 = vcmp.ge.f32.partialorder %v3549, 0.0
    %v3674 = vsub.f32 0.0, %v3666
    %v3675 = vsub.f32 0.0, %v3667
    %v3676 = vsub.f32 0.0, %v3668
    %v3677 = vsub.f32 0.0, %v3669
    %v3678 = vsel %vm3670, %v3666, %v3674
    %v3679 = vsel %vm3671, %v3667, %v3675
    %v3680 = vsel %vm3672, %v3668, %v3676
    %v3681 = vsel %vm3673, %v3669, %v3677
    %v3682 = vadd.f32 %v3678, 1.0
    %v3683 = vadd.f32 %v3679, 1.0
    %v3684 = vadd.f32 %v3680, 1.0
    %v3685 = vadd.f32 %v3681, 1.0
    %v3686 = vmul.f32 %v3542, %v3682
    %v3687 = vmul.f32 %v3543, %v3683
    %v3688 = vmul.f32 %v3544, %v3684
    %v3689 = vmul.f32 %v3545, %v3685
    %v3690 = vpack.c.bf16 %v3687, %v3686
    %v3691 = vpack.c.bf16 %v3689, %v3688
    %v3692 = vld [vmem:[%s11] sm:$0xf]
    %v3693 = vld [vmem:[%s11 + $0x4] sm:$0xf]
    %v3694 = vld [vmem:[%s11 + $0x8] sm:$0xf]
    %v3695 = vld [vmem:[%s11 + $0xc] sm:$0xf]
    %v3696 = vld [vmem:[%s11 + $0x10] sm:$0xf]
    %v3697 = vld [vmem:[%s11 + $0x14] sm:$0xf]
    %v3698 = vld [vmem:[%s11 + $0x18] sm:$0xf]
    %v3699 = vld [vmem:[%s11 + $0x1c] sm:$0xf]
    %v3700 = vld [vmem:[%s11 + $0x20] sm:$0xf]
    %v3701 = vld [vmem:[%s11 + $0x24] sm:$0xf]
    %v3702 = vld [vmem:[%s11 + $0x28] sm:$0xf]
    %v3703 = vld [vmem:[%s11 + $0x2c] sm:$0xf]
    %v3704 = vld [vmem:[%s11 + $0x30] sm:$0xf]
    %v3705 = vld [vmem:[%s11 + $0x34] sm:$0xf]
    %v3706 = vld [vmem:[%s11 + $0x38] sm:$0xf]
    %v3707 = vld [vmem:[%s11 + $0x3c] sm:$0xf]
    %v3724 = vunpack.c.l.b16 %v3692
    %v3725 = vunpack.c.l.b16 %v3693
    %v3726 = vunpack.c.l.b16 %v3694
    %v3727 = vunpack.c.l.b16 %v3695
    %v3728 = vunpack.c.l.b16 %v3696
    %v3729 = vunpack.c.l.b16 %v3697
    %v3730 = vunpack.c.l.b16 %v3698
    %v3731 = vunpack.c.l.b16 %v3699
    %v3732 = vunpack.c.l.b16 %v3700
    %v3733 = vunpack.c.l.b16 %v3701
    %v3734 = vunpack.c.l.b16 %v3702
    %v3735 = vunpack.c.l.b16 %v3703
    %v3736 = vunpack.c.l.b16 %v3704
    %v3737 = vunpack.c.l.b16 %v3705
    %v3738 = vunpack.c.l.b16 %v3706
    %v3739 = vunpack.c.l.b16 %v3707
    %v3740 = vpack.c.b16 %v3725, %v3724
    %v3741 = vpack.c.b16 %v3727, %v3726
    %v3742 = vpack.c.b16 %v3729, %v3728
    %v3743 = vpack.c.b16 %v3731, %v3730
    %v3744 = vpack.c.b16 %v3733, %v3732
    %v3745 = vpack.c.b16 %v3735, %v3734
    %v3746 = vpack.c.b16 %v3737, %v3736
    %v3747 = vpack.c.b16 %v3739, %v3738
    %3756 = vmatprep.subr.bf16.mxu0 0
    %3757 = vmatpush1.bf16.msra.mxu0 %v3747
    %3758 = vmatprep.subr.bf16.mxu0 0
    %3759 = vmatpush1.bf16.msra.mxu0 %v3746
    %3760 = vmatprep.subr.bf16.mxu0 0
    %3761 = vmatpush1.bf16.msra.mxu0 %v3745
    %3762 = vmatprep.subr.bf16.mxu0 0
    %3763 = vmatpush1.bf16.msra.mxu0 %v3744
    %3764 = vmatprep.subr.bf16.mxu0 0
    %3765 = vmatpush1.bf16.msra.mxu0 %v3743
    %3766 = vmatprep.subr.bf16.mxu0 0
    %3767 = vmatpush1.bf16.msra.mxu0 %v3742
    %3768 = vmatprep.subr.bf16.mxu0 0
    %3769 = vmatpush1.bf16.msra.mxu0 %v3741
    %3770 = vmatprep.subr.bf16.mxu0 0
    %3771 = vmatpush1.bf16.msra.mxu0 %v3740
    %3772 = vmatprep.subr.bf16.mxu0 0
    %3773 = vmatpush2.bf16.msra.mxu0 0
    %3774 = vmatprep.subr.bf16.mxu0 0
    %3775 = vmatpush2.bf16.msra.mxu0 0
    %3776 = vmatprep.subr.bf16.mxu0 0
    %3777 = vmatpush2.bf16.msra.mxu0 0
    %3778 = vmatprep.subr.bf16.mxu0 0
    %3779 = vmatpush2.bf16.msra.mxu0 0
    %3780 = vmatprep.subr.bf16.mxu0 0
    %3781 = vmatpush2.bf16.msra.mxu0 0
    %3782 = vmatprep.subr.bf16.mxu0 0
    %3783 = vmatpush2.bf16.msra.mxu0 0
    %3784 = vmatprep.subr.bf16.mxu0 0
    %3785 = vmatpush2.bf16.msra.mxu0 0
    %3786 = vmatprep.subr.bf16.mxu0 0
    %3787 = vmatpush2.bf16.msra.mxu0 0
    %3788 = vmatprep.mubr.bf16.mxu0 0
    %3789 = vmatmul.mubr.bf16.gmra.mxu0 %v3690
    %v3790 = vpop.f32.mrf.mxu0
    %v3791 = vadd.f32 0.0, %v3790
    %v3792 = vpop.f32.mrf.mxu0
    %v3793 = vpop.f32.mrf.mxu0
    %v3794 = vadd.f32 0.0, %v3793
    %v3795 = vpop.f32.mrf.mxu0
    %3796 = vmatprep.mubr.bf16.mxu0 0
    %3797 = vmatmul.mubr.bf16.gmra.mxu0 %v3691
    %v3798 = vpop.f32.mrf.mxu0
    %v3799 = vadd.f32 0.0, %v3798
    %v3800 = vpop.f32.mrf.mxu0
    %v3801 = vpop.f32.mrf.mxu0
    %v3802 = vadd.f32 0.0, %v3801
    %v3803 = vpop.f32.mrf.mxu0
    %3804 = vdwg.mxu0
    %v3805 = vld [vmem:[%s12] sm:$0x1]
    %v3807 = vlaneseq
    %v3808 = vshrl.u32 %v3807, 7
    %v3809 = vsub.s32 0, %v3808
    %v3810 = vrot.slane %v3805, %v3809
    %v3812 = vmul.f32 %v3791, %v3810
    %v3813 = vmul.f32 %v3794, %v3810
    %v3814 = vmul.f32 %v3799, %v3810
    %v3815 = vmul.f32 %v3802, %v3810
    %v3816 = vld [vmem:[%s13] sm:$0x1]
    %v3818 = vlaneseq
    %v3819 = vshrl.u32 %v3818, 7
    %v3820 = vsub.s32 0, %v3819
    %v3821 = vrot.slane %v3816, %v3820
    %v3823 = vadd.f32 %v3812, %v3821
    %v3824 = vadd.f32 %v3813, %v3821
    %v3825 = vadd.f32 %v3814, %v3821
    %v3826 = vadd.f32 %v3815, %v3821
    %v3827 = vmul.f32 %v3823, 0.5
    %v3828 = vmul.f32 %v3824, 0.5
    %v3829 = vmul.f32 %v3825, 0.5
    %v3830 = vmul.f32 %v3826, 0.5
    %v3831 = vmul.f32 %v3823, 0.70710677
    %v3832 = vmul.f32 %v3824, 0.70710677
    %v3833 = vmul.f32 %v3825, 0.70710677
    %v3834 = vmul.f32 %v3826, 0.70710677
    %v3835 = vand.u32 2147483647, %v3831
    %v3836 = vand.u32 2147483647, %v3832
    %v3837 = vand.u32 2147483647, %v3833
    %v3838 = vand.u32 2147483647, %v3834
    %v3839 = vmul.f32 %v3835, 0.5
    %v3840 = vmul.f32 %v3836, 0.5
    %v3841 = vmul.f32 %v3837, 0.5
    %v3842 = vmul.f32 %v3838, 0.5
    %v3843 = vadd.f32 %v3839, 1.0
    %v3844 = vadd.f32 %v3840, 1.0
    %v3845 = vadd.f32 %v3841, 1.0
    %v3846 = vadd.f32 %v3842, 1.0
    %v3847 = vrcp.pop %v3843
    %v3848 = vmul.f32 1.0, %v3847
    %v3849 = vrcp.pop %v3844
    %v3850 = vmul.f32 1.0, %v3849
    %v3851 = vrcp.pop %v3845
    %v3852 = vmul.f32 1.0, %v3851
    %v3853 = vrcp.pop %v3846
    %v3854 = vmul.f32 1.0, %v3853
    %v3855 = vsub.f32 0.0, %v3835
    %v3856 = vsub.f32 0.0, %v3836
    %v3857 = vsub.f32 0.0, %v3837
    %v3858 = vsub.f32 0.0, %v3838
    %v3859 = vmul.f32 %v3855, %v3835
    %v3860 = vmul.f32 %v3856, %v3836
    %v3861 = vmul.f32 %v3857, %v3837
    %v3862 = vmul.f32 %v3858, %v3838
    %v3863 = vsub.f32 %v3859, 1.2655122
    %v3864 = vsub.f32 %v3860, 1.2655122
    %v3865 = vsub.f32 %v3861, 1.2655122
    %v3866 = vsub.f32 %v3862, 1.2655122
    %v3867 = vmul.f32 %v3848, 0.17087276
    %v3868 = vmul.f32 %v3850, 0.17087276
    %v3869 = vmul.f32 %v3852, 0.17087276
    %v3870 = vmul.f32 %v3854, 0.17087276
    %v3871 = vadd.f32 %v3867, -0.82215226
    %v3872 = vadd.f32 %v3868, -0.82215226
    %v3873 = vadd.f32 %v3869, -0.82215226
    %v3874 = vadd.f32 %v3870, -0.82215226
    %v3875 = vmul.f32 %v3848, %v3871
    %v3876 = vmul.f32 %v3850, %v3872
    %v3877 = vmul.f32 %v3852, %v3873
    %v3878 = vmul.f32 %v3854, %v3874
    %v3879 = vadd.f32 %v3875, 1.4885159
    %v3880 = vadd.f32 %v3876, 1.4885159
    %v3881 = vadd.f32 %v3877, 1.4885159
    %v3882 = vadd.f32 %v3878, 1.4885159
    %v3883 = vmul.f32 %v3848, %v3879
    %v3884 = vmul.f32 %v3850, %v3880
    %v3885 = vmul.f32 %v3852, %v3881
    %v3886 = vmul.f32 %v3854, %v3882
    %v3887 = vadd.f32 %v3883, -1.135204
    %v3888 = vadd.f32 %v3884, -1.135204
    %v3889 = vadd.f32 %v3885, -1.135204
    %v3890 = vadd.f32 %v3886, -1.135204
    %v3891 = vmul.f32 %v3848, %v3887
    %v3892 = vmul.f32 %v3850, %v3888
    %v3893 = vmul.f32 %v3852, %v3889
    %v3894 = vmul.f32 %v3854, %v3890
    %v3895 = vadd.f32 %v3891, 0.27886808
    %v3896 = vadd.f32 %v3892, 0.27886808
    %v3897 = vadd.f32 %v3893, 0.27886808
    %v3898 = vadd.f32 %v3894, 0.27886808
    %v3899 = vmul.f32 %v3848, %v3895
    %v3900 = vmul.f32 %v3850, %v3896
    %v3901 = vmul.f32 %v3852, %v3897
    %v3902 = vmul.f32 %v3854, %v3898
    %v3903 = vadd.f32 %v3899, -0.18628806
    %v3904 = vadd.f32 %v3900, -0.18628806
    %v3905 = vadd.f32 %v3901, -0.18628806
    %v3906 = vadd.f32 %v3902, -0.18628806
    %v3907 = vmul.f32 %v3848, %v3903
    %v3908 = vmul.f32 %v3850, %v3904
    %v3909 = vmul.f32 %v3852, %v3905
    %v3910 = vmul.f32 %v3854, %v3906
    %v3911 = vadd.f32 %v3907, 0.09678418
    %v3912 = vadd.f32 %v3908, 0.09678418
    %v3913 = vadd.f32 %v3909, 0.09678418
    %v3914 = vadd.f32 %v3910, 0.09678418
    %v3915 = vmul.f32 %v3848, %v3911
    %v3916 = vmul.f32 %v3850, %v3912
    %v3917 = vmul.f32 %v3852, %v3913
    %v3918 = vmul.f32 %v3854, %v3914
    %v3919 = vadd.f32 %v3915, 0.37409195
    %v3920 = vadd.f32 %v3916, 0.37409195
    %v3921 = vadd.f32 %v3917, 0.37409195
    %v3922 = vadd.f32 %v3918, 0.37409195
    %v3923 = vmul.f32 %v3848, %v3919
    %v3924 = vmul.f32 %v3850, %v3920
    %v3925 = vmul.f32 %v3852, %v3921
    %v3926 = vmul.f32 %v3854, %v3922
    %v3927 = vadd.f32 %v3923, 1.0000237
    %v3928 = vadd.f32 %v3924, 1.0000237
    %v3929 = vadd.f32 %v3925, 1.0000237
    %v3930 = vadd.f32 %v3926, 1.0000237
    %v3931 = vmul.f32 %v3848, %v3927
    %v3932 = vmul.f32 %v3850, %v3928
    %v3933 = vmul.f32 %v3852, %v3929
    %v3934 = vmul.f32 %v3854, %v3930
    %v3935 = vadd.f32 %v3863, %v3931
    %v3936 = vadd.f32 %v3864, %v3932
    %v3937 = vadd.f32 %v3865, %v3933
    %v3938 = vadd.f32 %v3866, %v3934
    %v3939 = vmul.f32 %v3935, 1.442695
    %v3940 = vpow.pop %v3939
    %v3941 = vmul.f32 %v3936, 1.442695
    %v3942 = vpow.pop %v3941
    %v3943 = vmul.f32 %v3937, 1.442695
    %v3944 = vpow.pop %v3943
    %v3945 = vmul.f32 %v3938, 1.442695
    %v3946 = vpow.pop %v3945
    %v3947 = vmul.f32 %v3848, %v3940
    %v3948 = vmul.f32 %v3850, %v3942
    %v3949 = vmul.f32 %v3852, %v3944
    %v3950 = vmul.f32 %v3854, %v3946
    %v3951 = vsub.f32 1.0, %v3947
    %v3952 = vsub.f32 1.0, %v3948
    %v3953 = vsub.f32 1.0, %v3949
    %v3954 = vsub.f32 1.0, %v3950
    %vm3955 = vcmp.ge.f32.partialorder %v3831, 0.0
    %vm3956 = vcmp.ge.f32.partialorder %v3832, 0.0
    %vm3957 = vcmp.ge.f32.partialorder %v3833, 0.0
    %vm3958 = vcmp.ge.f32.partialorder %v3834, 0.0
    %v3959 = vsub.f32 0.0, %v3951
    %v3960 = vsub.f32 0.0, %v3952
    %v3961 = vsub.f32 0.0, %v3953
    %v3962 = vsub.f32 0.0, %v3954
    %v3963 = vsel %vm3955, %v3951, %v3959
    %v3964 = vsel %vm3956, %v3952, %v3960
    %v3965 = vsel %vm3957, %v3953, %v3961
    %v3966 = vsel %vm3958, %v3954, %v3962
    %v3967 = vadd.f32 %v3963, 1.0
    %v3968 = vadd.f32 %v3964, 1.0
    %v3969 = vadd.f32 %v3965, 1.0
    %v3970 = vadd.f32 %v3966, 1.0
    %v3971 = vmul.f32 %v3827, %v3967
    %v3972 = vmul.f32 %v3828, %v3968
    %v3973 = vmul.f32 %v3829, %v3969
    %v3974 = vmul.f32 %v3830, %v3970
    %3975 = vst.msk [vmem:[#allocation2] sm:$0xff] %vm493, %v3971
    %3976 = vst.msk [vmem:[#allocation2 + $0x8] sm:$0xff] %vm493, %v3972
    %3977 = vst.msk [vmem:[#allocation2 + $0x10] sm:$0xff] %vm493, %v3973
    %3978 = vst.msk [vmem:[#allocation2 + $0x18] sm:$0xff] %vm493, %v3974
    // Predicated region
    $region58: #{variable_seg_gt_forward.1} parent=1 // pred_check
      _
    $region59: #{variable_seg_gt_forward.1} parent=1 // pred_check_branch
      %3980 = sbr.rel (0) target = $region61
    $region60: #{variable_seg_gt_forward.1} parent=1 // pred_region
      %s3982 = ssub.s32 512, 512
      %3983 = vsyncadd [#allocation3], %s3982
      %s3984 = sshll.u32 [#allocation2], 4
      %s3985 = int_to_ptr.vmem [resolvable:$true] %s3984
      %3990 = dma.vmem_to_hbm [thread:$0]  %s3985, 512, %s14, [#allocation3], 128, 128, 8
    $region61: #{variable_seg_gt_forward.1} parent=1 // pred_fallthru
      _
    // Predicated region
    $region62: #{variable_seg_gt_forward.1} parent=1 // pred_check
      _
    $region63: #{variable_seg_gt_forward.1} parent=1 // pred_check_branch
      %3992 = sbr.rel (0) target = $region65
    $region64: #{variable_seg_gt_forward.1} parent=1 // pred_region
      %3993 = dma.done [#allocation3], 512
    $region65: #{variable_seg_gt_forward.1} parent=1 // pred_fallthru
      _
    %3994 = vsyncpa [#allocation3], 1

</llo_original>
